<compile_context>
chip_gen: v5e
topology: v5e:2x2
jax: 0.10.0
libtpu: 0.0.40
codegen_flags: <defaults>
</compile_context>

<pallas_src>
import functools
import jax
import jax.numpy as jnp
from jax.experimental import pallas as pl
from jax.experimental.pallas import tpu as pltpu


def _vmem_spec():
    return pl.BlockSpec(memory_space=pltpu.MemorySpace.VMEM)


# ---------------------------------------------------------------------------
# The single fused kernel
# ---------------------------------------------------------------------------
def _fused_kernel(*refs, L, Bp, C, H, clips, batch, num_layers, eps):
    f32 = jnp.float32

    # ---- unpack refs: inputs..., out, scratch ----
    pos = 0
    xb_ref, wa_ref, wb_ref, gam_ref, bet_ref, wbn_ref = refs[pos:pos + 6]
    pos += 6
    local_layers = [refs[pos + 6 * i: pos + 6 * (i + 1)] for i in range(num_layers)]
    pos += 6 * num_layers
    perm_ref = refs[pos]
    pos += 1
    global_layers = [refs[pos + 6 * i: pos + 6 * (i + 1)] for i in range(num_layers)]
    pos += 6 * num_layers
    pwf_ref, pwr_ref, pb_ref = refs[pos:pos + 3]
    pos += 3
    out_ref = refs[pos]
    yf_scr, yr_scr = refs[pos + 1], refs[pos + 2]

    # ---------------- frontend ----------------
    # Conv1d(win, stride=win//2) as two half-window matmuls on stride blocks:
    # window l = block l (first win/2 taps) + block l+1 (last win/2 taps).
    xb = xb_ref[...]                                            # ((L+1)*Bp, Cin*S)
    A = jnp.dot(xb, wa_ref[...], preferred_element_type=f32)    # ((L+1)*Bp, C)
    Bh = jnp.dot(xb, wb_ref[...], preferred_element_type=f32)
    enc = jnp.maximum(A[0:L * Bp, :] + Bh[Bp:(L + 1) * Bp, :], 0.0)   # (L*Bp, C)

    # GroupNorm(1, C, eps=1e-8) — per-sample statistics over (C, L). The module
    # explicitly sets eps=1e-08 (not the nn.GroupNorm default of 1e-5).
    enc3 = enc.reshape(L, Bp, C)
    inv_n = 1.0 / float(L * C)
    mean = jnp.sum(jnp.sum(enc3, axis=2, keepdims=True), axis=0, keepdims=True) * inv_n
    d = enc3 - mean
    var = jnp.sum(jnp.sum(d * d, axis=2, keepdims=True), axis=0, keepdims=True) * inv_n
    xn = d * jax.lax.rsqrt(var + eps)
    xn = xn * gam_ref[...] + bet_ref[...]                       # (1,1,C) affine

    # 1x1 bottleneck conv.
    fea = jnp.dot(xn.reshape(L * Bp, C), wbn_ref[...],
                  preferred_element_type=f32)                   # (L*Bp, F)

    # ---------------- BiLSTM machinery ----------------
    def lstm_cell(g, c_prev):
        # gate lane order per direction: [i, f, o, g]
        sg = jax.nn.sigmoid(g[:, 0:3 * H])
        gg = jnp.tanh(g[:, 3 * H:4 * H])
        c_new = sg[:, H:2 * H] * c_prev + sg[:, 0:H] * gg
        h_new = sg[:, 2 * H:3 * H] * jnp.tanh(c_new)
        return h_new, c_new

    def run_bilstm(gin_f, gin_r, whh_f_ref, whh_r_ref, T, B, step_fn):
        whh_f = whh_f_ref[...]                                  # (H, 4H)
        whh_r = whh_r_ref[...]
        c_f = jnp.zeros((B, H), f32)
        c_r = jnp.zeros((B, H), f32)
        h_f = h_r = None
        for s in range(T):                                      # fully unrolled; T is tiny
            tr = T - 1 - s
            g_f = gin_f[s * B:(s + 1) * B, :]
            g_r = gin_r[tr * B:(tr + 1) * B, :]
            if s > 0:
                # two independent K=H matmuls -> fwd/rev chains can overlap
                g_f = g_f + jnp.dot(h_f, whh_f, preferred_element_type=f32)
                g_r = g_r + jnp.dot(h_r, whh_r, preferred_element_type=f32)
            h_f, c_f = lstm_cell(g_f, c_f)
            h_r, c_r = lstm_cell(g_r, c_r)
            step_fn(s, tr, h_f, h_r)

    def proj_from_input(x, layer):
        # first layer of a stack: gin = x @ wih + b, hoisted out of the recurrence
        gin_f = jnp.dot(x, layer[0][...], preferred_element_type=f32) + layer[4][...]
        gin_r = jnp.dot(x, layer[1][...], preferred_element_type=f32) + layer[5][...]
        return gin_f, gin_r

    def proj_from_hidden(yf, yr, layer):
        # Din == 2H; split the weight rows so no lane concat of [h_f|h_r] is needed
        wf = layer[0][...]                                      # (2H, 4H)
        wr = layer[1][...]
        gin_f = (jnp.dot(yf, wf[0:H, :], preferred_element_type=f32)
                 + jnp.dot(yr, wf[H:2 * H, :], preferred_element_type=f32) + layer[4][...])
        gin_r = (jnp.dot(yf, wr[0:H, :], preferred_element_type=f32)
                 + jnp.dot(yr, wr[H:2 * H, :], preferred_element_type=f32) + layer[5][...])
        return gin_f, gin_r

    # ---------------- local BiLSTM over time L (batch = Bp) ----------------
    gin_f, gin_r = proj_from_input(fea, local_layers[0])
    mean_f = mean_r = None
    for li in range(num_layers):
        layer = local_layers[li]
        if li < num_layers - 1:
            def store_seq(s, tr, h_f, h_r):
                # store-as-you-go into VMEM scratch (row = t*Bp + b)
                yf_scr[s * Bp:(s + 1) * Bp, :] = h_f
                yr_scr[tr * Bp:(tr + 1) * Bp, :] = h_r
            run_bilstm(gin_f, gin_r, layer[2], layer[3], L, Bp, store_seq)
            gin_f, gin_r = proj_from_hidden(
                yf_scr[0:L * Bp, :], yr_scr[0:L * Bp, :], local_layers[li + 1])
        else:
            acc = [jnp.zeros((Bp, H), f32), jnp.zeros((Bp, H), f32)]
            def acc_mean(s, tr, h_f, h_r):
                acc[0] = acc[0] + h_f
                acc[1] = acc[1] + h_r
            run_bilstm(gin_f, gin_r, layer[2], layer[3], L, Bp, acc_mean)
            mean_f = acc[0] * (1.0 / L)                          # (Bp, H)
            mean_r = acc[1] * (1.0 / L)

    # ---- (batch, clips) -> (clips, batch) reorder via tiny permutation matmul ----
    P = perm_ref[...]                                            # (Bp, Bp)
    gm_f = jnp.dot(P, mean_f, preferred_element_type=f32)        # (clips*batch, H)
    gm_r = jnp.dot(P, mean_r, preferred_element_type=f32)

    # ---------------- global BiLSTM over clips (batch = batch) ----------------
    gin_f, gin_r = proj_from_hidden(gm_f, gm_r, global_layers[0])
    for li in range(num_layers):
        layer = global_layers[li]
        if li < num_layers - 1:
            def store_seq_g(s, tr, h_f, h_r):
                yf_scr[s * batch:(s + 1) * batch, :] = h_f
                yr_scr[tr * batch:(tr + 1) * batch, :] = h_r
            run_bilstm(gin_f, gin_r, layer[2], layer[3], clips, batch, store_seq_g)
            rows = clips * batch
            gin_f, gin_r = proj_from_hidden(
                yf_scr[0:rows, :], yr_scr[0:rows, :], global_layers[li + 1])
        else:
            pwf = pwf_ref[...]                                   # (1, H)
            pwr = pwr_ref[...]
            cols_f = [None] * clips
            cols_r = [None] * clips
            def proj_step(s, tr, h_f, h_r):
                # pred_proj as a VPU pass: broadcast-mul + lane reduce (no N=1 MXU ops)
                cols_f[s] = jnp.sum(h_f * pwf, axis=-1, keepdims=True)
                cols_r[tr] = jnp.sum(h_r * pwr, axis=-1, keepdims=True)
            run_bilstm(gin_f, gin_r, layer[2], layer[3], clips, batch, proj_step)
            logits = jnp.concatenate([cols_f[t] + cols_r[t] for t in range(clips)],
                                     axis=-1) + pb_ref[0, 0]     # (batch, clips)
            m = jnp.max(logits, axis=-1, keepdims=True)
            sh = logits - m
            lse = jnp.log(jnp.sum(jnp.exp(sh), axis=-1, keepdims=True))
            out_ref[...] = sh - lse


# ---------------------------------------------------------------------------
# Parameter packing: PyTorch-layout LSTM weights -> kernel layout
#   per direction: wih (Din, 4H), whh (H, 4H), bias (1, 4H), gate order [i,f,o,g]
# ---------------------------------------------------------------------------
def _pack_dir(w_ih, w_hh, b, H):
    def blk(w):   # PyTorch gate order along dim 0: i, f, g, o
        return w[0:H], w[H:2 * H], w[2 * H:3 * H], w[3 * H:4 * H]
    wi, wf, wg, wo = blk(w_ih)
    wih = jnp.concatenate([wi.T, wf.T, wo.T, wg.T], axis=1)
    ui, uf, ug, uo = blk(w_hh)
    whh = jnp.concatenate([ui.T, uf.T, uo.T, ug.T], axis=1)
    bi, bf, bg, bo = blk(b)
    bias = jnp.concatenate([bi, bf, bo, bg]).reshape(1, 4 * H)
    return wih, whh, bias


def init_lstm_params(key, input_dim, hidden, num_layers):
    layers = []
    stdv = 1.0 / float(hidden) ** 0.5
    for layer in range(num_layers):
        din = input_dim if layer == 0 else 2 * hidden
        packed = {}
        for name in ("f", "r"):
            key, k1, k2, k3, k4 = jax.random.split(key, 5)
            w_ih = jax.random.uniform(k1, (4 * hidden, din), jnp.float32, -stdv, stdv)
            w_hh = jax.random.uniform(k2, (4 * hidden, hidden), jnp.float32, -stdv, stdv)
            b_ih = jax.random.uniform(k3, (4 * hidden,), jnp.float32, -stdv, stdv)
            b_hh = jax.random.uniform(k4, (4 * hidden,), jnp.float32, -stdv, stdv)
            packed[name] = _pack_dir(w_ih, w_hh, b_ih + b_hh, hidden)
        layers.append({
            "wih_f": packed["f"][0], "whh_f": packed["f"][1], "b_f": packed["f"][2],
            "wih_r": packed["r"][0], "whh_r": packed["r"][1], "b_r": packed["r"][2],
        })
    return key, layers


def init_params(key, *, win, enc_dim, fea_dim, hid, num_layers, in_dim=28):
    params = {}
    key, k1, k2, k3, k4 = jax.random.split(key, 5)
    params["enc_w"] = jax.random.normal(k1, (enc_dim, in_dim, win), jnp.float32) * 0.05
    params["gn_w"] = jnp.ones((enc_dim,), jnp.float32)
    params["gn_b"] = jnp.zeros((enc_dim,), jnp.float32)
    params["bn_w"] = jax.random.normal(k2, (fea_dim, enc_dim, 1), jnp.float32) * 0.05
    key, params["local_lstm"] = init_lstm_params(key, fea_dim, hid, num_layers)
    key, params["global_lstm"] = init_lstm_params(key, 2 * hid, hid, num_layers)
    params["proj_w"] = jax.random.normal(k3, (2 * hid,), jnp.float32) * 0.1
    params["proj_b"] = jax.random.normal(k4, (), jnp.float32) * 0.1
    return params


# ---------------------------------------------------------------------------
# Full forward pass (mirrors ActionPredBasedEEG.forward, eval mode)
# ---------------------------------------------------------------------------
@functools.partial(jax.jit, static_argnames=("win",))
def action_pred_based_eeg_forward(params, eeg_erp_in, *, win):
    stride = win // 2
    batch, clips, cin, T = eeg_erp_in.shape
    Bp = batch * clips
    L = (T - win) // stride + 1
    enc_dim = params["enc_w"].shape[0]
    H = params["proj_w"].shape[0] // 2
    num_layers = len(params["local_lstm"])

    x = eeg_erp_in.reshape(Bp, cin, T).astype(jnp.float32)

    # The only XLA glue: block-major slab for the conv-as-two-matmuls trick.
    # xb[j*Bp + b, c*stride + k] = x[b, c, j*stride + k]
    nblk = L + 1
    xb = jnp.transpose(
        x[:, :, :nblk * stride].reshape(Bp, cin, nblk, stride),
        (2, 0, 1, 3)).reshape(nblk * Bp, cin * stride)

    w_enc = params["enc_w"].astype(jnp.float32)                 # (C, Cin, win)
    wa = w_enc[:, :, :stride].reshape(enc_dim, cin * stride).T   # (Cin*S, C)
    wb = w_enc[:, :, stride:].reshape(enc_dim, cin * stride).T
    gamma = params["gn_w"].reshape(1, 1, enc_dim)
    beta = params["gn_b"].reshape(1, 1, enc_dim)
    wbn = params["bn_w"][:, :, 0].T                              # (C, F)

    # Permutation matrix for the (batch, clips) -> (clips, batch) row reorder:
    # row cc*batch+bb picks source row bb*clips+cc.
    r = jnp.arange(Bp)
    src = (r % batch) * clips + (r // batch)
    perm = jnp.eye(Bp, dtype=jnp.float32)[src]

    pw_f = params["proj_w"][0:H].reshape(1, H)
    pw_r = params["proj_w"][H:2 * H].reshape(1, H)
    pb = params["proj_b"].reshape(1, 1)

    inputs = [xb, wa, wb, gamma, beta, wbn]
    for lp in params["local_lstm"]:
        inputs += [lp["wih_f"], lp["wih_r"], lp["whh_f"], lp["whh_r"], lp["b_f"], lp["b_r"]]
    inputs.append(perm)
    for lp in params["global_lstm"]:
        inputs += [lp["wih_f"], lp["wih_r"], lp["whh_f"], lp["whh_r"], lp["b_f"], lp["b_r"]]
    inputs += [pw_f, pw_r, pb]

    scratch_rows = max(L * Bp, clips * batch)

    # TODO(synk): on v7x, a leading "parallel" grid axis over batch (one sample
    # per TensorCore) would give ~2x; kept grid-less here for v5e/v6e.
    kernel = functools.partial(
        _fused_kernel, L=L, Bp=Bp, C=enc_dim, H=H,
        clips=clips, batch=batch, num_layers=num_layers, eps=1e-8)

    return pl.pallas_call(
        kernel,
        out_shape=jax.ShapeDtypeStruct((batch, clips), jnp.float32),
        in_specs=[_vmem_spec()] * len(inputs),
        out_specs=_vmem_spec(),
        scratch_shapes=[pltpu.VMEM((scratch_rows, H), jnp.float32),
                        pltpu.VMEM((scratch_rows, H), jnp.float32)],
    )(*inputs)


if __name__ == "__main__":
    # Small, module-consistent shapes.
    batch, erp_clips, eeg_channels, samples_len = 2, 4, 28, 64
    win_for_eeg_sig = 16
    eeg_enc_dim, eeg_fea_dim = 32, 32
    rnn_hid_dim, rnn_layer_num = 16, 2

    key = jax.random.PRNGKey(0)
    key, kin = jax.random.split(key)
    eeg_erp_in = jax.random.normal(
        kin, (batch, erp_clips, eeg_channels, samples_len), jnp.float32)

    params = init_params(
        key,
        win=win_for_eeg_sig,
        enc_dim=eeg_enc_dim,
        fea_dim=eeg_fea_dim,
        hid=rnn_hid_dim,
        num_layers=rnn_layer_num,
        in_dim=eeg_channels,
    )

    out = action_pred_based_eeg_forward(params, eeg_erp_in, win=win_for_eeg_sig)
    out = jax.block_until_ready(out)
    assert out.shape == (batch, erp_clips)
    # log_softmax rows should (approximately) exponentiate-sum to 1.
    assert jnp.allclose(jnp.sum(jnp.exp(out), axis=1), 1.0, atol=1e-4)
    print("KERNEL_OK")
</pallas_src>

<mosaic_0001>
module attributes {stable_mosaic.version = 11 : i64} {
  func.func @_fused_kernel(%arg0: memref<64x224xf32, #tpu.memory_space<vmem>>, %arg1: memref<224x32xf32, #tpu.memory_space<vmem>>, %arg2: memref<224x32xf32, #tpu.memory_space<vmem>>, %arg3: memref<1x1x32xf32, #tpu.memory_space<vmem>>, %arg4: memref<1x1x32xf32, #tpu.memory_space<vmem>>, %arg5: memref<32x32xf32, #tpu.memory_space<vmem>>, %arg6: memref<32x64xf32, #tpu.memory_space<vmem>>, %arg7: memref<32x64xf32, #tpu.memory_space<vmem>>, %arg8: memref<16x64xf32, #tpu.memory_space<vmem>>, %arg9: memref<16x64xf32, #tpu.memory_space<vmem>>, %arg10: memref<1x64xf32, #tpu.memory_space<vmem>>, %arg11: memref<1x64xf32, #tpu.memory_space<vmem>>, %arg12: memref<32x64xf32, #tpu.memory_space<vmem>>, %arg13: memref<32x64xf32, #tpu.memory_space<vmem>>, %arg14: memref<16x64xf32, #tpu.memory_space<vmem>>, %arg15: memref<16x64xf32, #tpu.memory_space<vmem>>, %arg16: memref<1x64xf32, #tpu.memory_space<vmem>>, %arg17: memref<1x64xf32, #tpu.memory_space<vmem>>, %arg18: memref<8x8xf32, #tpu.memory_space<vmem>>, %arg19: memref<32x64xf32, #tpu.memory_space<vmem>>, %arg20: memref<32x64xf32, #tpu.memory_space<vmem>>, %arg21: memref<16x64xf32, #tpu.memory_space<vmem>>, %arg22: memref<16x64xf32, #tpu.memory_space<vmem>>, %arg23: memref<1x64xf32, #tpu.memory_space<vmem>>, %arg24: memref<1x64xf32, #tpu.memory_space<vmem>>, %arg25: memref<32x64xf32, #tpu.memory_space<vmem>>, %arg26: memref<32x64xf32, #tpu.memory_space<vmem>>, %arg27: memref<16x64xf32, #tpu.memory_space<vmem>>, %arg28: memref<16x64xf32, #tpu.memory_space<vmem>>, %arg29: memref<1x64xf32, #tpu.memory_space<vmem>>, %arg30: memref<1x64xf32, #tpu.memory_space<vmem>>, %arg31: memref<1x16xf32, #tpu.memory_space<vmem>>, %arg32: memref<1x16xf32, #tpu.memory_space<vmem>>, %arg33: memref<1x1xf32, #tpu.memory_space<vmem>>, %arg34: memref<2x4xf32, #tpu.memory_space<vmem>>, %arg35: memref<56x16xf32, #tpu.memory_space<vmem>>, %arg36: memref<56x16xf32, #tpu.memory_space<vmem>>) attributes {dimension_semantics = [], scalar_prefetch = 0 : i64, scratch_operands = 2 : i64, tpu.core_type = #tpu.core_type<tc>} {
    %c0 = arith.constant 0 : index
    %c0_0 = arith.constant 0 : index
    %0 = vector.load %arg0[%c0, %c0_0] : memref<64x224xf32, #tpu.memory_space<vmem>>, vector<64x224xf32>
    %c0_1 = arith.constant 0 : index
    %c0_2 = arith.constant 0 : index
    %1 = vector.load %arg1[%c0_1, %c0_2] : memref<224x32xf32, #tpu.memory_space<vmem>>, vector<224x32xf32>
    %cst = arith.constant dense<0.000000e+00> : vector<64x32xf32>
    %2 = tpu.matmul %0, %1, %cst {dimension_numbers = #tpu.dot_dimension_numbers<[1], [0], [0], [1], [0, 0, 1, 1], [], []>} : vector<64x224xf32>, vector<224x32xf32>, vector<64x32xf32> -> vector<64x32xf32>
    %c0_3 = arith.constant 0 : index
    %c0_4 = arith.constant 0 : index
    %3 = vector.load %arg2[%c0_3, %c0_4] : memref<224x32xf32, #tpu.memory_space<vmem>>, vector<224x32xf32>
    %cst_5 = arith.constant dense<0.000000e+00> : vector<64x32xf32>
    %4 = tpu.matmul %0, %3, %cst_5 {dimension_numbers = #tpu.dot_dimension_numbers<[1], [0], [0], [1], [0, 0, 1, 1], [], []>} : vector<64x224xf32>, vector<224x32xf32>, vector<64x32xf32> -> vector<64x32xf32>
    %5 = vector.extract_strided_slice %2 {offsets = [0, 0], sizes = [56, 32], strides = [1, 1]} : vector<64x32xf32> to vector<56x32xf32>
    %6 = vector.extract_strided_slice %4 {offsets = [8, 0], sizes = [56, 32], strides = [1, 1]} : vector<64x32xf32> to vector<56x32xf32>
    %7 = arith.addf %5, %6 : vector<56x32xf32>
    %cst_6 = arith.constant 0.000000e+00 : f32
    %8 = vector.broadcast %cst_6 : f32 to vector<56x32xf32>
    %9 = arith.maximumf %7, %8 : vector<56x32xf32>
    %10 = vector.shape_cast %9 : vector<56x32xf32> to vector<7x8x32xf32>
    %cst_7 = arith.constant dense<0.000000e+00> : vector<7x8xf32>
    %11 = vector.multi_reduction <add>, %10, %cst_7 [2] : vector<7x8x32xf32> to vector<7x8xf32>
    %12 = vector.shape_cast %11 : vector<7x8xf32> to vector<7x8x1xf32>
    %cst_8 = arith.constant dense<0.000000e+00> : vector<8x1xf32>
    %13 = vector.multi_reduction <add>, %12, %cst_8 [0] : vector<7x8x1xf32> to vector<8x1xf32>
    %14 = vector.shape_cast %13 : vector<8x1xf32> to vector<1x8x1xf32>
    %cst_9 = arith.constant 0.00446428591 : f32
    %15 = vector.broadcast %cst_9 : f32 to vector<1x8x1xf32>
    %16 = arith.mulf %14, %15 : vector<1x8x1xf32>
    %17 = vector.broadcast %16 : vector<1x8x1xf32> to vector<7x8x32xf32>
    %18 = arith.subf %10, %17 : vector<7x8x32xf32>
    %19 = arith.mulf %18, %18 : vector<7x8x32xf32>
    %cst_10 = arith.constant dense<0.000000e+00> : vector<7x8xf32>
    %20 = vector.multi_reduction <add>, %19, %cst_10 [2] : vector<7x8x32xf32> to vector<7x8xf32>
    %21 = vector.shape_cast %20 : vector<7x8xf32> to vector<7x8x1xf32>
    %cst_11 = arith.constant dense<0.000000e+00> : vector<8x1xf32>
    %22 = vector.multi_reduction <add>, %21, %cst_11 [0] : vector<7x8x1xf32> to vector<8x1xf32>
    %23 = vector.shape_cast %22 : vector<8x1xf32> to vector<1x8x1xf32>
    %cst_12 = arith.constant 0.00446428591 : f32
    %24 = vector.broadcast %cst_12 : f32 to vector<1x8x1xf32>
    %25 = arith.mulf %23, %24 : vector<1x8x1xf32>
    %cst_13 = arith.constant 9.99999993E-9 : f32
    %26 = vector.broadcast %cst_13 : f32 to vector<1x8x1xf32>
    %27 = arith.addf %25, %26 : vector<1x8x1xf32>
    %28 = math.rsqrt %27 : vector<1x8x1xf32>
    %29 = vector.broadcast %28 : vector<1x8x1xf32> to vector<7x8x32xf32>
    %30 = arith.mulf %18, %29 : vector<7x8x32xf32>
    %c0_14 = arith.constant 0 : index
    %c0_15 = arith.constant 0 : index
    %c0_16 = arith.constant 0 : index
    %31 = vector.load %arg3[%c0_14, %c0_15, %c0_16] : memref<1x1x32xf32, #tpu.memory_space<vmem>>, vector<1x1x32xf32>
    %32 = vector.broadcast %31 : vector<1x1x32xf32> to vector<7x8x32xf32>
    %33 = arith.mulf %30, %32 : vector<7x8x32xf32>
    %c0_17 = arith.constant 0 : index
    %c0_18 = arith.constant 0 : index
    %c0_19 = arith.constant 0 : index
    %34 = vector.load %arg4[%c0_17, %c0_18, %c0_19] : memref<1x1x32xf32, #tpu.memory_space<vmem>>, vector<1x1x32xf32>
    %35 = vector.broadcast %34 : vector<1x1x32xf32> to vector<7x8x32xf32>
    %36 = arith.addf %33, %35 : vector<7x8x32xf32>
    %37 = vector.shape_cast %36 : vector<7x8x32xf32> to vector<56x32xf32>
    %c0_20 = arith.constant 0 : index
    %c0_21 = arith.constant 0 : index
    %38 = vector.load %arg5[%c0_20, %c0_21] : memref<32x32xf32, #tpu.memory_space<vmem>>, vector<32x32xf32>
    %cst_22 = arith.constant dense<0.000000e+00> : vector<56x32xf32>
    %39 = tpu.matmul %37, %38, %cst_22 {dimension_numbers = #tpu.dot_dimension_numbers<[1], [0], [0], [1], [0, 0, 1, 1], [], []>} : vector<56x32xf32>, vector<32x32xf32>, vector<56x32xf32> -> vector<56x32xf32>
    %c0_23 = arith.constant 0 : index
    %c0_24 = arith.constant 0 : index
    %40 = vector.load %arg6[%c0_23, %c0_24] : memref<32x64xf32, #tpu.memory_space<vmem>>, vector<32x64xf32>
    %cst_25 = arith.constant dense<0.000000e+00> : vector<56x64xf32>
    %41 = tpu.matmul %39, %40, %cst_25 {dimension_numbers = #tpu.dot_dimension_numbers<[1], [0], [0], [1], [0, 0, 1, 1], [], []>} : vector<56x32xf32>, vector<32x64xf32>, vector<56x64xf32> -> vector<56x64xf32>
    %c0_26 = arith.constant 0 : index
    %c0_27 = arith.constant 0 : index
    %42 = vector.load %arg10[%c0_26, %c0_27] : memref<1x64xf32, #tpu.memory_space<vmem>>, vector<1x64xf32>
    %43 = vector.broadcast %42 : vector<1x64xf32> to vector<56x64xf32>
    %44 = arith.addf %41, %43 : vector<56x64xf32>
    %c0_28 = arith.constant 0 : index
    %c0_29 = arith.constant 0 : index
    %45 = vector.load %arg7[%c0_28, %c0_29] : memref<32x64xf32, #tpu.memory_space<vmem>>, vector<32x64xf32>
    %cst_30 = arith.constant dense<0.000000e+00> : vector<56x64xf32>
    %46 = tpu.matmul %39, %45, %cst_30 {dimension_numbers = #tpu.dot_dimension_numbers<[1], [0], [0], [1], [0, 0, 1, 1], [], []>} : vector<56x32xf32>, vector<32x64xf32>, vector<56x64xf32> -> vector<56x64xf32>
    %c0_31 = arith.constant 0 : index
    %c0_32 = arith.constant 0 : index
    %47 = vector.load %arg11[%c0_31, %c0_32] : memref<1x64xf32, #tpu.memory_space<vmem>>, vector<1x64xf32>
    %48 = vector.broadcast %47 : vector<1x64xf32> to vector<56x64xf32>
    %49 = arith.addf %46, %48 : vector<56x64xf32>
    %c0_33 = arith.constant 0 : index
    %c0_34 = arith.constant 0 : index
    %50 = vector.load %arg8[%c0_33, %c0_34] : memref<16x64xf32, #tpu.memory_space<vmem>>, vector<16x64xf32>
    %c0_35 = arith.constant 0 : index
    %c0_36 = arith.constant 0 : index
    %51 = vector.load %arg9[%c0_35, %c0_36] : memref<16x64xf32, #tpu.memory_space<vmem>>, vector<16x64xf32>
    %cst_37 = arith.constant 0.000000e+00 : f32
    %52 = vector.broadcast %cst_37 : f32 to vector<8x16xf32>
    %cst_38 = arith.constant 0.000000e+00 : f32
    %53 = vector.broadcast %cst_38 : f32 to vector<8x16xf32>
    %54 = vector.extract_strided_slice %44 {offsets = [0, 0], sizes = [8, 64], strides = [1, 1]} : vector<56x64xf32> to vector<8x64xf32>
    %55 = vector.extract_strided_slice %49 {offsets = [48, 0], sizes = [8, 64], strides = [1, 1]} : vector<56x64xf32> to vector<8x64xf32>
    %56 = vector.extract_strided_slice %54 {offsets = [0, 0], sizes = [8, 48], strides = [1, 1]} : vector<8x64xf32> to vector<8x48xf32>
    %57 = arith.negf %56 : vector<8x48xf32>
    %58 = math.exp %57 : vector<8x48xf32>
    %cst_39 = arith.constant 1.000000e+00 : f32
    %59 = vector.broadcast %cst_39 : f32 to vector<8x48xf32>
    %60 = arith.addf %59, %58 : vector<8x48xf32>
    %61 = arith.divf %59, %60 : vector<8x48xf32>
    %62 = vector.extract_strided_slice %54 {offsets = [0, 48], sizes = [8, 16], strides = [1, 1]} : vector<8x64xf32> to vector<8x16xf32>
    %63 = math.tanh %62 : vector<8x16xf32>
    %64 = vector.extract_strided_slice %61 {offsets = [0, 16], sizes = [8, 16], strides = [1, 1]} : vector<8x48xf32> to vector<8x16xf32>
    %65 = arith.mulf %64, %52 : vector<8x16xf32>
    %66 = vector.extract_strided_slice %61 {offsets = [0, 0], sizes = [8, 16], strides = [1, 1]} : vector<8x48xf32> to vector<8x16xf32>
    %67 = arith.mulf %66, %63 : vector<8x16xf32>
    %68 = arith.addf %65, %67 : vector<8x16xf32>
    %69 = vector.extract_strided_slice %61 {offsets = [0, 32], sizes = [8, 16], strides = [1, 1]} : vector<8x48xf32> to vector<8x16xf32>
    %70 = math.tanh %68 : vector<8x16xf32>
    %71 = arith.mulf %69, %70 : vector<8x16xf32>
    %72 = vector.extract_strided_slice %55 {offsets = [0, 0], sizes = [8, 48], strides = [1, 1]} : vector<8x64xf32> to vector<8x48xf32>
    %73 = arith.negf %72 : vector<8x48xf32>
    %74 = math.exp %73 : vector<8x48xf32>
    %cst_40 = arith.constant 1.000000e+00 : f32
    %75 = vector.broadcast %cst_40 : f32 to vector<8x48xf32>
    %76 = arith.addf %75, %74 : vector<8x48xf32>
    %77 = arith.divf %75, %76 : vector<8x48xf32>
    %78 = vector.extract_strided_slice %55 {offsets = [0, 48], sizes = [8, 16], strides = [1, 1]} : vector<8x64xf32> to vector<8x16xf32>
    %79 = math.tanh %78 : vector<8x16xf32>
    %80 = vector.extract_strided_slice %77 {offsets = [0, 16], sizes = [8, 16], strides = [1, 1]} : vector<8x48xf32> to vector<8x16xf32>
    %81 = arith.mulf %80, %53 : vector<8x16xf32>
    %82 = vector.extract_strided_slice %77 {offsets = [0, 0], sizes = [8, 16], strides = [1, 1]} : vector<8x48xf32> to vector<8x16xf32>
    %83 = arith.mulf %82, %79 : vector<8x16xf32>
    %84 = arith.addf %81, %83 : vector<8x16xf32>
    %85 = vector.extract_strided_slice %77 {offsets = [0, 32], sizes = [8, 16], strides = [1, 1]} : vector<8x48xf32> to vector<8x16xf32>
    %86 = math.tanh %84 : vector<8x16xf32>
    %87 = arith.mulf %85, %86 : vector<8x16xf32>
    %c0_41 = arith.constant 0 : index
    %c0_42 = arith.constant 0 : index
    %88 = vector.load %arg35[%c0_41, %c0_42] : memref<56x16xf32, #tpu.memory_space<vmem>>, vector<8x16xf32>
    tpu.vector_store %arg35[%c0_41, %c0_42], %71 {strides = array<i32>} : memref<56x16xf32, #tpu.memory_space<vmem>>, vector<8x16xf32>,
    %c48 = arith.constant 48 : index
    %c0_43 = arith.constant 0 : index
    %89 = vector.load %arg36[%c48, %c0_43] : memref<56x16xf32, #tpu.memory_space<vmem>>, vector<8x16xf32>
    tpu.vector_store %arg36[%c48, %c0_43], %87 {strides = array<i32>} : memref<56x16xf32, #tpu.memory_space<vmem>>, vector<8x16xf32>,
    %90 = vector.extract_strided_slice %44 {offsets = [8, 0], sizes = [8, 64], strides = [1, 1]} : vector<56x64xf32> to vector<8x64xf32>
    %91 = vector.extract_strided_slice %49 {offsets = [40, 0], sizes = [8, 64], strides = [1, 1]} : vector<56x64xf32> to vector<8x64xf32>
    %cst_44 = arith.constant dense<0.000000e+00> : vector<8x64xf32>
    %92 = tpu.matmul %71, %50, %cst_44 {dimension_numbers = #tpu.dot_dimension_numbers<[1], [0], [0], [1], [0, 0, 1, 1], [], []>} : vector<8x16xf32>, vector<16x64xf32>, vector<8x64xf32> -> vector<8x64xf32>
    %93 = arith.addf %90, %92 : vector<8x64xf32>
    %cst_45 = arith.constant dense<0.000000e+00> : vector<8x64xf32>
    %94 = tpu.matmul %87, %51, %cst_45 {dimension_numbers = #tpu.dot_dimension_numbers<[1], [0], [0], [1], [0, 0, 1, 1], [], []>} : vector<8x16xf32>, vector<16x64xf32>, vector<8x64xf32> -> vector<8x64xf32>
    %95 = arith.addf %91, %94 : vector<8x64xf32>
    %96 = vector.extract_strided_slice %93 {offsets = [0, 0], sizes = [8, 48], strides = [1, 1]} : vector<8x64xf32> to vector<8x48xf32>
    %97 = arith.negf %96 : vector<8x48xf32>
    %98 = math.exp %97 : vector<8x48xf32>
    %cst_46 = arith.constant 1.000000e+00 : f32
    %99 = vector.broadcast %cst_46 : f32 to vector<8x48xf32>
    %100 = arith.addf %99, %98 : vector<8x48xf32>
    %101 = arith.divf %99, %100 : vector<8x48xf32>
    %102 = vector.extract_strided_slice %93 {offsets = [0, 48], sizes = [8, 16], strides = [1, 1]} : vector<8x64xf32> to vector<8x16xf32>
    %103 = math.tanh %102 : vector<8x16xf32>
    %104 = vector.extract_strided_slice %101 {offsets = [0, 16], sizes = [8, 16], strides = [1, 1]} : vector<8x48xf32> to vector<8x16xf32>
    %105 = arith.mulf %104, %68 : vector<8x16xf32>
    %106 = vector.extract_strided_slice %101 {offsets = [0, 0], sizes = [8, 16], strides = [1, 1]} : vector<8x48xf32> to vector<8x16xf32>
    %107 = arith.mulf %106, %103 : vector<8x16xf32>
    %108 = arith.addf %105, %107 : vector<8x16xf32>
    %109 = vector.extract_strided_slice %101 {offsets = [0, 32], sizes = [8, 16], strides = [1, 1]} : vector<8x48xf32> to vector<8x16xf32>
    %110 = math.tanh %108 : vector<8x16xf32>
    %111 = arith.mulf %109, %110 : vector<8x16xf32>
    %112 = vector.extract_strided_slice %95 {offsets = [0, 0], sizes = [8, 48], strides = [1, 1]} : vector<8x64xf32> to vector<8x48xf32>
    %113 = arith.negf %112 : vector<8x48xf32>
    %114 = math.exp %113 : vector<8x48xf32>
    %cst_47 = arith.constant 1.000000e+00 : f32
    %115 = vector.broadcast %cst_47 : f32 to vector<8x48xf32>
    %116 = arith.addf %115, %114 : vector<8x48xf32>
    %117 = arith.divf %115, %116 : vector<8x48xf32>
    %118 = vector.extract_strided_slice %95 {offsets = [0, 48], sizes = [8, 16], strides = [1, 1]} : vector<8x64xf32> to vector<8x16xf32>
    %119 = math.tanh %118 : vector<8x16xf32>
    %120 = vector.extract_strided_slice %117 {offsets = [0, 16], sizes = [8, 16], strides = [1, 1]} : vector<8x48xf32> to vector<8x16xf32>
    %121 = arith.mulf %120, %84 : vector<8x16xf32>
    %122 = vector.extract_strided_slice %117 {offsets = [0, 0], sizes = [8, 16], strides = [1, 1]} : vector<8x48xf32> to vector<8x16xf32>
    %123 = arith.mulf %122, %119 : vector<8x16xf32>
    %124 = arith.addf %121, %123 : vector<8x16xf32>
    %125 = vector.extract_strided_slice %117 {offsets = [0, 32], sizes = [8, 16], strides = [1, 1]} : vector<8x48xf32> to vector<8x16xf32>
    %126 = math.tanh %124 : vector<8x16xf32>
    %127 = arith.mulf %125, %126 : vector<8x16xf32>
    %c8 = arith.constant 8 : index
    %c0_48 = arith.constant 0 : index
    %128 = vector.load %arg35[%c8, %c0_48] : memref<56x16xf32, #tpu.memory_space<vmem>>, vector<8x16xf32>
    tpu.vector_store %arg35[%c8, %c0_48], %111 {strides = array<i32>} : memref<56x16xf32, #tpu.memory_space<vmem>>, vector<8x16xf32>,
    %c40 = arith.constant 40 : index
    %c0_49 = arith.constant 0 : index
    %129 = vector.load %arg36[%c40, %c0_49] : memref<56x16xf32, #tpu.memory_space<vmem>>, vector<8x16xf32>
    tpu.vector_store %arg36[%c40, %c0_49], %127 {strides = array<i32>} : memref<56x16xf32, #tpu.memory_space<vmem>>, vector<8x16xf32>,
    %130 = vector.extract_strided_slice %44 {offsets = [16, 0], sizes = [8, 64], strides = [1, 1]} : vector<56x64xf32> to vector<8x64xf32>
    %131 = vector.extract_strided_slice %49 {offsets = [32, 0], sizes = [8, 64], strides = [1, 1]} : vector<56x64xf32> to vector<8x64xf32>
    %cst_50 = arith.constant dense<0.000000e+00> : vector<8x64xf32>
    %132 = tpu.matmul %111, %50, %cst_50 {dimension_numbers = #tpu.dot_dimension_numbers<[1], [0], [0], [1], [0, 0, 1, 1], [], []>} : vector<8x16xf32>, vector<16x64xf32>, vector<8x64xf32> -> vector<8x64xf32>
    %133 = arith.addf %130, %132 : vector<8x64xf32>
    %cst_51 = arith.constant dense<0.000000e+00> : vector<8x64xf32>
    %134 = tpu.matmul %127, %51, %cst_51 {dimension_numbers = #tpu.dot_dimension_numbers<[1], [0], [0], [1], [0, 0, 1, 1], [], []>} : vector<8x16xf32>, vector<16x64xf32>, vector<8x64xf32> -> vector<8x64xf32>
    %135 = arith.addf %131, %134 : vector<8x64xf32>
    %136 = vector.extract_strided_slice %133 {offsets = [0, 0], sizes = [8, 48], strides = [1, 1]} : vector<8x64xf32> to vector<8x48xf32>
    %137 = arith.negf %136 : vector<8x48xf32>
    %138 = math.exp %137 : vector<8x48xf32>
    %cst_52 = arith.constant 1.000000e+00 : f32
    %139 = vector.broadcast %cst_52 : f32 to vector<8x48xf32>
    %140 = arith.addf %139, %138 : vector<8x48xf32>
    %141 = arith.divf %139, %140 : vector<8x48xf32>
    %142 = vector.extract_strided_slice %133 {offsets = [0, 48], sizes = [8, 16], strides = [1, 1]} : vector<8x64xf32> to vector<8x16xf32>
    %143 = math.tanh %142 : vector<8x16xf32>
    %144 = vector.extract_strided_slice %141 {offsets = [0, 16], sizes = [8, 16], strides = [1, 1]} : vector<8x48xf32> to vector<8x16xf32>
    %145 = arith.mulf %144, %108 : vector<8x16xf32>
    %146 = vector.extract_strided_slice %141 {offsets = [0, 0], sizes = [8, 16], strides = [1, 1]} : vector<8x48xf32> to vector<8x16xf32>
    %147 = arith.mulf %146, %143 : vector<8x16xf32>
    %148 = arith.addf %145, %147 : vector<8x16xf32>
    %149 = vector.extract_strided_slice %141 {offsets = [0, 32], sizes = [8, 16], strides = [1, 1]} : vector<8x48xf32> to vector<8x16xf32>
    %150 = math.tanh %148 : vector<8x16xf32>
    %151 = arith.mulf %149, %150 : vector<8x16xf32>
    %152 = vector.extract_strided_slice %135 {offsets = [0, 0], sizes = [8, 48], strides = [1, 1]} : vector<8x64xf32> to vector<8x48xf32>
    %153 = arith.negf %152 : vector<8x48xf32>
    %154 = math.exp %153 : vector<8x48xf32>
    %cst_53 = arith.constant 1.000000e+00 : f32
    %155 = vector.broadcast %cst_53 : f32 to vector<8x48xf32>
    %156 = arith.addf %155, %154 : vector<8x48xf32>
    %157 = arith.divf %155, %156 : vector<8x48xf32>
    %158 = vector.extract_strided_slice %135 {offsets = [0, 48], sizes = [8, 16], strides = [1, 1]} : vector<8x64xf32> to vector<8x16xf32>
    %159 = math.tanh %158 : vector<8x16xf32>
    %160 = vector.extract_strided_slice %157 {offsets = [0, 16], sizes = [8, 16], strides = [1, 1]} : vector<8x48xf32> to vector<8x16xf32>
    %161 = arith.mulf %160, %124 : vector<8x16xf32>
    %162 = vector.extract_strided_slice %157 {offsets = [0, 0], sizes = [8, 16], strides = [1, 1]} : vector<8x48xf32> to vector<8x16xf32>
    %163 = arith.mulf %162, %159 : vector<8x16xf32>
    %164 = arith.addf %161, %163 : vector<8x16xf32>
    %165 = vector.extract_strided_slice %157 {offsets = [0, 32], sizes = [8, 16], strides = [1, 1]} : vector<8x48xf32> to vector<8x16xf32>
    %166 = math.tanh %164 : vector<8x16xf32>
    %167 = arith.mulf %165, %166 : vector<8x16xf32>
    %c16 = arith.constant 16 : index
    %c0_54 = arith.constant 0 : index
    %168 = vector.load %arg35[%c16, %c0_54] : memref<56x16xf32, #tpu.memory_space<vmem>>, vector<8x16xf32>
    tpu.vector_store %arg35[%c16, %c0_54], %151 {strides = array<i32>} : memref<56x16xf32, #tpu.memory_space<vmem>>, vector<8x16xf32>,
    %c32 = arith.constant 32 : index
    %c0_55 = arith.constant 0 : index
    %169 = vector.load %arg36[%c32, %c0_55] : memref<56x16xf32, #tpu.memory_space<vmem>>, vector<8x16xf32>
    tpu.vector_store %arg36[%c32, %c0_55], %167 {strides = array<i32>} : memref<56x16xf32, #tpu.memory_space<vmem>>, vector<8x16xf32>,
    %170 = vector.extract_strided_slice %44 {offsets = [24, 0], sizes = [8, 64], strides = [1, 1]} : vector<56x64xf32> to vector<8x64xf32>
    %171 = vector.extract_strided_slice %49 {offsets = [24, 0], sizes = [8, 64], strides = [1, 1]} : vector<56x64xf32> to vector<8x64xf32>
    %cst_56 = arith.constant dense<0.000000e+00> : vector<8x64xf32>
    %172 = tpu.matmul %151, %50, %cst_56 {dimension_numbers = #tpu.dot_dimension_numbers<[1], [0], [0], [1], [0, 0, 1, 1], [], []>} : vector<8x16xf32>, vector<16x64xf32>, vector<8x64xf32> -> vector<8x64xf32>
    %173 = arith.addf %170, %172 : vector<8x64xf32>
    %cst_57 = arith.constant dense<0.000000e+00> : vector<8x64xf32>
    %174 = tpu.matmul %167, %51, %cst_57 {dimension_numbers = #tpu.dot_dimension_numbers<[1], [0], [0], [1], [0, 0, 1, 1], [], []>} : vector<8x16xf32>, vector<16x64xf32>, vector<8x64xf32> -> vector<8x64xf32>
    %175 = arith.addf %171, %174 : vector<8x64xf32>
    %176 = vector.extract_strided_slice %173 {offsets = [0, 0], sizes = [8, 48], strides = [1, 1]} : vector<8x64xf32> to vector<8x48xf32>
    %177 = arith.negf %176 : vector<8x48xf32>
    %178 = math.exp %177 : vector<8x48xf32>
    %cst_58 = arith.constant 1.000000e+00 : f32
    %179 = vector.broadcast %cst_58 : f32 to vector<8x48xf32>
    %180 = arith.addf %179, %178 : vector<8x48xf32>
    %181 = arith.divf %179, %180 : vector<8x48xf32>
    %182 = vector.extract_strided_slice %173 {offsets = [0, 48], sizes = [8, 16], strides = [1, 1]} : vector<8x64xf32> to vector<8x16xf32>
    %183 = math.tanh %182 : vector<8x16xf32>
    %184 = vector.extract_strided_slice %181 {offsets = [0, 16], sizes = [8, 16], strides = [1, 1]} : vector<8x48xf32> to vector<8x16xf32>
    %185 = arith.mulf %184, %148 : vector<8x16xf32>
    %186 = vector.extract_strided_slice %181 {offsets = [0, 0], sizes = [8, 16], strides = [1, 1]} : vector<8x48xf32> to vector<8x16xf32>
    %187 = arith.mulf %186, %183 : vector<8x16xf32>
    %188 = arith.addf %185, %187 : vector<8x16xf32>
    %189 = vector.extract_strided_slice %181 {offsets = [0, 32], sizes = [8, 16], strides = [1, 1]} : vector<8x48xf32> to vector<8x16xf32>
    %190 = math.tanh %188 : vector<8x16xf32>
    %191 = arith.mulf %189, %190 : vector<8x16xf32>
    %192 = vector.extract_strided_slice %175 {offsets = [0, 0], sizes = [8, 48], strides = [1, 1]} : vector<8x64xf32> to vector<8x48xf32>
    %193 = arith.negf %192 : vector<8x48xf32>
    %194 = math.exp %193 : vector<8x48xf32>
    %cst_59 = arith.constant 1.000000e+00 : f32
    %195 = vector.broadcast %cst_59 : f32 to vector<8x48xf32>
    %196 = arith.addf %195, %194 : vector<8x48xf32>
    %197 = arith.divf %195, %196 : vector<8x48xf32>
    %198 = vector.extract_strided_slice %175 {offsets = [0, 48], sizes = [8, 16], strides = [1, 1]} : vector<8x64xf32> to vector<8x16xf32>
    %199 = math.tanh %198 : vector<8x16xf32>
    %200 = vector.extract_strided_slice %197 {offsets = [0, 16], sizes = [8, 16], strides = [1, 1]} : vector<8x48xf32> to vector<8x16xf32>
    %201 = arith.mulf %200, %164 : vector<8x16xf32>
    %202 = vector.extract_strided_slice %197 {offsets = [0, 0], sizes = [8, 16], strides = [1, 1]} : vector<8x48xf32> to vector<8x16xf32>
    %203 = arith.mulf %202, %199 : vector<8x16xf32>
    %204 = arith.addf %201, %203 : vector<8x16xf32>
    %205 = vector.extract_strided_slice %197 {offsets = [0, 32], sizes = [8, 16], strides = [1, 1]} : vector<8x48xf32> to vector<8x16xf32>
    %206 = math.tanh %204 : vector<8x16xf32>
    %207 = arith.mulf %205, %206 : vector<8x16xf32>
    %c24 = arith.constant 24 : index
    %c0_60 = arith.constant 0 : index
    %208 = vector.load %arg35[%c24, %c0_60] : memref<56x16xf32, #tpu.memory_space<vmem>>, vector<8x16xf32>
    tpu.vector_store %arg35[%c24, %c0_60], %191 {strides = array<i32>} : memref<56x16xf32, #tpu.memory_space<vmem>>, vector<8x16xf32>,
    %c24_61 = arith.constant 24 : index
    %c0_62 = arith.constant 0 : index
    %209 = vector.load %arg36[%c24_61, %c0_62] : memref<56x16xf32, #tpu.memory_space<vmem>>, vector<8x16xf32>
    tpu.vector_store %arg36[%c24_61, %c0_62], %207 {strides = array<i32>} : memref<56x16xf32, #tpu.memory_space<vmem>>, vector<8x16xf32>,
    %210 = vector.extract_strided_slice %44 {offsets = [32, 0], sizes = [8, 64], strides = [1, 1]} : vector<56x64xf32> to vector<8x64xf32>
    %211 = vector.extract_strided_slice %49 {offsets = [16, 0], sizes = [8, 64], strides = [1, 1]} : vector<56x64xf32> to vector<8x64xf32>
    %cst_63 = arith.constant dense<0.000000e+00> : vector<8x64xf32>
    %212 = tpu.matmul %191, %50, %cst_63 {dimension_numbers = #tpu.dot_dimension_numbers<[1], [0], [0], [1], [0, 0, 1, 1], [], []>} : vector<8x16xf32>, vector<16x64xf32>, vector<8x64xf32> -> vector<8x64xf32>
    %213 = arith.addf %210, %212 : vector<8x64xf32>
    %cst_64 = arith.constant dense<0.000000e+00> : vector<8x64xf32>
    %214 = tpu.matmul %207, %51, %cst_64 {dimension_numbers = #tpu.dot_dimension_numbers<[1], [0], [0], [1], [0, 0, 1, 1], [], []>} : vector<8x16xf32>, vector<16x64xf32>, vector<8x64xf32> -> vector<8x64xf32>
    %215 = arith.addf %211, %214 : vector<8x64xf32>
    %216 = vector.extract_strided_slice %213 {offsets = [0, 0], sizes = [8, 48], strides = [1, 1]} : vector<8x64xf32> to vector<8x48xf32>
    %217 = arith.negf %216 : vector<8x48xf32>
    %218 = math.exp %217 : vector<8x48xf32>
    %cst_65 = arith.constant 1.000000e+00 : f32
    %219 = vector.broadcast %cst_65 : f32 to vector<8x48xf32>
    %220 = arith.addf %219, %218 : vector<8x48xf32>
    %221 = arith.divf %219, %220 : vector<8x48xf32>
    %222 = vector.extract_strided_slice %213 {offsets = [0, 48], sizes = [8, 16], strides = [1, 1]} : vector<8x64xf32> to vector<8x16xf32>
    %223 = math.tanh %222 : vector<8x16xf32>
    %224 = vector.extract_strided_slice %221 {offsets = [0, 16], sizes = [8, 16], strides = [1, 1]} : vector<8x48xf32> to vector<8x16xf32>
    %225 = arith.mulf %224, %188 : vector<8x16xf32>
    %226 = vector.extract_strided_slice %221 {offsets = [0, 0], sizes = [8, 16], strides = [1, 1]} : vector<8x48xf32> to vector<8x16xf32>
    %227 = arith.mulf %226, %223 : vector<8x16xf32>
    %228 = arith.addf %225, %227 : vector<8x16xf32>
    %229 = vector.extract_strided_slice %221 {offsets = [0, 32], sizes = [8, 16], strides = [1, 1]} : vector<8x48xf32> to vector<8x16xf32>
    %230 = math.tanh %228 : vector<8x16xf32>
    %231 = arith.mulf %229, %230 : vector<8x16xf32>
    %232 = vector.extract_strided_slice %215 {offsets = [0, 0], sizes = [8, 48], strides = [1, 1]} : vector<8x64xf32> to vector<8x48xf32>
    %233 = arith.negf %232 : vector<8x48xf32>
    %234 = math.exp %233 : vector<8x48xf32>
    %cst_66 = arith.constant 1.000000e+00 : f32
    %235 = vector.broadcast %cst_66 : f32 to vector<8x48xf32>
    %236 = arith.addf %235, %234 : vector<8x48xf32>
    %237 = arith.divf %235, %236 : vector<8x48xf32>
    %238 = vector.extract_strided_slice %215 {offsets = [0, 48], sizes = [8, 16], strides = [1, 1]} : vector<8x64xf32> to vector<8x16xf32>
    %239 = math.tanh %238 : vector<8x16xf32>
    %240 = vector.extract_strided_slice %237 {offsets = [0, 16], sizes = [8, 16], strides = [1, 1]} : vector<8x48xf32> to vector<8x16xf32>
    %241 = arith.mulf %240, %204 : vector<8x16xf32>
    %242 = vector.extract_strided_slice %237 {offsets = [0, 0], sizes = [8, 16], strides = [1, 1]} : vector<8x48xf32> to vector<8x16xf32>
    %243 = arith.mulf %242, %239 : vector<8x16xf32>
    %244 = arith.addf %241, %243 : vector<8x16xf32>
    %245 = vector.extract_strided_slice %237 {offsets = [0, 32], sizes = [8, 16], strides = [1, 1]} : vector<8x48xf32> to vector<8x16xf32>
    %246 = math.tanh %244 : vector<8x16xf32>
    %247 = arith.mulf %245, %246 : vector<8x16xf32>
    %c32_67 = arith.constant 32 : index
    %c0_68 = arith.constant 0 : index
    %248 = vector.load %arg35[%c32_67, %c0_68] : memref<56x16xf32, #tpu.memory_space<vmem>>, vector<8x16xf32>
    tpu.vector_store %arg35[%c32_67, %c0_68], %231 {strides = array<i32>} : memref<56x16xf32, #tpu.memory_space<vmem>>, vector<8x16xf32>,
    %c16_69 = arith.constant 16 : index
    %c0_70 = arith.constant 0 : index
    %249 = vector.load %arg36[%c16_69, %c0_70] : memref<56x16xf32, #tpu.memory_space<vmem>>, vector<8x16xf32>
    tpu.vector_store %arg36[%c16_69, %c0_70], %247 {strides = array<i32>} : memref<56x16xf32, #tpu.memory_space<vmem>>, vector<8x16xf32>,
    %250 = vector.extract_strided_slice %44 {offsets = [40, 0], sizes = [8, 64], strides = [1, 1]} : vector<56x64xf32> to vector<8x64xf32>
    %251 = vector.extract_strided_slice %49 {offsets = [8, 0], sizes = [8, 64], strides = [1, 1]} : vector<56x64xf32> to vector<8x64xf32>
    %cst_71 = arith.constant dense<0.000000e+00> : vector<8x64xf32>
    %252 = tpu.matmul %231, %50, %cst_71 {dimension_numbers = #tpu.dot_dimension_numbers<[1], [0], [0], [1], [0, 0, 1, 1], [], []>} : vector<8x16xf32>, vector<16x64xf32>, vector<8x64xf32> -> vector<8x64xf32>
    %253 = arith.addf %250, %252 : vector<8x64xf32>
    %cst_72 = arith.constant dense<0.000000e+00> : vector<8x64xf32>
    %254 = tpu.matmul %247, %51, %cst_72 {dimension_numbers = #tpu.dot_dimension_numbers<[1], [0], [0], [1], [0, 0, 1, 1], [], []>} : vector<8x16xf32>, vector<16x64xf32>, vector<8x64xf32> -> vector<8x64xf32>
    %255 = arith.addf %251, %254 : vector<8x64xf32>
    %256 = vector.extract_strided_slice %253 {offsets = [0, 0], sizes = [8, 48], strides = [1, 1]} : vector<8x64xf32> to vector<8x48xf32>
    %257 = arith.negf %256 : vector<8x48xf32>
    %258 = math.exp %257 : vector<8x48xf32>
    %cst_73 = arith.constant 1.000000e+00 : f32
    %259 = vector.broadcast %cst_73 : f32 to vector<8x48xf32>
    %260 = arith.addf %259, %258 : vector<8x48xf32>
    %261 = arith.divf %259, %260 : vector<8x48xf32>
    %262 = vector.extract_strided_slice %253 {offsets = [0, 48], sizes = [8, 16], strides = [1, 1]} : vector<8x64xf32> to vector<8x16xf32>
    %263 = math.tanh %262 : vector<8x16xf32>
    %264 = vector.extract_strided_slice %261 {offsets = [0, 16], sizes = [8, 16], strides = [1, 1]} : vector<8x48xf32> to vector<8x16xf32>
    %265 = arith.mulf %264, %228 : vector<8x16xf32>
    %266 = vector.extract_strided_slice %261 {offsets = [0, 0], sizes = [8, 16], strides = [1, 1]} : vector<8x48xf32> to vector<8x16xf32>
    %267 = arith.mulf %266, %263 : vector<8x16xf32>
    %268 = arith.addf %265, %267 : vector<8x16xf32>
    %269 = vector.extract_strided_slice %261 {offsets = [0, 32], sizes = [8, 16], strides = [1, 1]} : vector<8x48xf32> to vector<8x16xf32>
    %270 = math.tanh %268 : vector<8x16xf32>
    %271 = arith.mulf %269, %270 : vector<8x16xf32>
    %272 = vector.extract_strided_slice %255 {offsets = [0, 0], sizes = [8, 48], strides = [1, 1]} : vector<8x64xf32> to vector<8x48xf32>
    %273 = arith.negf %272 : vector<8x48xf32>
    %274 = math.exp %273 : vector<8x48xf32>
    %cst_74 = arith.constant 1.000000e+00 : f32
    %275 = vector.broadcast %cst_74 : f32 to vector<8x48xf32>
    %276 = arith.addf %275, %274 : vector<8x48xf32>
    %277 = arith.divf %275, %276 : vector<8x48xf32>
    %278 = vector.extract_strided_slice %255 {offsets = [0, 48], sizes = [8, 16], strides = [1, 1]} : vector<8x64xf32> to vector<8x16xf32>
    %279 = math.tanh %278 : vector<8x16xf32>
    %280 = vector.extract_strided_slice %277 {offsets = [0, 16], sizes = [8, 16], strides = [1, 1]} : vector<8x48xf32> to vector<8x16xf32>
    %281 = arith.mulf %280, %244 : vector<8x16xf32>
    %282 = vector.extract_strided_slice %277 {offsets = [0, 0], sizes = [8, 16], strides = [1, 1]} : vector<8x48xf32> to vector<8x16xf32>
    %283 = arith.mulf %282, %279 : vector<8x16xf32>
    %284 = arith.addf %281, %283 : vector<8x16xf32>
    %285 = vector.extract_strided_slice %277 {offsets = [0, 32], sizes = [8, 16], strides = [1, 1]} : vector<8x48xf32> to vector<8x16xf32>
    %286 = math.tanh %284 : vector<8x16xf32>
    %287 = arith.mulf %285, %286 : vector<8x16xf32>
    %c40_75 = arith.constant 40 : index
    %c0_76 = arith.constant 0 : index
    %288 = vector.load %arg35[%c40_75, %c0_76] : memref<56x16xf32, #tpu.memory_space<vmem>>, vector<8x16xf32>
    tpu.vector_store %arg35[%c40_75, %c0_76], %271 {strides = array<i32>} : memref<56x16xf32, #tpu.memory_space<vmem>>, vector<8x16xf32>,
    %c8_77 = arith.constant 8 : index
    %c0_78 = arith.constant 0 : index
    %289 = vector.load %arg36[%c8_77, %c0_78] : memref<56x16xf32, #tpu.memory_space<vmem>>, vector<8x16xf32>
    tpu.vector_store %arg36[%c8_77, %c0_78], %287 {strides = array<i32>} : memref<56x16xf32, #tpu.memory_space<vmem>>, vector<8x16xf32>,
    %290 = vector.extract_strided_slice %44 {offsets = [48, 0], sizes = [8, 64], strides = [1, 1]} : vector<56x64xf32> to vector<8x64xf32>
    %291 = vector.extract_strided_slice %49 {offsets = [0, 0], sizes = [8, 64], strides = [1, 1]} : vector<56x64xf32> to vector<8x64xf32>
    %cst_79 = arith.constant dense<0.000000e+00> : vector<8x64xf32>
    %292 = tpu.matmul %271, %50, %cst_79 {dimension_numbers = #tpu.dot_dimension_numbers<[1], [0], [0], [1], [0, 0, 1, 1], [], []>} : vector<8x16xf32>, vector<16x64xf32>, vector<8x64xf32> -> vector<8x64xf32>
    %293 = arith.addf %290, %292 : vector<8x64xf32>
    %cst_80 = arith.constant dense<0.000000e+00> : vector<8x64xf32>
    %294 = tpu.matmul %287, %51, %cst_80 {dimension_numbers = #tpu.dot_dimension_numbers<[1], [0], [0], [1], [0, 0, 1, 1], [], []>} : vector<8x16xf32>, vector<16x64xf32>, vector<8x64xf32> -> vector<8x64xf32>
    %295 = arith.addf %291, %294 : vector<8x64xf32>
    %296 = vector.extract_strided_slice %293 {offsets = [0, 0], sizes = [8, 48], strides = [1, 1]} : vector<8x64xf32> to vector<8x48xf32>
    %297 = arith.negf %296 : vector<8x48xf32>
    %298 = math.exp %297 : vector<8x48xf32>
    %cst_81 = arith.constant 1.000000e+00 : f32
    %299 = vector.broadcast %cst_81 : f32 to vector<8x48xf32>
    %300 = arith.addf %299, %298 : vector<8x48xf32>
    %301 = arith.divf %299, %300 : vector<8x48xf32>
    %302 = vector.extract_strided_slice %293 {offsets = [0, 48], sizes = [8, 16], strides = [1, 1]} : vector<8x64xf32> to vector<8x16xf32>
    %303 = math.tanh %302 : vector<8x16xf32>
    %304 = vector.extract_strided_slice %301 {offsets = [0, 16], sizes = [8, 16], strides = [1, 1]} : vector<8x48xf32> to vector<8x16xf32>
    %305 = arith.mulf %304, %268 : vector<8x16xf32>
    %306 = vector.extract_strided_slice %301 {offsets = [0, 0], sizes = [8, 16], strides = [1, 1]} : vector<8x48xf32> to vector<8x16xf32>
    %307 = arith.mulf %306, %303 : vector<8x16xf32>
    %308 = arith.addf %305, %307 : vector<8x16xf32>
    %309 = vector.extract_strided_slice %301 {offsets = [0, 32], sizes = [8, 16], strides = [1, 1]} : vector<8x48xf32> to vector<8x16xf32>
    %310 = math.tanh %308 : vector<8x16xf32>
    %311 = arith.mulf %309, %310 : vector<8x16xf32>
    %312 = vector.extract_strided_slice %295 {offsets = [0, 0], sizes = [8, 48], strides = [1, 1]} : vector<8x64xf32> to vector<8x48xf32>
    %313 = arith.negf %312 : vector<8x48xf32>
    %314 = math.exp %313 : vector<8x48xf32>
    %cst_82 = arith.constant 1.000000e+00 : f32
    %315 = vector.broadcast %cst_82 : f32 to vector<8x48xf32>
    %316 = arith.addf %315, %314 : vector<8x48xf32>
    %317 = arith.divf %315, %316 : vector<8x48xf32>
    %318 = vector.extract_strided_slice %295 {offsets = [0, 48], sizes = [8, 16], strides = [1, 1]} : vector<8x64xf32> to vector<8x16xf32>
    %319 = math.tanh %318 : vector<8x16xf32>
    %320 = vector.extract_strided_slice %317 {offsets = [0, 16], sizes = [8, 16], strides = [1, 1]} : vector<8x48xf32> to vector<8x16xf32>
    %321 = arith.mulf %320, %284 : vector<8x16xf32>
    %322 = vector.extract_strided_slice %317 {offsets = [0, 0], sizes = [8, 16], strides = [1, 1]} : vector<8x48xf32> to vector<8x16xf32>
    %323 = arith.mulf %322, %319 : vector<8x16xf32>
    %324 = arith.addf %321, %323 : vector<8x16xf32>
    %325 = vector.extract_strided_slice %317 {offsets = [0, 32], sizes = [8, 16], strides = [1, 1]} : vector<8x48xf32> to vector<8x16xf32>
    %326 = math.tanh %324 : vector<8x16xf32>
    %327 = arith.mulf %325, %326 : vector<8x16xf32>
    %c48_83 = arith.constant 48 : index
    %c0_84 = arith.constant 0 : index
    %328 = vector.load %arg35[%c48_83, %c0_84] : memref<56x16xf32, #tpu.memory_space<vmem>>, vector<8x16xf32>
    tpu.vector_store %arg35[%c48_83, %c0_84], %311 {strides = array<i32>} : memref<56x16xf32, #tpu.memory_space<vmem>>, vector<8x16xf32>,
    %c0_85 = arith.constant 0 : index
    %c0_86 = arith.constant 0 : index
    %329 = vector.load %arg36[%c0_85, %c0_86] : memref<56x16xf32, #tpu.memory_space<vmem>>, vector<8x16xf32>
    tpu.vector_store %arg36[%c0_85, %c0_86], %327 {strides = array<i32>} : memref<56x16xf32, #tpu.memory_space<vmem>>, vector<8x16xf32>,
    %c0_87 = arith.constant 0 : index
    %c0_88 = arith.constant 0 : index
    %330 = vector.load %arg35[%c0_87, %c0_88] : memref<56x16xf32, #tpu.memory_space<vmem>>, vector<56x16xf32>
    %c0_89 = arith.constant 0 : index
    %c0_90 = arith.constant 0 : index
    %331 = vector.load %arg36[%c0_89, %c0_90] : memref<56x16xf32, #tpu.memory_space<vmem>>, vector<56x16xf32>
    %c0_91 = arith.constant 0 : index
    %c0_92 = arith.constant 0 : index
    %332 = vector.load %arg12[%c0_91, %c0_92] : memref<32x64xf32, #tpu.memory_space<vmem>>, vector<32x64xf32>
    %c0_93 = arith.constant 0 : index
    %c0_94 = arith.constant 0 : index
    %333 = vector.load %arg13[%c0_93, %c0_94] : memref<32x64xf32, #tpu.memory_space<vmem>>, vector<32x64xf32>
    %334 = vector.extract_strided_slice %332 {offsets = [0, 0], sizes = [16, 64], strides = [1, 1]} : vector<32x64xf32> to vector<16x64xf32>
    %cst_95 = arith.constant dense<0.000000e+00> : vector<56x64xf32>
    %335 = tpu.matmul %330, %334, %cst_95 {dimension_numbers = #tpu.dot_dimension_numbers<[1], [0], [0], [1], [0, 0, 1, 1], [], []>} : vector<56x16xf32>, vector<16x64xf32>, vector<56x64xf32> -> vector<56x64xf32>
    %336 = vector.extract_strided_slice %332 {offsets = [16, 0], sizes = [16, 64], strides = [1, 1]} : vector<32x64xf32> to vector<16x64xf32>
    %cst_96 = arith.constant dense<0.000000e+00> : vector<56x64xf32>
    %337 = tpu.matmul %331, %336, %cst_96 {dimension_numbers = #tpu.dot_dimension_numbers<[1], [0], [0], [1], [0, 0, 1, 1], [], []>} : vector<56x16xf32>, vector<16x64xf32>, vector<56x64xf32> -> vector<56x64xf32>
    %338 = arith.addf %335, %337 : vector<56x64xf32>
    %c0_97 = arith.constant 0 : index
    %c0_98 = arith.constant 0 : index
    %339 = vector.load %arg16[%c0_97, %c0_98] : memref<1x64xf32, #tpu.memory_space<vmem>>, vector<1x64xf32>
    %340 = vector.broadcast %339 : vector<1x64xf32> to vector<56x64xf32>
    %341 = arith.addf %338, %340 : vector<56x64xf32>
    %342 = vector.extract_strided_slice %333 {offsets = [0, 0], sizes = [16, 64], strides = [1, 1]} : vector<32x64xf32> to vector<16x64xf32>
    %cst_99 = arith.constant dense<0.000000e+00> : vector<56x64xf32>
    %343 = tpu.matmul %330, %342, %cst_99 {dimension_numbers = #tpu.dot_dimension_numbers<[1], [0], [0], [1], [0, 0, 1, 1], [], []>} : vector<56x16xf32>, vector<16x64xf32>, vector<56x64xf32> -> vector<56x64xf32>
    %344 = vector.extract_strided_slice %333 {offsets = [16, 0], sizes = [16, 64], strides = [1, 1]} : vector<32x64xf32> to vector<16x64xf32>
    %cst_100 = arith.constant dense<0.000000e+00> : vector<56x64xf32>
    %345 = tpu.matmul %331, %344, %cst_100 {dimension_numbers = #tpu.dot_dimension_numbers<[1], [0], [0], [1], [0, 0, 1, 1], [], []>} : vector<56x16xf32>, vector<16x64xf32>, vector<56x64xf32> -> vector<56x64xf32>
    %346 = arith.addf %343, %345 : vector<56x64xf32>
    %c0_101 = arith.constant 0 : index
    %c0_102 = arith.constant 0 : index
    %347 = vector.load %arg17[%c0_101, %c0_102] : memref<1x64xf32, #tpu.memory_space<vmem>>, vector<1x64xf32>
    %348 = vector.broadcast %347 : vector<1x64xf32> to vector<56x64xf32>
    %349 = arith.addf %346, %348 : vector<56x64xf32>
    %cst_103 = arith.constant 0.000000e+00 : f32
    %350 = vector.broadcast %cst_103 : f32 to vector<8x16xf32>
    %cst_104 = arith.constant 0.000000e+00 : f32
    %351 = vector.broadcast %cst_104 : f32 to vector<8x16xf32>
    %c0_105 = arith.constant 0 : index
    %c0_106 = arith.constant 0 : index
    %352 = vector.load %arg14[%c0_105, %c0_106] : memref<16x64xf32, #tpu.memory_space<vmem>>, vector<16x64xf32>
    %c0_107 = arith.constant 0 : index
    %c0_108 = arith.constant 0 : index
    %353 = vector.load %arg15[%c0_107, %c0_108] : memref<16x64xf32, #tpu.memory_space<vmem>>, vector<16x64xf32>
    %cst_109 = arith.constant 0.000000e+00 : f32
    %354 = vector.broadcast %cst_109 : f32 to vector<8x16xf32>
    %cst_110 = arith.constant 0.000000e+00 : f32
    %355 = vector.broadcast %cst_110 : f32 to vector<8x16xf32>
    %356 = vector.extract_strided_slice %341 {offsets = [0, 0], sizes = [8, 64], strides = [1, 1]} : vector<56x64xf32> to vector<8x64xf32>
    %357 = vector.extract_strided_slice %349 {offsets = [48, 0], sizes = [8, 64], strides = [1, 1]} : vector<56x64xf32> to vector<8x64xf32>
    %358 = vector.extract_strided_slice %356 {offsets = [0, 0], sizes = [8, 48], strides = [1, 1]} : vector<8x64xf32> to vector<8x48xf32>
    %359 = arith.negf %358 : vector<8x48xf32>
    %360 = math.exp %359 : vector<8x48xf32>
    %cst_111 = arith.constant 1.000000e+00 : f32
    %361 = vector.broadcast %cst_111 : f32 to vector<8x48xf32>
    %362 = arith.addf %361, %360 : vector<8x48xf32>
    %363 = arith.divf %361, %362 : vector<8x48xf32>
    %364 = vector.extract_strided_slice %356 {offsets = [0, 48], sizes = [8, 16], strides = [1, 1]} : vector<8x64xf32> to vector<8x16xf32>
    %365 = math.tanh %364 : vector<8x16xf32>
    %366 = vector.extract_strided_slice %363 {offsets = [0, 16], sizes = [8, 16], strides = [1, 1]} : vector<8x48xf32> to vector<8x16xf32>
    %367 = arith.mulf %366, %354 : vector<8x16xf32>
    %368 = vector.extract_strided_slice %363 {offsets = [0, 0], sizes = [8, 16], strides = [1, 1]} : vector<8x48xf32> to vector<8x16xf32>
    %369 = arith.mulf %368, %365 : vector<8x16xf32>
    %370 = arith.addf %367, %369 : vector<8x16xf32>
    %371 = vector.extract_strided_slice %363 {offsets = [0, 32], sizes = [8, 16], strides = [1, 1]} : vector<8x48xf32> to vector<8x16xf32>
    %372 = math.tanh %370 : vector<8x16xf32>
    %373 = arith.mulf %371, %372 : vector<8x16xf32>
    %374 = vector.extract_strided_slice %357 {offsets = [0, 0], sizes = [8, 48], strides = [1, 1]} : vector<8x64xf32> to vector<8x48xf32>
    %375 = arith.negf %374 : vector<8x48xf32>
    %376 = math.exp %375 : vector<8x48xf32>
    %cst_112 = arith.constant 1.000000e+00 : f32
    %377 = vector.broadcast %cst_112 : f32 to vector<8x48xf32>
    %378 = arith.addf %377, %376 : vector<8x48xf32>
    %379 = arith.divf %377, %378 : vector<8x48xf32>
    %380 = vector.extract_strided_slice %357 {offsets = [0, 48], sizes = [8, 16], strides = [1, 1]} : vector<8x64xf32> to vector<8x16xf32>
    %381 = math.tanh %380 : vector<8x16xf32>
    %382 = vector.extract_strided_slice %379 {offsets = [0, 16], sizes = [8, 16], strides = [1, 1]} : vector<8x48xf32> to vector<8x16xf32>
    %383 = arith.mulf %382, %355 : vector<8x16xf32>
    %384 = vector.extract_strided_slice %379 {offsets = [0, 0], sizes = [8, 16], strides = [1, 1]} : vector<8x48xf32> to vector<8x16xf32>
    %385 = arith.mulf %384, %381 : vector<8x16xf32>
    %386 = arith.addf %383, %385 : vector<8x16xf32>
    %387 = vector.extract_strided_slice %379 {offsets = [0, 32], sizes = [8, 16], strides = [1, 1]} : vector<8x48xf32> to vector<8x16xf32>
    %388 = math.tanh %386 : vector<8x16xf32>
    %389 = arith.mulf %387, %388 : vector<8x16xf32>
    %390 = arith.addf %350, %373 : vector<8x16xf32>
    %391 = arith.addf %351, %389 : vector<8x16xf32>
    %392 = vector.extract_strided_slice %341 {offsets = [8, 0], sizes = [8, 64], strides = [1, 1]} : vector<56x64xf32> to vector<8x64xf32>
    %393 = vector.extract_strided_slice %349 {offsets = [40, 0], sizes = [8, 64], strides = [1, 1]} : vector<56x64xf32> to vector<8x64xf32>
    %cst_113 = arith.constant dense<0.000000e+00> : vector<8x64xf32>
    %394 = tpu.matmul %373, %352, %cst_113 {dimension_numbers = #tpu.dot_dimension_numbers<[1], [0], [0], [1], [0, 0, 1, 1], [], []>} : vector<8x16xf32>, vector<16x64xf32>, vector<8x64xf32> -> vector<8x64xf32>
    %395 = arith.addf %392, %394 : vector<8x64xf32>
    %cst_114 = arith.constant dense<0.000000e+00> : vector<8x64xf32>
    %396 = tpu.matmul %389, %353, %cst_114 {dimension_numbers = #tpu.dot_dimension_numbers<[1], [0], [0], [1], [0, 0, 1, 1], [], []>} : vector<8x16xf32>, vector<16x64xf32>, vector<8x64xf32> -> vector<8x64xf32>
    %397 = arith.addf %393, %396 : vector<8x64xf32>
    %398 = vector.extract_strided_slice %395 {offsets = [0, 0], sizes = [8, 48], strides = [1, 1]} : vector<8x64xf32> to vector<8x48xf32>
    %399 = arith.negf %398 : vector<8x48xf32>
    %400 = math.exp %399 : vector<8x48xf32>
    %cst_115 = arith.constant 1.000000e+00 : f32
    %401 = vector.broadcast %cst_115 : f32 to vector<8x48xf32>
    %402 = arith.addf %401, %400 : vector<8x48xf32>
    %403 = arith.divf %401, %402 : vector<8x48xf32>
    %404 = vector.extract_strided_slice %395 {offsets = [0, 48], sizes = [8, 16], strides = [1, 1]} : vector<8x64xf32> to vector<8x16xf32>
    %405 = math.tanh %404 : vector<8x16xf32>
    %406 = vector.extract_strided_slice %403 {offsets = [0, 16], sizes = [8, 16], strides = [1, 1]} : vector<8x48xf32> to vector<8x16xf32>
    %407 = arith.mulf %406, %370 : vector<8x16xf32>
    %408 = vector.extract_strided_slice %403 {offsets = [0, 0], sizes = [8, 16], strides = [1, 1]} : vector<8x48xf32> to vector<8x16xf32>
    %409 = arith.mulf %408, %405 : vector<8x16xf32>
    %410 = arith.addf %407, %409 : vector<8x16xf32>
    %411 = vector.extract_strided_slice %403 {offsets = [0, 32], sizes = [8, 16], strides = [1, 1]} : vector<8x48xf32> to vector<8x16xf32>
    %412 = math.tanh %410 : vector<8x16xf32>
    %413 = arith.mulf %411, %412 : vector<8x16xf32>
    %414 = vector.extract_strided_slice %397 {offsets = [0, 0], sizes = [8, 48], strides = [1, 1]} : vector<8x64xf32> to vector<8x48xf32>
    %415 = arith.negf %414 : vector<8x48xf32>
    %416 = math.exp %415 : vector<8x48xf32>
    %cst_116 = arith.constant 1.000000e+00 : f32
    %417 = vector.broadcast %cst_116 : f32 to vector<8x48xf32>
    %418 = arith.addf %417, %416 : vector<8x48xf32>
    %419 = arith.divf %417, %418 : vector<8x48xf32>
    %420 = vector.extract_strided_slice %397 {offsets = [0, 48], sizes = [8, 16], strides = [1, 1]} : vector<8x64xf32> to vector<8x16xf32>
    %421 = math.tanh %420 : vector<8x16xf32>
    %422 = vector.extract_strided_slice %419 {offsets = [0, 16], sizes = [8, 16], strides = [1, 1]} : vector<8x48xf32> to vector<8x16xf32>
    %423 = arith.mulf %422, %386 : vector<8x16xf32>
    %424 = vector.extract_strided_slice %419 {offsets = [0, 0], sizes = [8, 16], strides = [1, 1]} : vector<8x48xf32> to vector<8x16xf32>
    %425 = arith.mulf %424, %421 : vector<8x16xf32>
    %426 = arith.addf %423, %425 : vector<8x16xf32>
    %427 = vector.extract_strided_slice %419 {offsets = [0, 32], sizes = [8, 16], strides = [1, 1]} : vector<8x48xf32> to vector<8x16xf32>
    %428 = math.tanh %426 : vector<8x16xf32>
    %429 = arith.mulf %427, %428 : vector<8x16xf32>
    %430 = arith.addf %390, %413 : vector<8x16xf32>
    %431 = arith.addf %391, %429 : vector<8x16xf32>
    %432 = vector.extract_strided_slice %341 {offsets = [16, 0], sizes = [8, 64], strides = [1, 1]} : vector<56x64xf32> to vector<8x64xf32>
    %433 = vector.extract_strided_slice %349 {offsets = [32, 0], sizes = [8, 64], strides = [1, 1]} : vector<56x64xf32> to vector<8x64xf32>
    %cst_117 = arith.constant dense<0.000000e+00> : vector<8x64xf32>
    %434 = tpu.matmul %413, %352, %cst_117 {dimension_numbers = #tpu.dot_dimension_numbers<[1], [0], [0], [1], [0, 0, 1, 1], [], []>} : vector<8x16xf32>, vector<16x64xf32>, vector<8x64xf32> -> vector<8x64xf32>
    %435 = arith.addf %432, %434 : vector<8x64xf32>
    %cst_118 = arith.constant dense<0.000000e+00> : vector<8x64xf32>
    %436 = tpu.matmul %429, %353, %cst_118 {dimension_numbers = #tpu.dot_dimension_numbers<[1], [0], [0], [1], [0, 0, 1, 1], [], []>} : vector<8x16xf32>, vector<16x64xf32>, vector<8x64xf32> -> vector<8x64xf32>
    %437 = arith.addf %433, %436 : vector<8x64xf32>
    %438 = vector.extract_strided_slice %435 {offsets = [0, 0], sizes = [8, 48], strides = [1, 1]} : vector<8x64xf32> to vector<8x48xf32>
    %439 = arith.negf %438 : vector<8x48xf32>
    %440 = math.exp %439 : vector<8x48xf32>
    %cst_119 = arith.constant 1.000000e+00 : f32
    %441 = vector.broadcast %cst_119 : f32 to vector<8x48xf32>
    %442 = arith.addf %441, %440 : vector<8x48xf32>
    %443 = arith.divf %441, %442 : vector<8x48xf32>
    %444 = vector.extract_strided_slice %435 {offsets = [0, 48], sizes = [8, 16], strides = [1, 1]} : vector<8x64xf32> to vector<8x16xf32>
    %445 = math.tanh %444 : vector<8x16xf32>
    %446 = vector.extract_strided_slice %443 {offsets = [0, 16], sizes = [8, 16], strides = [1, 1]} : vector<8x48xf32> to vector<8x16xf32>
    %447 = arith.mulf %446, %410 : vector<8x16xf32>
    %448 = vector.extract_strided_slice %443 {offsets = [0, 0], sizes = [8, 16], strides = [1, 1]} : vector<8x48xf32> to vector<8x16xf32>
    %449 = arith.mulf %448, %445 : vector<8x16xf32>
    %450 = arith.addf %447, %449 : vector<8x16xf32>
    %451 = vector.extract_strided_slice %443 {offsets = [0, 32], sizes = [8, 16], strides = [1, 1]} : vector<8x48xf32> to vector<8x16xf32>
    %452 = math.tanh %450 : vector<8x16xf32>
    %453 = arith.mulf %451, %452 : vector<8x16xf32>
    %454 = vector.extract_strided_slice %437 {offsets = [0, 0], sizes = [8, 48], strides = [1, 1]} : vector<8x64xf32> to vector<8x48xf32>
    %455 = arith.negf %454 : vector<8x48xf32>
    %456 = math.exp %455 : vector<8x48xf32>
    %cst_120 = arith.constant 1.000000e+00 : f32
    %457 = vector.broadcast %cst_120 : f32 to vector<8x48xf32>
    %458 = arith.addf %457, %456 : vector<8x48xf32>
    %459 = arith.divf %457, %458 : vector<8x48xf32>
    %460 = vector.extract_strided_slice %437 {offsets = [0, 48], sizes = [8, 16], strides = [1, 1]} : vector<8x64xf32> to vector<8x16xf32>
    %461 = math.tanh %460 : vector<8x16xf32>
    %462 = vector.extract_strided_slice %459 {offsets = [0, 16], sizes = [8, 16], strides = [1, 1]} : vector<8x48xf32> to vector<8x16xf32>
    %463 = arith.mulf %462, %426 : vector<8x16xf32>
    %464 = vector.extract_strided_slice %459 {offsets = [0, 0], sizes = [8, 16], strides = [1, 1]} : vector<8x48xf32> to vector<8x16xf32>
    %465 = arith.mulf %464, %461 : vector<8x16xf32>
    %466 = arith.addf %463, %465 : vector<8x16xf32>
    %467 = vector.extract_strided_slice %459 {offsets = [0, 32], sizes = [8, 16], strides = [1, 1]} : vector<8x48xf32> to vector<8x16xf32>
    %468 = math.tanh %466 : vector<8x16xf32>
    %469 = arith.mulf %467, %468 : vector<8x16xf32>
    %470 = arith.addf %430, %453 : vector<8x16xf32>
    %471 = arith.addf %431, %469 : vector<8x16xf32>
    %472 = vector.extract_strided_slice %341 {offsets = [24, 0], sizes = [8, 64], strides = [1, 1]} : vector<56x64xf32> to vector<8x64xf32>
    %473 = vector.extract_strided_slice %349 {offsets = [24, 0], sizes = [8, 64], strides = [1, 1]} : vector<56x64xf32> to vector<8x64xf32>
    %cst_121 = arith.constant dense<0.000000e+00> : vector<8x64xf32>
    %474 = tpu.matmul %453, %352, %cst_121 {dimension_numbers = #tpu.dot_dimension_numbers<[1], [0], [0], [1], [0, 0, 1, 1], [], []>} : vector<8x16xf32>, vector<16x64xf32>, vector<8x64xf32> -> vector<8x64xf32>
    %475 = arith.addf %472, %474 : vector<8x64xf32>
    %cst_122 = arith.constant dense<0.000000e+00> : vector<8x64xf32>
    %476 = tpu.matmul %469, %353, %cst_122 {dimension_numbers = #tpu.dot_dimension_numbers<[1], [0], [0], [1], [0, 0, 1, 1], [], []>} : vector<8x16xf32>, vector<16x64xf32>, vector<8x64xf32> -> vector<8x64xf32>
    %477 = arith.addf %473, %476 : vector<8x64xf32>
    %478 = vector.extract_strided_slice %475 {offsets = [0, 0], sizes = [8, 48], strides = [1, 1]} : vector<8x64xf32> to vector<8x48xf32>
    %479 = arith.negf %478 : vector<8x48xf32>
    %480 = math.exp %479 : vector<8x48xf32>
    %cst_123 = arith.constant 1.000000e+00 : f32
    %481 = vector.broadcast %cst_123 : f32 to vector<8x48xf32>
    %482 = arith.addf %481, %480 : vector<8x48xf32>
    %483 = arith.divf %481, %482 : vector<8x48xf32>
    %484 = vector.extract_strided_slice %475 {offsets = [0, 48], sizes = [8, 16], strides = [1, 1]} : vector<8x64xf32> to vector<8x16xf32>
    %485 = math.tanh %484 : vector<8x16xf32>
    %486 = vector.extract_strided_slice %483 {offsets = [0, 16], sizes = [8, 16], strides = [1, 1]} : vector<8x48xf32> to vector<8x16xf32>
    %487 = arith.mulf %486, %450 : vector<8x16xf32>
    %488 = vector.extract_strided_slice %483 {offsets = [0, 0], sizes = [8, 16], strides = [1, 1]} : vector<8x48xf32> to vector<8x16xf32>
    %489 = arith.mulf %488, %485 : vector<8x16xf32>
    %490 = arith.addf %487, %489 : vector<8x16xf32>
    %491 = vector.extract_strided_slice %483 {offsets = [0, 32], sizes = [8, 16], strides = [1, 1]} : vector<8x48xf32> to vector<8x16xf32>
    %492 = math.tanh %490 : vector<8x16xf32>
    %493 = arith.mulf %491, %492 : vector<8x16xf32>
    %494 = vector.extract_strided_slice %477 {offsets = [0, 0], sizes = [8, 48], strides = [1, 1]} : vector<8x64xf32> to vector<8x48xf32>
    %495 = arith.negf %494 : vector<8x48xf32>
    %496 = math.exp %495 : vector<8x48xf32>
    %cst_124 = arith.constant 1.000000e+00 : f32
    %497 = vector.broadcast %cst_124 : f32 to vector<8x48xf32>
    %498 = arith.addf %497, %496 : vector<8x48xf32>
    %499 = arith.divf %497, %498 : vector<8x48xf32>
    %500 = vector.extract_strided_slice %477 {offsets = [0, 48], sizes = [8, 16], strides = [1, 1]} : vector<8x64xf32> to vector<8x16xf32>
    %501 = math.tanh %500 : vector<8x16xf32>
    %502 = vector.extract_strided_slice %499 {offsets = [0, 16], sizes = [8, 16], strides = [1, 1]} : vector<8x48xf32> to vector<8x16xf32>
    %503 = arith.mulf %502, %466 : vector<8x16xf32>
    %504 = vector.extract_strided_slice %499 {offsets = [0, 0], sizes = [8, 16], strides = [1, 1]} : vector<8x48xf32> to vector<8x16xf32>
    %505 = arith.mulf %504, %501 : vector<8x16xf32>
    %506 = arith.addf %503, %505 : vector<8x16xf32>
    %507 = vector.extract_strided_slice %499 {offsets = [0, 32], sizes = [8, 16], strides = [1, 1]} : vector<8x48xf32> to vector<8x16xf32>
    %508 = math.tanh %506 : vector<8x16xf32>
    %509 = arith.mulf %507, %508 : vector<8x16xf32>
    %510 = arith.addf %470, %493 : vector<8x16xf32>
    %511 = arith.addf %471, %509 : vector<8x16xf32>
    %512 = vector.extract_strided_slice %341 {offsets = [32, 0], sizes = [8, 64], strides = [1, 1]} : vector<56x64xf32> to vector<8x64xf32>
    %513 = vector.extract_strided_slice %349 {offsets = [16, 0], sizes = [8, 64], strides = [1, 1]} : vector<56x64xf32> to vector<8x64xf32>
    %cst_125 = arith.constant dense<0.000000e+00> : vector<8x64xf32>
    %514 = tpu.matmul %493, %352, %cst_125 {dimension_numbers = #tpu.dot_dimension_numbers<[1], [0], [0], [1], [0, 0, 1, 1], [], []>} : vector<8x16xf32>, vector<16x64xf32>, vector<8x64xf32> -> vector<8x64xf32>
    %515 = arith.addf %512, %514 : vector<8x64xf32>
    %cst_126 = arith.constant dense<0.000000e+00> : vector<8x64xf32>
    %516 = tpu.matmul %509, %353, %cst_126 {dimension_numbers = #tpu.dot_dimension_numbers<[1], [0], [0], [1], [0, 0, 1, 1], [], []>} : vector<8x16xf32>, vector<16x64xf32>, vector<8x64xf32> -> vector<8x64xf32>
    %517 = arith.addf %513, %516 : vector<8x64xf32>
    %518 = vector.extract_strided_slice %515 {offsets = [0, 0], sizes = [8, 48], strides = [1, 1]} : vector<8x64xf32> to vector<8x48xf32>
    %519 = arith.negf %518 : vector<8x48xf32>
    %520 = math.exp %519 : vector<8x48xf32>
    %cst_127 = arith.constant 1.000000e+00 : f32
    %521 = vector.broadcast %cst_127 : f32 to vector<8x48xf32>
    %522 = arith.addf %521, %520 : vector<8x48xf32>
    %523 = arith.divf %521, %522 : vector<8x48xf32>
    %524 = vector.extract_strided_slice %515 {offsets = [0, 48], sizes = [8, 16], strides = [1, 1]} : vector<8x64xf32> to vector<8x16xf32>
    %525 = math.tanh %524 : vector<8x16xf32>
    %526 = vector.extract_strided_slice %523 {offsets = [0, 16], sizes = [8, 16], strides = [1, 1]} : vector<8x48xf32> to vector<8x16xf32>
    %527 = arith.mulf %526, %490 : vector<8x16xf32>
    %528 = vector.extract_strided_slice %523 {offsets = [0, 0], sizes = [8, 16], strides = [1, 1]} : vector<8x48xf32> to vector<8x16xf32>
    %529 = arith.mulf %528, %525 : vector<8x16xf32>
    %530 = arith.addf %527, %529 : vector<8x16xf32>
    %531 = vector.extract_strided_slice %523 {offsets = [0, 32], sizes = [8, 16], strides = [1, 1]} : vector<8x48xf32> to vector<8x16xf32>
    %532 = math.tanh %530 : vector<8x16xf32>
    %533 = arith.mulf %531, %532 : vector<8x16xf32>
    %534 = vector.extract_strided_slice %517 {offsets = [0, 0], sizes = [8, 48], strides = [1, 1]} : vector<8x64xf32> to vector<8x48xf32>
    %535 = arith.negf %534 : vector<8x48xf32>
    %536 = math.exp %535 : vector<8x48xf32>
    %cst_128 = arith.constant 1.000000e+00 : f32
    %537 = vector.broadcast %cst_128 : f32 to vector<8x48xf32>
    %538 = arith.addf %537, %536 : vector<8x48xf32>
    %539 = arith.divf %537, %538 : vector<8x48xf32>
    %540 = vector.extract_strided_slice %517 {offsets = [0, 48], sizes = [8, 16], strides = [1, 1]} : vector<8x64xf32> to vector<8x16xf32>
    %541 = math.tanh %540 : vector<8x16xf32>
    %542 = vector.extract_strided_slice %539 {offsets = [0, 16], sizes = [8, 16], strides = [1, 1]} : vector<8x48xf32> to vector<8x16xf32>
    %543 = arith.mulf %542, %506 : vector<8x16xf32>
    %544 = vector.extract_strided_slice %539 {offsets = [0, 0], sizes = [8, 16], strides = [1, 1]} : vector<8x48xf32> to vector<8x16xf32>
    %545 = arith.mulf %544, %541 : vector<8x16xf32>
    %546 = arith.addf %543, %545 : vector<8x16xf32>
    %547 = vector.extract_strided_slice %539 {offsets = [0, 32], sizes = [8, 16], strides = [1, 1]} : vector<8x48xf32> to vector<8x16xf32>
    %548 = math.tanh %546 : vector<8x16xf32>
    %549 = arith.mulf %547, %548 : vector<8x16xf32>
    %550 = arith.addf %510, %533 : vector<8x16xf32>
    %551 = arith.addf %511, %549 : vector<8x16xf32>
    %552 = vector.extract_strided_slice %341 {offsets = [40, 0], sizes = [8, 64], strides = [1, 1]} : vector<56x64xf32> to vector<8x64xf32>
    %553 = vector.extract_strided_slice %349 {offsets = [8, 0], sizes = [8, 64], strides = [1, 1]} : vector<56x64xf32> to vector<8x64xf32>
    %cst_129 = arith.constant dense<0.000000e+00> : vector<8x64xf32>
    %554 = tpu.matmul %533, %352, %cst_129 {dimension_numbers = #tpu.dot_dimension_numbers<[1], [0], [0], [1], [0, 0, 1, 1], [], []>} : vector<8x16xf32>, vector<16x64xf32>, vector<8x64xf32> -> vector<8x64xf32>
    %555 = arith.addf %552, %554 : vector<8x64xf32>
    %cst_130 = arith.constant dense<0.000000e+00> : vector<8x64xf32>
    %556 = tpu.matmul %549, %353, %cst_130 {dimension_numbers = #tpu.dot_dimension_numbers<[1], [0], [0], [1], [0, 0, 1, 1], [], []>} : vector<8x16xf32>, vector<16x64xf32>, vector<8x64xf32> -> vector<8x64xf32>
    %557 = arith.addf %553, %556 : vector<8x64xf32>
    %558 = vector.extract_strided_slice %555 {offsets = [0, 0], sizes = [8, 48], strides = [1, 1]} : vector<8x64xf32> to vector<8x48xf32>
    %559 = arith.negf %558 : vector<8x48xf32>
    %560 = math.exp %559 : vector<8x48xf32>
    %cst_131 = arith.constant 1.000000e+00 : f32
    %561 = vector.broadcast %cst_131 : f32 to vector<8x48xf32>
    %562 = arith.addf %561, %560 : vector<8x48xf32>
    %563 = arith.divf %561, %562 : vector<8x48xf32>
    %564 = vector.extract_strided_slice %555 {offsets = [0, 48], sizes = [8, 16], strides = [1, 1]} : vector<8x64xf32> to vector<8x16xf32>
    %565 = math.tanh %564 : vector<8x16xf32>
    %566 = vector.extract_strided_slice %563 {offsets = [0, 16], sizes = [8, 16], strides = [1, 1]} : vector<8x48xf32> to vector<8x16xf32>
    %567 = arith.mulf %566, %530 : vector<8x16xf32>
    %568 = vector.extract_strided_slice %563 {offsets = [0, 0], sizes = [8, 16], strides = [1, 1]} : vector<8x48xf32> to vector<8x16xf32>
    %569 = arith.mulf %568, %565 : vector<8x16xf32>
    %570 = arith.addf %567, %569 : vector<8x16xf32>
    %571 = vector.extract_strided_slice %563 {offsets = [0, 32], sizes = [8, 16], strides = [1, 1]} : vector<8x48xf32> to vector<8x16xf32>
    %572 = math.tanh %570 : vector<8x16xf32>
    %573 = arith.mulf %571, %572 : vector<8x16xf32>
    %574 = vector.extract_strided_slice %557 {offsets = [0, 0], sizes = [8, 48], strides = [1, 1]} : vector<8x64xf32> to vector<8x48xf32>
    %575 = arith.negf %574 : vector<8x48xf32>
    %576 = math.exp %575 : vector<8x48xf32>
    %cst_132 = arith.constant 1.000000e+00 : f32
    %577 = vector.broadcast %cst_132 : f32 to vector<8x48xf32>
    %578 = arith.addf %577, %576 : vector<8x48xf32>
    %579 = arith.divf %577, %578 : vector<8x48xf32>
    %580 = vector.extract_strided_slice %557 {offsets = [0, 48], sizes = [8, 16], strides = [1, 1]} : vector<8x64xf32> to vector<8x16xf32>
    %581 = math.tanh %580 : vector<8x16xf32>
    %582 = vector.extract_strided_slice %579 {offsets = [0, 16], sizes = [8, 16], strides = [1, 1]} : vector<8x48xf32> to vector<8x16xf32>
    %583 = arith.mulf %582, %546 : vector<8x16xf32>
    %584 = vector.extract_strided_slice %579 {offsets = [0, 0], sizes = [8, 16], strides = [1, 1]} : vector<8x48xf32> to vector<8x16xf32>
    %585 = arith.mulf %584, %581 : vector<8x16xf32>
    %586 = arith.addf %583, %585 : vector<8x16xf32>
    %587 = vector.extract_strided_slice %579 {offsets = [0, 32], sizes = [8, 16], strides = [1, 1]} : vector<8x48xf32> to vector<8x16xf32>
    %588 = math.tanh %586 : vector<8x16xf32>
    %589 = arith.mulf %587, %588 : vector<8x16xf32>
    %590 = arith.addf %550, %573 : vector<8x16xf32>
    %591 = arith.addf %551, %589 : vector<8x16xf32>
    %592 = vector.extract_strided_slice %341 {offsets = [48, 0], sizes = [8, 64], strides = [1, 1]} : vector<56x64xf32> to vector<8x64xf32>
    %593 = vector.extract_strided_slice %349 {offsets = [0, 0], sizes = [8, 64], strides = [1, 1]} : vector<56x64xf32> to vector<8x64xf32>
    %cst_133 = arith.constant dense<0.000000e+00> : vector<8x64xf32>
    %594 = tpu.matmul %573, %352, %cst_133 {dimension_numbers = #tpu.dot_dimension_numbers<[1], [0], [0], [1], [0, 0, 1, 1], [], []>} : vector<8x16xf32>, vector<16x64xf32>, vector<8x64xf32> -> vector<8x64xf32>
    %595 = arith.addf %592, %594 : vector<8x64xf32>
    %cst_134 = arith.constant dense<0.000000e+00> : vector<8x64xf32>
    %596 = tpu.matmul %589, %353, %cst_134 {dimension_numbers = #tpu.dot_dimension_numbers<[1], [0], [0], [1], [0, 0, 1, 1], [], []>} : vector<8x16xf32>, vector<16x64xf32>, vector<8x64xf32> -> vector<8x64xf32>
    %597 = arith.addf %593, %596 : vector<8x64xf32>
    %598 = vector.extract_strided_slice %595 {offsets = [0, 0], sizes = [8, 48], strides = [1, 1]} : vector<8x64xf32> to vector<8x48xf32>
    %599 = arith.negf %598 : vector<8x48xf32>
    %600 = math.exp %599 : vector<8x48xf32>
    %cst_135 = arith.constant 1.000000e+00 : f32
    %601 = vector.broadcast %cst_135 : f32 to vector<8x48xf32>
    %602 = arith.addf %601, %600 : vector<8x48xf32>
    %603 = arith.divf %601, %602 : vector<8x48xf32>
    %604 = vector.extract_strided_slice %595 {offsets = [0, 48], sizes = [8, 16], strides = [1, 1]} : vector<8x64xf32> to vector<8x16xf32>
    %605 = math.tanh %604 : vector<8x16xf32>
    %606 = vector.extract_strided_slice %603 {offsets = [0, 16], sizes = [8, 16], strides = [1, 1]} : vector<8x48xf32> to vector<8x16xf32>
    %607 = arith.mulf %606, %570 : vector<8x16xf32>
    %608 = vector.extract_strided_slice %603 {offsets = [0, 0], sizes = [8, 16], strides = [1, 1]} : vector<8x48xf32> to vector<8x16xf32>
    %609 = arith.mulf %608, %605 : vector<8x16xf32>
    %610 = arith.addf %607, %609 : vector<8x16xf32>
    %611 = vector.extract_strided_slice %603 {offsets = [0, 32], sizes = [8, 16], strides = [1, 1]} : vector<8x48xf32> to vector<8x16xf32>
    %612 = math.tanh %610 : vector<8x16xf32>
    %613 = arith.mulf %611, %612 : vector<8x16xf32>
    %614 = vector.extract_strided_slice %597 {offsets = [0, 0], sizes = [8, 48], strides = [1, 1]} : vector<8x64xf32> to vector<8x48xf32>
    %615 = arith.negf %614 : vector<8x48xf32>
    %616 = math.exp %615 : vector<8x48xf32>
    %cst_136 = arith.constant 1.000000e+00 : f32
    %617 = vector.broadcast %cst_136 : f32 to vector<8x48xf32>
    %618 = arith.addf %617, %616 : vector<8x48xf32>
    %619 = arith.divf %617, %618 : vector<8x48xf32>
    %620 = vector.extract_strided_slice %597 {offsets = [0, 48], sizes = [8, 16], strides = [1, 1]} : vector<8x64xf32> to vector<8x16xf32>
    %621 = math.tanh %620 : vector<8x16xf32>
    %622 = vector.extract_strided_slice %619 {offsets = [0, 16], sizes = [8, 16], strides = [1, 1]} : vector<8x48xf32> to vector<8x16xf32>
    %623 = arith.mulf %622, %586 : vector<8x16xf32>
    %624 = vector.extract_strided_slice %619 {offsets = [0, 0], sizes = [8, 16], strides = [1, 1]} : vector<8x48xf32> to vector<8x16xf32>
    %625 = arith.mulf %624, %621 : vector<8x16xf32>
    %626 = arith.addf %623, %625 : vector<8x16xf32>
    %627 = vector.extract_strided_slice %619 {offsets = [0, 32], sizes = [8, 16], strides = [1, 1]} : vector<8x48xf32> to vector<8x16xf32>
    %628 = math.tanh %626 : vector<8x16xf32>
    %629 = arith.mulf %627, %628 : vector<8x16xf32>
    %630 = arith.addf %590, %613 : vector<8x16xf32>
    %631 = arith.addf %591, %629 : vector<8x16xf32>
    %cst_137 = arith.constant 0.142857149 : f32
    %632 = vector.broadcast %cst_137 : f32 to vector<8x16xf32>
    %633 = arith.mulf %630, %632 : vector<8x16xf32>
    %cst_138 = arith.constant 0.142857149 : f32
    %634 = vector.broadcast %cst_138 : f32 to vector<8x16xf32>
    %635 = arith.mulf %631, %634 : vector<8x16xf32>
    %c0_139 = arith.constant 0 : index
    %c0_140 = arith.constant 0 : index
    %636 = vector.load %arg18[%c0_139, %c0_140] : memref<8x8xf32, #tpu.memory_space<vmem>>, vector<8x8xf32>
    %cst_141 = arith.constant dense<0.000000e+00> : vector<8x16xf32>
    %637 = tpu.matmul %636, %633, %cst_141 {dimension_numbers = #tpu.dot_dimension_numbers<[1], [0], [0], [1], [0, 0, 1, 1], [], []>} : vector<8x8xf32>, vector<8x16xf32>, vector<8x16xf32> -> vector<8x16xf32>
    %cst_142 = arith.constant dense<0.000000e+00> : vector<8x16xf32>
    %638 = tpu.matmul %636, %635, %cst_142 {dimension_numbers = #tpu.dot_dimension_numbers<[1], [0], [0], [1], [0, 0, 1, 1], [], []>} : vector<8x8xf32>, vector<8x16xf32>, vector<8x16xf32> -> vector<8x16xf32>
    %c0_143 = arith.constant 0 : index
    %c0_144 = arith.constant 0 : index
    %639 = vector.load %arg19[%c0_143, %c0_144] : memref<32x64xf32, #tpu.memory_space<vmem>>, vector<32x64xf32>
    %c0_145 = arith.constant 0 : index
    %c0_146 = arith.constant 0 : index
    %640 = vector.load %arg20[%c0_145, %c0_146] : memref<32x64xf32, #tpu.memory_space<vmem>>, vector<32x64xf32>
    %641 = vector.extract_strided_slice %639 {offsets = [0, 0], sizes = [16, 64], strides = [1, 1]} : vector<32x64xf32> to vector<16x64xf32>
    %cst_147 = arith.constant dense<0.000000e+00> : vector<8x64xf32>
    %642 = tpu.matmul %637, %641, %cst_147 {dimension_numbers = #tpu.dot_dimension_numbers<[1], [0], [0], [1], [0, 0, 1, 1], [], []>} : vector<8x16xf32>, vector<16x64xf32>, vector<8x64xf32> -> vector<8x64xf32>
    %643 = vector.extract_strided_slice %639 {offsets = [16, 0], sizes = [16, 64], strides = [1, 1]} : vector<32x64xf32> to vector<16x64xf32>
    %cst_148 = arith.constant dense<0.000000e+00> : vector<8x64xf32>
    %644 = tpu.matmul %638, %643, %cst_148 {dimension_numbers = #tpu.dot_dimension_numbers<[1], [0], [0], [1], [0, 0, 1, 1], [], []>} : vector<8x16xf32>, vector<16x64xf32>, vector<8x64xf32> -> vector<8x64xf32>
    %645 = arith.addf %642, %644 : vector<8x64xf32>
    %c0_149 = arith.constant 0 : index
    %c0_150 = arith.constant 0 : index
    %646 = vector.load %arg23[%c0_149, %c0_150] : memref<1x64xf32, #tpu.memory_space<vmem>>, vector<1x64xf32>
    %647 = vector.broadcast %646 : vector<1x64xf32> to vector<8x64xf32>
    %648 = arith.addf %645, %647 : vector<8x64xf32>
    %649 = vector.extract_strided_slice %640 {offsets = [0, 0], sizes = [16, 64], strides = [1, 1]} : vector<32x64xf32> to vector<16x64xf32>
    %cst_151 = arith.constant dense<0.000000e+00> : vector<8x64xf32>
    %650 = tpu.matmul %637, %649, %cst_151 {dimension_numbers = #tpu.dot_dimension_numbers<[1], [0], [0], [1], [0, 0, 1, 1], [], []>} : vector<8x16xf32>, vector<16x64xf32>, vector<8x64xf32> -> vector<8x64xf32>
    %651 = vector.extract_strided_slice %640 {offsets = [16, 0], sizes = [16, 64], strides = [1, 1]} : vector<32x64xf32> to vector<16x64xf32>
    %cst_152 = arith.constant dense<0.000000e+00> : vector<8x64xf32>
    %652 = tpu.matmul %638, %651, %cst_152 {dimension_numbers = #tpu.dot_dimension_numbers<[1], [0], [0], [1], [0, 0, 1, 1], [], []>} : vector<8x16xf32>, vector<16x64xf32>, vector<8x64xf32> -> vector<8x64xf32>
    %653 = arith.addf %650, %652 : vector<8x64xf32>
    %c0_153 = arith.constant 0 : index
    %c0_154 = arith.constant 0 : index
    %654 = vector.load %arg24[%c0_153, %c0_154] : memref<1x64xf32, #tpu.memory_space<vmem>>, vector<1x64xf32>
    %655 = vector.broadcast %654 : vector<1x64xf32> to vector<8x64xf32>
    %656 = arith.addf %653, %655 : vector<8x64xf32>
    %c0_155 = arith.constant 0 : index
    %c0_156 = arith.constant 0 : index
    %657 = vector.load %arg21[%c0_155, %c0_156] : memref<16x64xf32, #tpu.memory_space<vmem>>, vector<16x64xf32>
    %c0_157 = arith.constant 0 : index
    %c0_158 = arith.constant 0 : index
    %658 = vector.load %arg22[%c0_157, %c0_158] : memref<16x64xf32, #tpu.memory_space<vmem>>, vector<16x64xf32>
    %cst_159 = arith.constant 0.000000e+00 : f32
    %659 = vector.broadcast %cst_159 : f32 to vector<2x16xf32>
    %cst_160 = arith.constant 0.000000e+00 : f32
    %660 = vector.broadcast %cst_160 : f32 to vector<2x16xf32>
    %661 = vector.extract_strided_slice %648 {offsets = [0, 0], sizes = [2, 64], strides = [1, 1]} : vector<8x64xf32> to vector<2x64xf32>
    %662 = vector.extract_strided_slice %656 {offsets = [6, 0], sizes = [2, 64], strides = [1, 1]} : vector<8x64xf32> to vector<2x64xf32>
    %663 = vector.extract_strided_slice %661 {offsets = [0, 0], sizes = [2, 48], strides = [1, 1]} : vector<2x64xf32> to vector<2x48xf32>
    %664 = arith.negf %663 : vector<2x48xf32>
    %665 = math.exp %664 : vector<2x48xf32>
    %cst_161 = arith.constant 1.000000e+00 : f32
    %666 = vector.broadcast %cst_161 : f32 to vector<2x48xf32>
    %667 = arith.addf %666, %665 : vector<2x48xf32>
    %668 = arith.divf %666, %667 : vector<2x48xf32>
    %669 = vector.extract_strided_slice %661 {offsets = [0, 48], sizes = [2, 16], strides = [1, 1]} : vector<2x64xf32> to vector<2x16xf32>
    %670 = math.tanh %669 : vector<2x16xf32>
    %671 = vector.extract_strided_slice %668 {offsets = [0, 16], sizes = [2, 16], strides = [1, 1]} : vector<2x48xf32> to vector<2x16xf32>
    %672 = arith.mulf %671, %659 : vector<2x16xf32>
    %673 = vector.extract_strided_slice %668 {offsets = [0, 0], sizes = [2, 16], strides = [1, 1]} : vector<2x48xf32> to vector<2x16xf32>
    %674 = arith.mulf %673, %670 : vector<2x16xf32>
    %675 = arith.addf %672, %674 : vector<2x16xf32>
    %676 = vector.extract_strided_slice %668 {offsets = [0, 32], sizes = [2, 16], strides = [1, 1]} : vector<2x48xf32> to vector<2x16xf32>
    %677 = math.tanh %675 : vector<2x16xf32>
    %678 = arith.mulf %676, %677 : vector<2x16xf32>
    %679 = vector.extract_strided_slice %662 {offsets = [0, 0], sizes = [2, 48], strides = [1, 1]} : vector<2x64xf32> to vector<2x48xf32>
    %680 = arith.negf %679 : vector<2x48xf32>
    %681 = math.exp %680 : vector<2x48xf32>
    %cst_162 = arith.constant 1.000000e+00 : f32
    %682 = vector.broadcast %cst_162 : f32 to vector<2x48xf32>
    %683 = arith.addf %682, %681 : vector<2x48xf32>
    %684 = arith.divf %682, %683 : vector<2x48xf32>
    %685 = vector.extract_strided_slice %662 {offsets = [0, 48], sizes = [2, 16], strides = [1, 1]} : vector<2x64xf32> to vector<2x16xf32>
    %686 = math.tanh %685 : vector<2x16xf32>
    %687 = vector.extract_strided_slice %684 {offsets = [0, 16], sizes = [2, 16], strides = [1, 1]} : vector<2x48xf32> to vector<2x16xf32>
    %688 = arith.mulf %687, %660 : vector<2x16xf32>
    %689 = vector.extract_strided_slice %684 {offsets = [0, 0], sizes = [2, 16], strides = [1, 1]} : vector<2x48xf32> to vector<2x16xf32>
    %690 = arith.mulf %689, %686 : vector<2x16xf32>
    %691 = arith.addf %688, %690 : vector<2x16xf32>
    %692 = vector.extract_strided_slice %684 {offsets = [0, 32], sizes = [2, 16], strides = [1, 1]} : vector<2x48xf32> to vector<2x16xf32>
    %693 = math.tanh %691 : vector<2x16xf32>
    %694 = arith.mulf %692, %693 : vector<2x16xf32>
    %c0_163 = arith.constant 0 : index
    %c0_164 = arith.constant 0 : index
    %695 = vector.load %arg35[%c0_163, %c0_164] : memref<56x16xf32, #tpu.memory_space<vmem>>, vector<2x16xf32>
    tpu.vector_store %arg35[%c0_163, %c0_164], %678 {strides = array<i32>} : memref<56x16xf32, #tpu.memory_space<vmem>>, vector<2x16xf32>,
    %c6 = arith.constant 6 : index
    %c0_165 = arith.constant 0 : index
    %696 = vector.load %arg36[%c6, %c0_165] : memref<56x16xf32, #tpu.memory_space<vmem>>, vector<2x16xf32>
    tpu.vector_store %arg36[%c6, %c0_165], %694 {strides = array<i32>} : memref<56x16xf32, #tpu.memory_space<vmem>>, vector<2x16xf32>,
    %697 = vector.extract_strided_slice %648 {offsets = [2, 0], sizes = [2, 64], strides = [1, 1]} : vector<8x64xf32> to vector<2x64xf32>
    %698 = vector.extract_strided_slice %656 {offsets = [4, 0], sizes = [2, 64], strides = [1, 1]} : vector<8x64xf32> to vector<2x64xf32>
    %cst_166 = arith.constant dense<0.000000e+00> : vector<2x64xf32>
    %699 = tpu.matmul %678, %657, %cst_166 {dimension_numbers = #tpu.dot_dimension_numbers<[1], [0], [0], [1], [0, 0, 1, 1], [], []>} : vector<2x16xf32>, vector<16x64xf32>, vector<2x64xf32> -> vector<2x64xf32>
    %700 = arith.addf %697, %699 : vector<2x64xf32>
    %cst_167 = arith.constant dense<0.000000e+00> : vector<2x64xf32>
    %701 = tpu.matmul %694, %658, %cst_167 {dimension_numbers = #tpu.dot_dimension_numbers<[1], [0], [0], [1], [0, 0, 1, 1], [], []>} : vector<2x16xf32>, vector<16x64xf32>, vector<2x64xf32> -> vector<2x64xf32>
    %702 = arith.addf %698, %701 : vector<2x64xf32>
    %703 = vector.extract_strided_slice %700 {offsets = [0, 0], sizes = [2, 48], strides = [1, 1]} : vector<2x64xf32> to vector<2x48xf32>
    %704 = arith.negf %703 : vector<2x48xf32>
    %705 = math.exp %704 : vector<2x48xf32>
    %cst_168 = arith.constant 1.000000e+00 : f32
    %706 = vector.broadcast %cst_168 : f32 to vector<2x48xf32>
    %707 = arith.addf %706, %705 : vector<2x48xf32>
    %708 = arith.divf %706, %707 : vector<2x48xf32>
    %709 = vector.extract_strided_slice %700 {offsets = [0, 48], sizes = [2, 16], strides = [1, 1]} : vector<2x64xf32> to vector<2x16xf32>
    %710 = math.tanh %709 : vector<2x16xf32>
    %711 = vector.extract_strided_slice %708 {offsets = [0, 16], sizes = [2, 16], strides = [1, 1]} : vector<2x48xf32> to vector<2x16xf32>
    %712 = arith.mulf %711, %675 : vector<2x16xf32>
    %713 = vector.extract_strided_slice %708 {offsets = [0, 0], sizes = [2, 16], strides = [1, 1]} : vector<2x48xf32> to vector<2x16xf32>
    %714 = arith.mulf %713, %710 : vector<2x16xf32>
    %715 = arith.addf %712, %714 : vector<2x16xf32>
    %716 = vector.extract_strided_slice %708 {offsets = [0, 32], sizes = [2, 16], strides = [1, 1]} : vector<2x48xf32> to vector<2x16xf32>
    %717 = math.tanh %715 : vector<2x16xf32>
    %718 = arith.mulf %716, %717 : vector<2x16xf32>
    %719 = vector.extract_strided_slice %702 {offsets = [0, 0], sizes = [2, 48], strides = [1, 1]} : vector<2x64xf32> to vector<2x48xf32>
    %720 = arith.negf %719 : vector<2x48xf32>
    %721 = math.exp %720 : vector<2x48xf32>
    %cst_169 = arith.constant 1.000000e+00 : f32
    %722 = vector.broadcast %cst_169 : f32 to vector<2x48xf32>
    %723 = arith.addf %722, %721 : vector<2x48xf32>
    %724 = arith.divf %722, %723 : vector<2x48xf32>
    %725 = vector.extract_strided_slice %702 {offsets = [0, 48], sizes = [2, 16], strides = [1, 1]} : vector<2x64xf32> to vector<2x16xf32>
    %726 = math.tanh %725 : vector<2x16xf32>
    %727 = vector.extract_strided_slice %724 {offsets = [0, 16], sizes = [2, 16], strides = [1, 1]} : vector<2x48xf32> to vector<2x16xf32>
    %728 = arith.mulf %727, %691 : vector<2x16xf32>
    %729 = vector.extract_strided_slice %724 {offsets = [0, 0], sizes = [2, 16], strides = [1, 1]} : vector<2x48xf32> to vector<2x16xf32>
    %730 = arith.mulf %729, %726 : vector<2x16xf32>
    %731 = arith.addf %728, %730 : vector<2x16xf32>
    %732 = vector.extract_strided_slice %724 {offsets = [0, 32], sizes = [2, 16], strides = [1, 1]} : vector<2x48xf32> to vector<2x16xf32>
    %733 = math.tanh %731 : vector<2x16xf32>
    %734 = arith.mulf %732, %733 : vector<2x16xf32>
    %c2 = arith.constant 2 : index
    %c0_170 = arith.constant 0 : index
    %735 = vector.load %arg35[%c2, %c0_170] : memref<56x16xf32, #tpu.memory_space<vmem>>, vector<2x16xf32>
    tpu.vector_store %arg35[%c2, %c0_170], %718 {strides = array<i32>} : memref<56x16xf32, #tpu.memory_space<vmem>>, vector<2x16xf32>,
    %c4 = arith.constant 4 : index
    %c0_171 = arith.constant 0 : index
    %736 = vector.load %arg36[%c4, %c0_171] : memref<56x16xf32, #tpu.memory_space<vmem>>, vector<2x16xf32>
    tpu.vector_store %arg36[%c4, %c0_171], %734 {strides = array<i32>} : memref<56x16xf32, #tpu.memory_space<vmem>>, vector<2x16xf32>,
    %737 = vector.extract_strided_slice %648 {offsets = [4, 0], sizes = [2, 64], strides = [1, 1]} : vector<8x64xf32> to vector<2x64xf32>
    %738 = vector.extract_strided_slice %656 {offsets = [2, 0], sizes = [2, 64], strides = [1, 1]} : vector<8x64xf32> to vector<2x64xf32>
    %cst_172 = arith.constant dense<0.000000e+00> : vector<2x64xf32>
    %739 = tpu.matmul %718, %657, %cst_172 {dimension_numbers = #tpu.dot_dimension_numbers<[1], [0], [0], [1], [0, 0, 1, 1], [], []>} : vector<2x16xf32>, vector<16x64xf32>, vector<2x64xf32> -> vector<2x64xf32>
    %740 = arith.addf %737, %739 : vector<2x64xf32>
    %cst_173 = arith.constant dense<0.000000e+00> : vector<2x64xf32>
    %741 = tpu.matmul %734, %658, %cst_173 {dimension_numbers = #tpu.dot_dimension_numbers<[1], [0], [0], [1], [0, 0, 1, 1], [], []>} : vector<2x16xf32>, vector<16x64xf32>, vector<2x64xf32> -> vector<2x64xf32>
    %742 = arith.addf %738, %741 : vector<2x64xf32>
    %743 = vector.extract_strided_slice %740 {offsets = [0, 0], sizes = [2, 48], strides = [1, 1]} : vector<2x64xf32> to vector<2x48xf32>
    %744 = arith.negf %743 : vector<2x48xf32>
    %745 = math.exp %744 : vector<2x48xf32>
    %cst_174 = arith.constant 1.000000e+00 : f32
    %746 = vector.broadcast %cst_174 : f32 to vector<2x48xf32>
    %747 = arith.addf %746, %745 : vector<2x48xf32>
    %748 = arith.divf %746, %747 : vector<2x48xf32>
    %749 = vector.extract_strided_slice %740 {offsets = [0, 48], sizes = [2, 16], strides = [1, 1]} : vector<2x64xf32> to vector<2x16xf32>
    %750 = math.tanh %749 : vector<2x16xf32>
    %751 = vector.extract_strided_slice %748 {offsets = [0, 16], sizes = [2, 16], strides = [1, 1]} : vector<2x48xf32> to vector<2x16xf32>
    %752 = arith.mulf %751, %715 : vector<2x16xf32>
    %753 = vector.extract_strided_slice %748 {offsets = [0, 0], sizes = [2, 16], strides = [1, 1]} : vector<2x48xf32> to vector<2x16xf32>
    %754 = arith.mulf %753, %750 : vector<2x16xf32>
    %755 = arith.addf %752, %754 : vector<2x16xf32>
    %756 = vector.extract_strided_slice %748 {offsets = [0, 32], sizes = [2, 16], strides = [1, 1]} : vector<2x48xf32> to vector<2x16xf32>
    %757 = math.tanh %755 : vector<2x16xf32>
    %758 = arith.mulf %756, %757 : vector<2x16xf32>
    %759 = vector.extract_strided_slice %742 {offsets = [0, 0], sizes = [2, 48], strides = [1, 1]} : vector<2x64xf32> to vector<2x48xf32>
    %760 = arith.negf %759 : vector<2x48xf32>
    %761 = math.exp %760 : vector<2x48xf32>
    %cst_175 = arith.constant 1.000000e+00 : f32
    %762 = vector.broadcast %cst_175 : f32 to vector<2x48xf32>
    %763 = arith.addf %762, %761 : vector<2x48xf32>
    %764 = arith.divf %762, %763 : vector<2x48xf32>
    %765 = vector.extract_strided_slice %742 {offsets = [0, 48], sizes = [2, 16], strides = [1, 1]} : vector<2x64xf32> to vector<2x16xf32>
    %766 = math.tanh %765 : vector<2x16xf32>
    %767 = vector.extract_strided_slice %764 {offsets = [0, 16], sizes = [2, 16], strides = [1, 1]} : vector<2x48xf32> to vector<2x16xf32>
    %768 = arith.mulf %767, %731 : vector<2x16xf32>
    %769 = vector.extract_strided_slice %764 {offsets = [0, 0], sizes = [2, 16], strides = [1, 1]} : vector<2x48xf32> to vector<2x16xf32>
    %770 = arith.mulf %769, %766 : vector<2x16xf32>
    %771 = arith.addf %768, %770 : vector<2x16xf32>
    %772 = vector.extract_strided_slice %764 {offsets = [0, 32], sizes = [2, 16], strides = [1, 1]} : vector<2x48xf32> to vector<2x16xf32>
    %773 = math.tanh %771 : vector<2x16xf32>
    %774 = arith.mulf %772, %773 : vector<2x16xf32>
    %c4_176 = arith.constant 4 : index
    %c0_177 = arith.constant 0 : index
    %775 = vector.load %arg35[%c4_176, %c0_177] : memref<56x16xf32, #tpu.memory_space<vmem>>, vector<2x16xf32>
    tpu.vector_store %arg35[%c4_176, %c0_177], %758 {strides = array<i32>} : memref<56x16xf32, #tpu.memory_space<vmem>>, vector<2x16xf32>,
    %c2_178 = arith.constant 2 : index
    %c0_179 = arith.constant 0 : index
    %776 = vector.load %arg36[%c2_178, %c0_179] : memref<56x16xf32, #tpu.memory_space<vmem>>, vector<2x16xf32>
    tpu.vector_store %arg36[%c2_178, %c0_179], %774 {strides = array<i32>} : memref<56x16xf32, #tpu.memory_space<vmem>>, vector<2x16xf32>,
    %777 = vector.extract_strided_slice %648 {offsets = [6, 0], sizes = [2, 64], strides = [1, 1]} : vector<8x64xf32> to vector<2x64xf32>
    %778 = vector.extract_strided_slice %656 {offsets = [0, 0], sizes = [2, 64], strides = [1, 1]} : vector<8x64xf32> to vector<2x64xf32>
    %cst_180 = arith.constant dense<0.000000e+00> : vector<2x64xf32>
    %779 = tpu.matmul %758, %657, %cst_180 {dimension_numbers = #tpu.dot_dimension_numbers<[1], [0], [0], [1], [0, 0, 1, 1], [], []>} : vector<2x16xf32>, vector<16x64xf32>, vector<2x64xf32> -> vector<2x64xf32>
    %780 = arith.addf %777, %779 : vector<2x64xf32>
    %cst_181 = arith.constant dense<0.000000e+00> : vector<2x64xf32>
    %781 = tpu.matmul %774, %658, %cst_181 {dimension_numbers = #tpu.dot_dimension_numbers<[1], [0], [0], [1], [0, 0, 1, 1], [], []>} : vector<2x16xf32>, vector<16x64xf32>, vector<2x64xf32> -> vector<2x64xf32>
    %782 = arith.addf %778, %781 : vector<2x64xf32>
    %783 = vector.extract_strided_slice %780 {offsets = [0, 0], sizes = [2, 48], strides = [1, 1]} : vector<2x64xf32> to vector<2x48xf32>
    %784 = arith.negf %783 : vector<2x48xf32>
    %785 = math.exp %784 : vector<2x48xf32>
    %cst_182 = arith.constant 1.000000e+00 : f32
    %786 = vector.broadcast %cst_182 : f32 to vector<2x48xf32>
    %787 = arith.addf %786, %785 : vector<2x48xf32>
    %788 = arith.divf %786, %787 : vector<2x48xf32>
    %789 = vector.extract_strided_slice %780 {offsets = [0, 48], sizes = [2, 16], strides = [1, 1]} : vector<2x64xf32> to vector<2x16xf32>
    %790 = math.tanh %789 : vector<2x16xf32>
    %791 = vector.extract_strided_slice %788 {offsets = [0, 16], sizes = [2, 16], strides = [1, 1]} : vector<2x48xf32> to vector<2x16xf32>
    %792 = arith.mulf %791, %755 : vector<2x16xf32>
    %793 = vector.extract_strided_slice %788 {offsets = [0, 0], sizes = [2, 16], strides = [1, 1]} : vector<2x48xf32> to vector<2x16xf32>
    %794 = arith.mulf %793, %790 : vector<2x16xf32>
    %795 = arith.addf %792, %794 : vector<2x16xf32>
    %796 = vector.extract_strided_slice %788 {offsets = [0, 32], sizes = [2, 16], strides = [1, 1]} : vector<2x48xf32> to vector<2x16xf32>
    %797 = math.tanh %795 : vector<2x16xf32>
    %798 = arith.mulf %796, %797 : vector<2x16xf32>
    %799 = vector.extract_strided_slice %782 {offsets = [0, 0], sizes = [2, 48], strides = [1, 1]} : vector<2x64xf32> to vector<2x48xf32>
    %800 = arith.negf %799 : vector<2x48xf32>
    %801 = math.exp %800 : vector<2x48xf32>
    %cst_183 = arith.constant 1.000000e+00 : f32
    %802 = vector.broadcast %cst_183 : f32 to vector<2x48xf32>
    %803 = arith.addf %802, %801 : vector<2x48xf32>
    %804 = arith.divf %802, %803 : vector<2x48xf32>
    %805 = vector.extract_strided_slice %782 {offsets = [0, 48], sizes = [2, 16], strides = [1, 1]} : vector<2x64xf32> to vector<2x16xf32>
    %806 = math.tanh %805 : vector<2x16xf32>
    %807 = vector.extract_strided_slice %804 {offsets = [0, 16], sizes = [2, 16], strides = [1, 1]} : vector<2x48xf32> to vector<2x16xf32>
    %808 = arith.mulf %807, %771 : vector<2x16xf32>
    %809 = vector.extract_strided_slice %804 {offsets = [0, 0], sizes = [2, 16], strides = [1, 1]} : vector<2x48xf32> to vector<2x16xf32>
    %810 = arith.mulf %809, %806 : vector<2x16xf32>
    %811 = arith.addf %808, %810 : vector<2x16xf32>
    %812 = vector.extract_strided_slice %804 {offsets = [0, 32], sizes = [2, 16], strides = [1, 1]} : vector<2x48xf32> to vector<2x16xf32>
    %813 = math.tanh %811 : vector<2x16xf32>
    %814 = arith.mulf %812, %813 : vector<2x16xf32>
    %c6_184 = arith.constant 6 : index
    %c0_185 = arith.constant 0 : index
    %815 = vector.load %arg35[%c6_184, %c0_185] : memref<56x16xf32, #tpu.memory_space<vmem>>, vector<2x16xf32>
    tpu.vector_store %arg35[%c6_184, %c0_185], %798 {strides = array<i32>} : memref<56x16xf32, #tpu.memory_space<vmem>>, vector<2x16xf32>,
    %c0_186 = arith.constant 0 : index
    %c0_187 = arith.constant 0 : index
    %816 = vector.load %arg36[%c0_186, %c0_187] : memref<56x16xf32, #tpu.memory_space<vmem>>, vector<2x16xf32>
    tpu.vector_store %arg36[%c0_186, %c0_187], %814 {strides = array<i32>} : memref<56x16xf32, #tpu.memory_space<vmem>>, vector<2x16xf32>,
    %c0_188 = arith.constant 0 : index
    %c0_189 = arith.constant 0 : index
    %817 = vector.load %arg35[%c0_188, %c0_189] : memref<56x16xf32, #tpu.memory_space<vmem>>, vector<8x16xf32>
    %c0_190 = arith.constant 0 : index
    %c0_191 = arith.constant 0 : index
    %818 = vector.load %arg36[%c0_190, %c0_191] : memref<56x16xf32, #tpu.memory_space<vmem>>, vector<8x16xf32>
    %c0_192 = arith.constant 0 : index
    %c0_193 = arith.constant 0 : index
    %819 = vector.load %arg25[%c0_192, %c0_193] : memref<32x64xf32, #tpu.memory_space<vmem>>, vector<32x64xf32>
    %c0_194 = arith.constant 0 : index
    %c0_195 = arith.constant 0 : index
    %820 = vector.load %arg26[%c0_194, %c0_195] : memref<32x64xf32, #tpu.memory_space<vmem>>, vector<32x64xf32>
    %821 = vector.extract_strided_slice %819 {offsets = [0, 0], sizes = [16, 64], strides = [1, 1]} : vector<32x64xf32> to vector<16x64xf32>
    %cst_196 = arith.constant dense<0.000000e+00> : vector<8x64xf32>
    %822 = tpu.matmul %817, %821, %cst_196 {dimension_numbers = #tpu.dot_dimension_numbers<[1], [0], [0], [1], [0, 0, 1, 1], [], []>} : vector<8x16xf32>, vector<16x64xf32>, vector<8x64xf32> -> vector<8x64xf32>
    %823 = vector.extract_strided_slice %819 {offsets = [16, 0], sizes = [16, 64], strides = [1, 1]} : vector<32x64xf32> to vector<16x64xf32>
    %cst_197 = arith.constant dense<0.000000e+00> : vector<8x64xf32>
    %824 = tpu.matmul %818, %823, %cst_197 {dimension_numbers = #tpu.dot_dimension_numbers<[1], [0], [0], [1], [0, 0, 1, 1], [], []>} : vector<8x16xf32>, vector<16x64xf32>, vector<8x64xf32> -> vector<8x64xf32>
    %825 = arith.addf %822, %824 : vector<8x64xf32>
    %c0_198 = arith.constant 0 : index
    %c0_199 = arith.constant 0 : index
    %826 = vector.load %arg29[%c0_198, %c0_199] : memref<1x64xf32, #tpu.memory_space<vmem>>, vector<1x64xf32>
    %827 = vector.broadcast %826 : vector<1x64xf32> to vector<8x64xf32>
    %828 = arith.addf %825, %827 : vector<8x64xf32>
    %829 = vector.extract_strided_slice %820 {offsets = [0, 0], sizes = [16, 64], strides = [1, 1]} : vector<32x64xf32> to vector<16x64xf32>
    %cst_200 = arith.constant dense<0.000000e+00> : vector<8x64xf32>
    %830 = tpu.matmul %817, %829, %cst_200 {dimension_numbers = #tpu.dot_dimension_numbers<[1], [0], [0], [1], [0, 0, 1, 1], [], []>} : vector<8x16xf32>, vector<16x64xf32>, vector<8x64xf32> -> vector<8x64xf32>
    %831 = vector.extract_strided_slice %820 {offsets = [16, 0], sizes = [16, 64], strides = [1, 1]} : vector<32x64xf32> to vector<16x64xf32>
    %cst_201 = arith.constant dense<0.000000e+00> : vector<8x64xf32>
    %832 = tpu.matmul %818, %831, %cst_201 {dimension_numbers = #tpu.dot_dimension_numbers<[1], [0], [0], [1], [0, 0, 1, 1], [], []>} : vector<8x16xf32>, vector<16x64xf32>, vector<8x64xf32> -> vector<8x64xf32>
    %833 = arith.addf %830, %832 : vector<8x64xf32>
    %c0_202 = arith.constant 0 : index
    %c0_203 = arith.constant 0 : index
    %834 = vector.load %arg30[%c0_202, %c0_203] : memref<1x64xf32, #tpu.memory_space<vmem>>, vector<1x64xf32>
    %835 = vector.broadcast %834 : vector<1x64xf32> to vector<8x64xf32>
    %836 = arith.addf %833, %835 : vector<8x64xf32>
    %c0_204 = arith.constant 0 : index
    %c0_205 = arith.constant 0 : index
    %837 = vector.load %arg31[%c0_204, %c0_205] : memref<1x16xf32, #tpu.memory_space<vmem>>, vector<1x16xf32>
    %c0_206 = arith.constant 0 : index
    %c0_207 = arith.constant 0 : index
    %838 = vector.load %arg32[%c0_206, %c0_207] : memref<1x16xf32, #tpu.memory_space<vmem>>, vector<1x16xf32>
    %c0_208 = arith.constant 0 : index
    %c0_209 = arith.constant 0 : index
    %839 = vector.load %arg27[%c0_208, %c0_209] : memref<16x64xf32, #tpu.memory_space<vmem>>, vector<16x64xf32>
    %c0_210 = arith.constant 0 : index
    %c0_211 = arith.constant 0 : index
    %840 = vector.load %arg28[%c0_210, %c0_211] : memref<16x64xf32, #tpu.memory_space<vmem>>, vector<16x64xf32>
    %cst_212 = arith.constant 0.000000e+00 : f32
    %841 = vector.broadcast %cst_212 : f32 to vector<2x16xf32>
    %cst_213 = arith.constant 0.000000e+00 : f32
    %842 = vector.broadcast %cst_213 : f32 to vector<2x16xf32>
    %843 = vector.extract_strided_slice %828 {offsets = [0, 0], sizes = [2, 64], strides = [1, 1]} : vector<8x64xf32> to vector<2x64xf32>
    %844 = vector.extract_strided_slice %836 {offsets = [6, 0], sizes = [2, 64], strides = [1, 1]} : vector<8x64xf32> to vector<2x64xf32>
    %845 = vector.extract_strided_slice %843 {offsets = [0, 0], sizes = [2, 48], strides = [1, 1]} : vector<2x64xf32> to vector<2x48xf32>
    %846 = arith.negf %845 : vector<2x48xf32>
    %847 = math.exp %846 : vector<2x48xf32>
    %cst_214 = arith.constant 1.000000e+00 : f32
    %848 = vector.broadcast %cst_214 : f32 to vector<2x48xf32>
    %849 = arith.addf %848, %847 : vector<2x48xf32>
    %850 = arith.divf %848, %849 : vector<2x48xf32>
    %851 = vector.extract_strided_slice %843 {offsets = [0, 48], sizes = [2, 16], strides = [1, 1]} : vector<2x64xf32> to vector<2x16xf32>
    %852 = math.tanh %851 : vector<2x16xf32>
    %853 = vector.extract_strided_slice %850 {offsets = [0, 16], sizes = [2, 16], strides = [1, 1]} : vector<2x48xf32> to vector<2x16xf32>
    %854 = arith.mulf %853, %841 : vector<2x16xf32>
    %855 = vector.extract_strided_slice %850 {offsets = [0, 0], sizes = [2, 16], strides = [1, 1]} : vector<2x48xf32> to vector<2x16xf32>
    %856 = arith.mulf %855, %852 : vector<2x16xf32>
    %857 = arith.addf %854, %856 : vector<2x16xf32>
    %858 = vector.extract_strided_slice %850 {offsets = [0, 32], sizes = [2, 16], strides = [1, 1]} : vector<2x48xf32> to vector<2x16xf32>
    %859 = math.tanh %857 : vector<2x16xf32>
    %860 = arith.mulf %858, %859 : vector<2x16xf32>
    %861 = vector.extract_strided_slice %844 {offsets = [0, 0], sizes = [2, 48], strides = [1, 1]} : vector<2x64xf32> to vector<2x48xf32>
    %862 = arith.negf %861 : vector<2x48xf32>
    %863 = math.exp %862 : vector<2x48xf32>
    %cst_215 = arith.constant 1.000000e+00 : f32
    %864 = vector.broadcast %cst_215 : f32 to vector<2x48xf32>
    %865 = arith.addf %864, %863 : vector<2x48xf32>
    %866 = arith.divf %864, %865 : vector<2x48xf32>
    %867 = vector.extract_strided_slice %844 {offsets = [0, 48], sizes = [2, 16], strides = [1, 1]} : vector<2x64xf32> to vector<2x16xf32>
    %868 = math.tanh %867 : vector<2x16xf32>
    %869 = vector.extract_strided_slice %866 {offsets = [0, 16], sizes = [2, 16], strides = [1, 1]} : vector<2x48xf32> to vector<2x16xf32>
    %870 = arith.mulf %869, %842 : vector<2x16xf32>
    %871 = vector.extract_strided_slice %866 {offsets = [0, 0], sizes = [2, 16], strides = [1, 1]} : vector<2x48xf32> to vector<2x16xf32>
    %872 = arith.mulf %871, %868 : vector<2x16xf32>
    %873 = arith.addf %870, %872 : vector<2x16xf32>
    %874 = vector.extract_strided_slice %866 {offsets = [0, 32], sizes = [2, 16], strides = [1, 1]} : vector<2x48xf32> to vector<2x16xf32>
    %875 = math.tanh %873 : vector<2x16xf32>
    %876 = arith.mulf %874, %875 : vector<2x16xf32>
    %877 = vector.broadcast %837 : vector<1x16xf32> to vector<2x16xf32>
    %878 = arith.mulf %860, %877 : vector<2x16xf32>
    %cst_216 = arith.constant dense<0.000000e+00> : vector<2xf32>
    %879 = vector.multi_reduction <add>, %878, %cst_216 [1] : vector<2x16xf32> to vector<2xf32>
    %880 = vector.shape_cast %879 : vector<2xf32> to vector<2x1xf32>
    %881 = vector.broadcast %838 : vector<1x16xf32> to vector<2x16xf32>
    %882 = arith.mulf %876, %881 : vector<2x16xf32>
    %cst_217 = arith.constant dense<0.000000e+00> : vector<2xf32>
    %883 = vector.multi_reduction <add>, %882, %cst_217 [1] : vector<2x16xf32> to vector<2xf32>
    %884 = vector.shape_cast %883 : vector<2xf32> to vector<2x1xf32>
    %885 = vector.extract_strided_slice %828 {offsets = [2, 0], sizes = [2, 64], strides = [1, 1]} : vector<8x64xf32> to vector<2x64xf32>
    %886 = vector.extract_strided_slice %836 {offsets = [4, 0], sizes = [2, 64], strides = [1, 1]} : vector<8x64xf32> to vector<2x64xf32>
    %cst_218 = arith.constant dense<0.000000e+00> : vector<2x64xf32>
    %887 = tpu.matmul %860, %839, %cst_218 {dimension_numbers = #tpu.dot_dimension_numbers<[1], [0], [0], [1], [0, 0, 1, 1], [], []>} : vector<2x16xf32>, vector<16x64xf32>, vector<2x64xf32> -> vector<2x64xf32>
    %888 = arith.addf %885, %887 : vector<2x64xf32>
    %cst_219 = arith.constant dense<0.000000e+00> : vector<2x64xf32>
    %889 = tpu.matmul %876, %840, %cst_219 {dimension_numbers = #tpu.dot_dimension_numbers<[1], [0], [0], [1], [0, 0, 1, 1], [], []>} : vector<2x16xf32>, vector<16x64xf32>, vector<2x64xf32> -> vector<2x64xf32>
    %890 = arith.addf %886, %889 : vector<2x64xf32>
    %891 = vector.extract_strided_slice %888 {offsets = [0, 0], sizes = [2, 48], strides = [1, 1]} : vector<2x64xf32> to vector<2x48xf32>
    %892 = arith.negf %891 : vector<2x48xf32>
    %893 = math.exp %892 : vector<2x48xf32>
    %cst_220 = arith.constant 1.000000e+00 : f32
    %894 = vector.broadcast %cst_220 : f32 to vector<2x48xf32>
    %895 = arith.addf %894, %893 : vector<2x48xf32>
    %896 = arith.divf %894, %895 : vector<2x48xf32>
    %897 = vector.extract_strided_slice %888 {offsets = [0, 48], sizes = [2, 16], strides = [1, 1]} : vector<2x64xf32> to vector<2x16xf32>
    %898 = math.tanh %897 : vector<2x16xf32>
    %899 = vector.extract_strided_slice %896 {offsets = [0, 16], sizes = [2, 16], strides = [1, 1]} : vector<2x48xf32> to vector<2x16xf32>
    %900 = arith.mulf %899, %857 : vector<2x16xf32>
    %901 = vector.extract_strided_slice %896 {offsets = [0, 0], sizes = [2, 16], strides = [1, 1]} : vector<2x48xf32> to vector<2x16xf32>
    %902 = arith.mulf %901, %898 : vector<2x16xf32>
    %903 = arith.addf %900, %902 : vector<2x16xf32>
    %904 = vector.extract_strided_slice %896 {offsets = [0, 32], sizes = [2, 16], strides = [1, 1]} : vector<2x48xf32> to vector<2x16xf32>
    %905 = math.tanh %903 : vector<2x16xf32>
    %906 = arith.mulf %904, %905 : vector<2x16xf32>
    %907 = vector.extract_strided_slice %890 {offsets = [0, 0], sizes = [2, 48], strides = [1, 1]} : vector<2x64xf32> to vector<2x48xf32>
    %908 = arith.negf %907 : vector<2x48xf32>
    %909 = math.exp %908 : vector<2x48xf32>
    %cst_221 = arith.constant 1.000000e+00 : f32
    %910 = vector.broadcast %cst_221 : f32 to vector<2x48xf32>
    %911 = arith.addf %910, %909 : vector<2x48xf32>
    %912 = arith.divf %910, %911 : vector<2x48xf32>
    %913 = vector.extract_strided_slice %890 {offsets = [0, 48], sizes = [2, 16], strides = [1, 1]} : vector<2x64xf32> to vector<2x16xf32>
    %914 = math.tanh %913 : vector<2x16xf32>
    %915 = vector.extract_strided_slice %912 {offsets = [0, 16], sizes = [2, 16], strides = [1, 1]} : vector<2x48xf32> to vector<2x16xf32>
    %916 = arith.mulf %915, %873 : vector<2x16xf32>
    %917 = vector.extract_strided_slice %912 {offsets = [0, 0], sizes = [2, 16], strides = [1, 1]} : vector<2x48xf32> to vector<2x16xf32>
    %918 = arith.mulf %917, %914 : vector<2x16xf32>
    %919 = arith.addf %916, %918 : vector<2x16xf32>
    %920 = vector.extract_strided_slice %912 {offsets = [0, 32], sizes = [2, 16], strides = [1, 1]} : vector<2x48xf32> to vector<2x16xf32>
    %921 = math.tanh %919 : vector<2x16xf32>
    %922 = arith.mulf %920, %921 : vector<2x16xf32>
    %923 = vector.broadcast %837 : vector<1x16xf32> to vector<2x16xf32>
    %924 = arith.mulf %906, %923 : vector<2x16xf32>
    %cst_222 = arith.constant dense<0.000000e+00> : vector<2xf32>
    %925 = vector.multi_reduction <add>, %924, %cst_222 [1] : vector<2x16xf32> to vector<2xf32>
    %926 = vector.shape_cast %925 : vector<2xf32> to vector<2x1xf32>
    %927 = vector.broadcast %838 : vector<1x16xf32> to vector<2x16xf32>
    %928 = arith.mulf %922, %927 : vector<2x16xf32>
    %cst_223 = arith.constant dense<0.000000e+00> : vector<2xf32>
    %929 = vector.multi_reduction <add>, %928, %cst_223 [1] : vector<2x16xf32> to vector<2xf32>
    %930 = vector.shape_cast %929 : vector<2xf32> to vector<2x1xf32>
    %931 = vector.extract_strided_slice %828 {offsets = [4, 0], sizes = [2, 64], strides = [1, 1]} : vector<8x64xf32> to vector<2x64xf32>
    %932 = vector.extract_strided_slice %836 {offsets = [2, 0], sizes = [2, 64], strides = [1, 1]} : vector<8x64xf32> to vector<2x64xf32>
    %cst_224 = arith.constant dense<0.000000e+00> : vector<2x64xf32>
    %933 = tpu.matmul %906, %839, %cst_224 {dimension_numbers = #tpu.dot_dimension_numbers<[1], [0], [0], [1], [0, 0, 1, 1], [], []>} : vector<2x16xf32>, vector<16x64xf32>, vector<2x64xf32> -> vector<2x64xf32>
    %934 = arith.addf %931, %933 : vector<2x64xf32>
    %cst_225 = arith.constant dense<0.000000e+00> : vector<2x64xf32>
    %935 = tpu.matmul %922, %840, %cst_225 {dimension_numbers = #tpu.dot_dimension_numbers<[1], [0], [0], [1], [0, 0, 1, 1], [], []>} : vector<2x16xf32>, vector<16x64xf32>, vector<2x64xf32> -> vector<2x64xf32>
    %936 = arith.addf %932, %935 : vector<2x64xf32>
    %937 = vector.extract_strided_slice %934 {offsets = [0, 0], sizes = [2, 48], strides = [1, 1]} : vector<2x64xf32> to vector<2x48xf32>
    %938 = arith.negf %937 : vector<2x48xf32>
    %939 = math.exp %938 : vector<2x48xf32>
    %cst_226 = arith.constant 1.000000e+00 : f32
    %940 = vector.broadcast %cst_226 : f32 to vector<2x48xf32>
    %941 = arith.addf %940, %939 : vector<2x48xf32>
    %942 = arith.divf %940, %941 : vector<2x48xf32>
    %943 = vector.extract_strided_slice %934 {offsets = [0, 48], sizes = [2, 16], strides = [1, 1]} : vector<2x64xf32> to vector<2x16xf32>
    %944 = math.tanh %943 : vector<2x16xf32>
    %945 = vector.extract_strided_slice %942 {offsets = [0, 16], sizes = [2, 16], strides = [1, 1]} : vector<2x48xf32> to vector<2x16xf32>
    %946 = arith.mulf %945, %903 : vector<2x16xf32>
    %947 = vector.extract_strided_slice %942 {offsets = [0, 0], sizes = [2, 16], strides = [1, 1]} : vector<2x48xf32> to vector<2x16xf32>
    %948 = arith.mulf %947, %944 : vector<2x16xf32>
    %949 = arith.addf %946, %948 : vector<2x16xf32>
    %950 = vector.extract_strided_slice %942 {offsets = [0, 32], sizes = [2, 16], strides = [1, 1]} : vector<2x48xf32> to vector<2x16xf32>
    %951 = math.tanh %949 : vector<2x16xf32>
    %952 = arith.mulf %950, %951 : vector<2x16xf32>
    %953 = vector.extract_strided_slice %936 {offsets = [0, 0], sizes = [2, 48], strides = [1, 1]} : vector<2x64xf32> to vector<2x48xf32>
    %954 = arith.negf %953 : vector<2x48xf32>
    %955 = math.exp %954 : vector<2x48xf32>
    %cst_227 = arith.constant 1.000000e+00 : f32
    %956 = vector.broadcast %cst_227 : f32 to vector<2x48xf32>
    %957 = arith.addf %956, %955 : vector<2x48xf32>
    %958 = arith.divf %956, %957 : vector<2x48xf32>
    %959 = vector.extract_strided_slice %936 {offsets = [0, 48], sizes = [2, 16], strides = [1, 1]} : vector<2x64xf32> to vector<2x16xf32>
    %960 = math.tanh %959 : vector<2x16xf32>
    %961 = vector.extract_strided_slice %958 {offsets = [0, 16], sizes = [2, 16], strides = [1, 1]} : vector<2x48xf32> to vector<2x16xf32>
    %962 = arith.mulf %961, %919 : vector<2x16xf32>
    %963 = vector.extract_strided_slice %958 {offsets = [0, 0], sizes = [2, 16], strides = [1, 1]} : vector<2x48xf32> to vector<2x16xf32>
    %964 = arith.mulf %963, %960 : vector<2x16xf32>
    %965 = arith.addf %962, %964 : vector<2x16xf32>
    %966 = vector.extract_strided_slice %958 {offsets = [0, 32], sizes = [2, 16], strides = [1, 1]} : vector<2x48xf32> to vector<2x16xf32>
    %967 = math.tanh %965 : vector<2x16xf32>
    %968 = arith.mulf %966, %967 : vector<2x16xf32>
    %969 = vector.broadcast %837 : vector<1x16xf32> to vector<2x16xf32>
    %970 = arith.mulf %952, %969 : vector<2x16xf32>
    %cst_228 = arith.constant dense<0.000000e+00> : vector<2xf32>
    %971 = vector.multi_reduction <add>, %970, %cst_228 [1] : vector<2x16xf32> to vector<2xf32>
    %972 = vector.shape_cast %971 : vector<2xf32> to vector<2x1xf32>
    %973 = vector.broadcast %838 : vector<1x16xf32> to vector<2x16xf32>
    %974 = arith.mulf %968, %973 : vector<2x16xf32>
    %cst_229 = arith.constant dense<0.000000e+00> : vector<2xf32>
    %975 = vector.multi_reduction <add>, %974, %cst_229 [1] : vector<2x16xf32> to vector<2xf32>
    %976 = vector.shape_cast %975 : vector<2xf32> to vector<2x1xf32>
    %977 = vector.extract_strided_slice %828 {offsets = [6, 0], sizes = [2, 64], strides = [1, 1]} : vector<8x64xf32> to vector<2x64xf32>
    %978 = vector.extract_strided_slice %836 {offsets = [0, 0], sizes = [2, 64], strides = [1, 1]} : vector<8x64xf32> to vector<2x64xf32>
    %cst_230 = arith.constant dense<0.000000e+00> : vector<2x64xf32>
    %979 = tpu.matmul %952, %839, %cst_230 {dimension_numbers = #tpu.dot_dimension_numbers<[1], [0], [0], [1], [0, 0, 1, 1], [], []>} : vector<2x16xf32>, vector<16x64xf32>, vector<2x64xf32> -> vector<2x64xf32>
    %980 = arith.addf %977, %979 : vector<2x64xf32>
    %cst_231 = arith.constant dense<0.000000e+00> : vector<2x64xf32>
    %981 = tpu.matmul %968, %840, %cst_231 {dimension_numbers = #tpu.dot_dimension_numbers<[1], [0], [0], [1], [0, 0, 1, 1], [], []>} : vector<2x16xf32>, vector<16x64xf32>, vector<2x64xf32> -> vector<2x64xf32>
    %982 = arith.addf %978, %981 : vector<2x64xf32>
    %983 = vector.extract_strided_slice %980 {offsets = [0, 0], sizes = [2, 48], strides = [1, 1]} : vector<2x64xf32> to vector<2x48xf32>
    %984 = arith.negf %983 : vector<2x48xf32>
    %985 = math.exp %984 : vector<2x48xf32>
    %cst_232 = arith.constant 1.000000e+00 : f32
    %986 = vector.broadcast %cst_232 : f32 to vector<2x48xf32>
    %987 = arith.addf %986, %985 : vector<2x48xf32>
    %988 = arith.divf %986, %987 : vector<2x48xf32>
    %989 = vector.extract_strided_slice %980 {offsets = [0, 48], sizes = [2, 16], strides = [1, 1]} : vector<2x64xf32> to vector<2x16xf32>
    %990 = math.tanh %989 : vector<2x16xf32>
    %991 = vector.extract_strided_slice %988 {offsets = [0, 16], sizes = [2, 16], strides = [1, 1]} : vector<2x48xf32> to vector<2x16xf32>
    %992 = arith.mulf %991, %949 : vector<2x16xf32>
    %993 = vector.extract_strided_slice %988 {offsets = [0, 0], sizes = [2, 16], strides = [1, 1]} : vector<2x48xf32> to vector<2x16xf32>
    %994 = arith.mulf %993, %990 : vector<2x16xf32>
    %995 = arith.addf %992, %994 : vector<2x16xf32>
    %996 = vector.extract_strided_slice %988 {offsets = [0, 32], sizes = [2, 16], strides = [1, 1]} : vector<2x48xf32> to vector<2x16xf32>
    %997 = math.tanh %995 : vector<2x16xf32>
    %998 = arith.mulf %996, %997 : vector<2x16xf32>
    %999 = vector.extract_strided_slice %982 {offsets = [0, 0], sizes = [2, 48], strides = [1, 1]} : vector<2x64xf32> to vector<2x48xf32>
    %1000 = arith.negf %999 : vector<2x48xf32>
    %1001 = math.exp %1000 : vector<2x48xf32>
    %cst_233 = arith.constant 1.000000e+00 : f32
    %1002 = vector.broadcast %cst_233 : f32 to vector<2x48xf32>
    %1003 = arith.addf %1002, %1001 : vector<2x48xf32>
    %1004 = arith.divf %1002, %1003 : vector<2x48xf32>
    %1005 = vector.extract_strided_slice %982 {offsets = [0, 48], sizes = [2, 16], strides = [1, 1]} : vector<2x64xf32> to vector<2x16xf32>
    %1006 = math.tanh %1005 : vector<2x16xf32>
    %1007 = vector.extract_strided_slice %1004 {offsets = [0, 16], sizes = [2, 16], strides = [1, 1]} : vector<2x48xf32> to vector<2x16xf32>
    %1008 = arith.mulf %1007, %965 : vector<2x16xf32>
    %1009 = vector.extract_strided_slice %1004 {offsets = [0, 0], sizes = [2, 16], strides = [1, 1]} : vector<2x48xf32> to vector<2x16xf32>
    %1010 = arith.mulf %1009, %1006 : vector<2x16xf32>
    %1011 = arith.addf %1008, %1010 : vector<2x16xf32>
    %1012 = vector.extract_strided_slice %1004 {offsets = [0, 32], sizes = [2, 16], strides = [1, 1]} : vector<2x48xf32> to vector<2x16xf32>
    %1013 = math.tanh %1011 : vector<2x16xf32>
    %1014 = arith.mulf %1012, %1013 : vector<2x16xf32>
    %1015 = vector.broadcast %837 : vector<1x16xf32> to vector<2x16xf32>
    %1016 = arith.mulf %998, %1015 : vector<2x16xf32>
    %cst_234 = arith.constant dense<0.000000e+00> : vector<2xf32>
    %1017 = vector.multi_reduction <add>, %1016, %cst_234 [1] : vector<2x16xf32> to vector<2xf32>
    %1018 = vector.shape_cast %1017 : vector<2xf32> to vector<2x1xf32>
    %1019 = vector.broadcast %838 : vector<1x16xf32> to vector<2x16xf32>
    %1020 = arith.mulf %1014, %1019 : vector<2x16xf32>
    %cst_235 = arith.constant dense<0.000000e+00> : vector<2xf32>
    %1021 = vector.multi_reduction <add>, %1020, %cst_235 [1] : vector<2x16xf32> to vector<2xf32>
    %1022 = vector.shape_cast %1021 : vector<2xf32> to vector<2x1xf32>
    %1023 = arith.addf %880, %1022 : vector<2x1xf32>
    %1024 = arith.addf %926, %976 : vector<2x1xf32>
    %1025 = arith.addf %972, %930 : vector<2x1xf32>
    %1026 = arith.addf %1018, %884 : vector<2x1xf32>
    %1027 = tpu.concatenate %1023, %1024, %1025, %1026 in 1 : vector<2x1xf32>, vector<2x1xf32>, vector<2x1xf32>, vector<2x1xf32> -> vector<2x4xf32>
    %c0_236 = arith.constant 0 : index
    %c0_237 = arith.constant 0 : index
    %1028 = vector.load %arg33[%c0_236, %c0_237] : memref<1x1xf32, #tpu.memory_space<vmem>>, vector<1x1xf32>
    %1029 = vector.extract %1028[0, 0] : f32 from vector<1x1xf32>
    %1030 = vector.broadcast %1029 : f32 to vector<2x4xf32>
    %1031 = arith.addf %1027, %1030 : vector<2x4xf32>
    %cst_238 = arith.constant dense<0xFF800000> : vector<2xf32>
    %1032 = vector.multi_reduction <maximumf>, %1031, %cst_238 [1] : vector<2x4xf32> to vector<2xf32>
    %1033 = vector.shape_cast %1032 : vector<2xf32> to vector<2x1xf32>
    %1034 = vector.broadcast %1033 : vector<2x1xf32> to vector<2x4xf32>
    %1035 = arith.subf %1031, %1034 : vector<2x4xf32>
    %1036 = math.exp %1035 : vector<2x4xf32>
    %cst_239 = arith.constant dense<0.000000e+00> : vector<2xf32>
    %1037 = vector.multi_reduction <add>, %1036, %cst_239 [1] : vector<2x4xf32> to vector<2xf32>
    %1038 = vector.shape_cast %1037 : vector<2xf32> to vector<2x1xf32>
    %1039 = math.log %1038 : vector<2x1xf32>
    %1040 = vector.broadcast %1039 : vector<2x1xf32> to vector<2x4xf32>
    %1041 = arith.subf %1035, %1040 : vector<2x4xf32>
    %c0_240 = arith.constant 0 : index
    %c0_241 = arith.constant 0 : index
    %1042 = vector.load %arg34[%c0_240, %c0_241] : memref<2x4xf32, #tpu.memory_space<vmem>>, vector<2x4xf32>
    tpu.vector_store %arg34[%c0_240, %c0_241], %1041 {strides = array<i32>} : memref<2x4xf32, #tpu.memory_space<vmem>>, vector<2x4xf32>,
    return
  }
}

</mosaic_0001>

<llo_original>
// kernel: action_pred_based_eeg_forward.1
$region0: #{action_pred_based_eeg_forward.1}
  #allocation0 [shape = 'u32[]', space=smem, size = 0x4, offset = 0x4, fixed_abs, tag = 'smem constant byte address 0x4 - core index']
  #allocation1 [shape = 'u32[72,128]{1,0:T(1,128)}', space=vmem, size = 0x9000, scoped, tag = 'internal scratch']
  #allocation2 [shape = 'f32[56,16]{1,0:T(8,128)}', space=vmem, size = 0x7000, scoped, tag = 'scratch operand']
  #allocation3 [shape = 'f32[56,16]{1,0:T(8,128)}', space=vmem, size = 0x7000, scoped, tag = 'scratch operand']
  #allocation4 [shape = 'f32[1,1]{1,0:T(1,128)S(1)}', space=vmem, size = 0x200, scoped, tag = 'scoped memory for action_pred_based_eeg_forward.1']
  %s0 = inlined_call_operand.smem [shape: u32[35], index: -1, kind: input, shape index: {}]
  %s1 = sld [smem:[%s0]]
  %s2 = scalar_lea.smem %s0, 1
  %s3 = sld [smem:[%s2]]
  %s4 = scalar_lea.smem %s0, 2
  %s5 = sld [smem:[%s4]]
  %s6 = scalar_lea.smem %s0, 3
  %s7 = sld [smem:[%s6]]
  %s8 = scalar_lea.smem %s0, 4
  %s9 = sld [smem:[%s8]]
  %s10 = scalar_lea.smem %s0, 5
  %s11 = sld [smem:[%s10]]
  %s12 = scalar_lea.smem %s0, 6
  %s13 = sld [smem:[%s12]]
  %s14 = scalar_lea.smem %s0, 7
  %s15 = sld [smem:[%s14]]
  %s16 = scalar_lea.smem %s0, 8
  %s17 = sld [smem:[%s16]]
  %s18 = scalar_lea.smem %s0, 9
  %s19 = sld [smem:[%s18]]
  %s20 = scalar_lea.smem %s0, 10
  %s21 = sld [smem:[%s20]]
  %s22 = scalar_lea.smem %s0, 11
  %s23 = sld [smem:[%s22]]
  %s24 = scalar_lea.smem %s0, 12
  %s25 = sld [smem:[%s24]]
  %s26 = scalar_lea.smem %s0, 13
  %s27 = sld [smem:[%s26]]
  %s28 = scalar_lea.smem %s0, 14
  %s29 = sld [smem:[%s28]]
  %s30 = scalar_lea.smem %s0, 15
  %s31 = sld [smem:[%s30]]
  %s32 = scalar_lea.smem %s0, 16
  %s33 = sld [smem:[%s32]]
  %s34 = scalar_lea.smem %s0, 17
  %s35 = sld [smem:[%s34]]
  %s36 = scalar_lea.smem %s0, 18
  %s37 = sld [smem:[%s36]]
  %s38 = scalar_lea.smem %s0, 19
  %s39 = sld [smem:[%s38]]
  %s40 = scalar_lea.smem %s0, 20
  %s41 = sld [smem:[%s40]]
  %s42 = scalar_lea.smem %s0, 21
  %s43 = sld [smem:[%s42]]
  %s44 = scalar_lea.smem %s0, 22
  %s45 = sld [smem:[%s44]]
  %s46 = scalar_lea.smem %s0, 23
  %s47 = sld [smem:[%s46]]
  %s48 = scalar_lea.smem %s0, 24
  %s49 = sld [smem:[%s48]]
  %s50 = scalar_lea.smem %s0, 25
  %s51 = sld [smem:[%s50]]
  %s52 = scalar_lea.smem %s0, 26
  %s53 = sld [smem:[%s52]]
  %s54 = scalar_lea.smem %s0, 27
  %s55 = sld [smem:[%s54]]
  %s56 = scalar_lea.smem %s0, 28
  %s57 = sld [smem:[%s56]]
  %s58 = scalar_lea.smem %s0, 29
  %s59 = sld [smem:[%s58]]
  %s60 = scalar_lea.smem %s0, 30
  %s61 = sld [smem:[%s60]]
  %s62 = scalar_lea.smem %s0, 31
  %s63 = sld [smem:[%s62]]
  %s64 = scalar_lea.smem %s0, 32
  %s65 = sld [smem:[%s64]]
  %s66 = scalar_lea.smem %s0, 33
  %s67 = sld [smem:[%s66]]
  %s68 = scalar_lea.smem %s0, 34
  %s69 = sld [smem:[%s68]]
  %s70 = sld [smem:[#allocation0]]
  $region146: #{action_pred_based_eeg_forward.1} parent=0
    _
  %s72 = ssub.s32 1, %s70
  %s73 = scalar_select 0, %s72, %s70
  %v74 = vstv %s67
  %75 = vst [vmem:[#allocation4] sm:$0x1] %v74
  $region1: #{action_pred_based_eeg_forward.1} parent=0
    #allocation5 [shape = 'u8[1024]{0}', space=vmem, size = 0x400, scoped, tag = 'output window, operand 0, single buffered']
    #allocation6 [shape = 's32[1]{0}', space=sflag, size = 0x4, scoped, tag = 'scoped memory for action_pred_based_eeg_forward.1']
    %76 = vsyncpa [#allocation6], 0
    // Predicated region
    $region2: #{action_pred_based_eeg_forward.1} parent=1 // pred_check
      _
    $region3: #{action_pred_based_eeg_forward.1} parent=1 // pred_check_branch
      %78 = sbr.rel (0) target = $region5
    $region4: #{action_pred_based_eeg_forward.1} parent=1 // pred_region
      _
    $region5: #{action_pred_based_eeg_forward.1} parent=1 // pred_fallthru
      _
    // Predicated region
    $region6: #{action_pred_based_eeg_forward.1} parent=1 // pred_check
      _
    $region7: #{action_pred_based_eeg_forward.1} parent=1 // pred_check_branch
      %80 = sbr.rel (0) target = $region9
    $region8: #{action_pred_based_eeg_forward.1} parent=1 // pred_region
      _
    $region9: #{action_pred_based_eeg_forward.1} parent=1 // pred_fallthru
      _
    // Predicated region
    $region10: #{action_pred_based_eeg_forward.1} parent=1 // pred_check
      _
    $region11: #{action_pred_based_eeg_forward.1} parent=1 // pred_check_branch
      %82 = sbr.rel (0) target = $region13
    $region12: #{action_pred_based_eeg_forward.1} parent=1 // pred_region
      _
    $region13: #{action_pred_based_eeg_forward.1} parent=1 // pred_fallthru
      _
    // Predicated region
    $region14: #{action_pred_based_eeg_forward.1} parent=1 // pred_check
      _
    $region15: #{action_pred_based_eeg_forward.1} parent=1 // pred_check_branch
      %84 = sbr.rel (0) target = $region17
    $region16: #{action_pred_based_eeg_forward.1} parent=1 // pred_region
      _
    $region17: #{action_pred_based_eeg_forward.1} parent=1 // pred_fallthru
      _
    // Predicated region
    $region18: #{action_pred_based_eeg_forward.1} parent=1 // pred_check
      _
    $region19: #{action_pred_based_eeg_forward.1} parent=1 // pred_check_branch
      %86 = sbr.rel (0) target = $region21
    $region20: #{action_pred_based_eeg_forward.1} parent=1 // pred_region
      _
    $region21: #{action_pred_based_eeg_forward.1} parent=1 // pred_fallthru
      _
    // Predicated region
    $region22: #{action_pred_based_eeg_forward.1} parent=1 // pred_check
      _
    $region23: #{action_pred_based_eeg_forward.1} parent=1 // pred_check_branch
      %88 = sbr.rel (0) target = $region25
    $region24: #{action_pred_based_eeg_forward.1} parent=1 // pred_region
      _
    $region25: #{action_pred_based_eeg_forward.1} parent=1 // pred_fallthru
      _
    // Predicated region
    $region26: #{action_pred_based_eeg_forward.1} parent=1 // pred_check
      _
    $region27: #{action_pred_based_eeg_forward.1} parent=1 // pred_check_branch
      %90 = sbr.rel (0) target = $region29
    $region28: #{action_pred_based_eeg_forward.1} parent=1 // pred_region
      _
    $region29: #{action_pred_based_eeg_forward.1} parent=1 // pred_fallthru
      _
    // Predicated region
    $region30: #{action_pred_based_eeg_forward.1} parent=1 // pred_check
      _
    $region31: #{action_pred_based_eeg_forward.1} parent=1 // pred_check_branch
      %92 = sbr.rel (0) target = $region33
    $region32: #{action_pred_based_eeg_forward.1} parent=1 // pred_region
      _
    $region33: #{action_pred_based_eeg_forward.1} parent=1 // pred_fallthru
      _
    // Predicated region
    $region34: #{action_pred_based_eeg_forward.1} parent=1 // pred_check
      _
    $region35: #{action_pred_based_eeg_forward.1} parent=1 // pred_check_branch
      %94 = sbr.rel (0) target = $region37
    $region36: #{action_pred_based_eeg_forward.1} parent=1 // pred_region
      _
    $region37: #{action_pred_based_eeg_forward.1} parent=1 // pred_fallthru
      _
    // Predicated region
    $region38: #{action_pred_based_eeg_forward.1} parent=1 // pred_check
      _
    $region39: #{action_pred_based_eeg_forward.1} parent=1 // pred_check_branch
      %96 = sbr.rel (0) target = $region41
    $region40: #{action_pred_based_eeg_forward.1} parent=1 // pred_region
      _
    $region41: #{action_pred_based_eeg_forward.1} parent=1 // pred_fallthru
      _
    // Predicated region
    $region42: #{action_pred_based_eeg_forward.1} parent=1 // pred_check
      _
    $region43: #{action_pred_based_eeg_forward.1} parent=1 // pred_check_branch
      %98 = sbr.rel (0) target = $region45
    $region44: #{action_pred_based_eeg_forward.1} parent=1 // pred_region
      _
    $region45: #{action_pred_based_eeg_forward.1} parent=1 // pred_fallthru
      _
    // Predicated region
    $region46: #{action_pred_based_eeg_forward.1} parent=1 // pred_check
      _
    $region47: #{action_pred_based_eeg_forward.1} parent=1 // pred_check_branch
      %100 = sbr.rel (0) target = $region49
    $region48: #{action_pred_based_eeg_forward.1} parent=1 // pred_region
      _
    $region49: #{action_pred_based_eeg_forward.1} parent=1 // pred_fallthru
      _
    // Predicated region
    $region50: #{action_pred_based_eeg_forward.1} parent=1 // pred_check
      _
    $region51: #{action_pred_based_eeg_forward.1} parent=1 // pred_check_branch
      %102 = sbr.rel (0) target = $region53
    $region52: #{action_pred_based_eeg_forward.1} parent=1 // pred_region
      _
    $region53: #{action_pred_based_eeg_forward.1} parent=1 // pred_fallthru
      _
    // Predicated region
    $region54: #{action_pred_based_eeg_forward.1} parent=1 // pred_check
      _
    $region55: #{action_pred_based_eeg_forward.1} parent=1 // pred_check_branch
      %104 = sbr.rel (0) target = $region57
    $region56: #{action_pred_based_eeg_forward.1} parent=1 // pred_region
      _
    $region57: #{action_pred_based_eeg_forward.1} parent=1 // pred_fallthru
      _
    // Predicated region
    $region58: #{action_pred_based_eeg_forward.1} parent=1 // pred_check
      _
    $region59: #{action_pred_based_eeg_forward.1} parent=1 // pred_check_branch
      %106 = sbr.rel (0) target = $region61
    $region60: #{action_pred_based_eeg_forward.1} parent=1 // pred_region
      _
    $region61: #{action_pred_based_eeg_forward.1} parent=1 // pred_fallthru
      _
    // Predicated region
    $region62: #{action_pred_based_eeg_forward.1} parent=1 // pred_check
      _
    $region63: #{action_pred_based_eeg_forward.1} parent=1 // pred_check_branch
      %108 = sbr.rel (0) target = $region65
    $region64: #{action_pred_based_eeg_forward.1} parent=1 // pred_region
      _
    $region65: #{action_pred_based_eeg_forward.1} parent=1 // pred_fallthru
      _
    // Predicated region
    $region66: #{action_pred_based_eeg_forward.1} parent=1 // pred_check
      _
    $region67: #{action_pred_based_eeg_forward.1} parent=1 // pred_check_branch
      %110 = sbr.rel (0) target = $region69
    $region68: #{action_pred_based_eeg_forward.1} parent=1 // pred_region
      _
    $region69: #{action_pred_based_eeg_forward.1} parent=1 // pred_fallthru
      _
    // Predicated region
    $region70: #{action_pred_based_eeg_forward.1} parent=1 // pred_check
      _
    $region71: #{action_pred_based_eeg_forward.1} parent=1 // pred_check_branch
      %112 = sbr.rel (0) target = $region73
    $region72: #{action_pred_based_eeg_forward.1} parent=1 // pred_region
      _
    $region73: #{action_pred_based_eeg_forward.1} parent=1 // pred_fallthru
      _
    // Predicated region
    $region74: #{action_pred_based_eeg_forward.1} parent=1 // pred_check
      _
    $region75: #{action_pred_based_eeg_forward.1} parent=1 // pred_check_branch
      %114 = sbr.rel (0) target = $region77
    $region76: #{action_pred_based_eeg_forward.1} parent=1 // pred_region
      _
    $region77: #{action_pred_based_eeg_forward.1} parent=1 // pred_fallthru
      _
    // Predicated region
    $region78: #{action_pred_based_eeg_forward.1} parent=1 // pred_check
      _
    $region79: #{action_pred_based_eeg_forward.1} parent=1 // pred_check_branch
      %116 = sbr.rel (0) target = $region81
    $region80: #{action_pred_based_eeg_forward.1} parent=1 // pred_region
      _
    $region81: #{action_pred_based_eeg_forward.1} parent=1 // pred_fallthru
      _
    // Predicated region
    $region82: #{action_pred_based_eeg_forward.1} parent=1 // pred_check
      _
    $region83: #{action_pred_based_eeg_forward.1} parent=1 // pred_check_branch
      %118 = sbr.rel (0) target = $region85
    $region84: #{action_pred_based_eeg_forward.1} parent=1 // pred_region
      _
    $region85: #{action_pred_based_eeg_forward.1} parent=1 // pred_fallthru
      _
    // Predicated region
    $region86: #{action_pred_based_eeg_forward.1} parent=1 // pred_check
      _
    $region87: #{action_pred_based_eeg_forward.1} parent=1 // pred_check_branch
      %120 = sbr.rel (0) target = $region89
    $region88: #{action_pred_based_eeg_forward.1} parent=1 // pred_region
      _
    $region89: #{action_pred_based_eeg_forward.1} parent=1 // pred_fallthru
      _
    // Predicated region
    $region90: #{action_pred_based_eeg_forward.1} parent=1 // pred_check
      _
    $region91: #{action_pred_based_eeg_forward.1} parent=1 // pred_check_branch
      %122 = sbr.rel (0) target = $region93
    $region92: #{action_pred_based_eeg_forward.1} parent=1 // pred_region
      _
    $region93: #{action_pred_based_eeg_forward.1} parent=1 // pred_fallthru
      _
    // Predicated region
    $region94: #{action_pred_based_eeg_forward.1} parent=1 // pred_check
      _
    $region95: #{action_pred_based_eeg_forward.1} parent=1 // pred_check_branch
      %124 = sbr.rel (0) target = $region97
    $region96: #{action_pred_based_eeg_forward.1} parent=1 // pred_region
      _
    $region97: #{action_pred_based_eeg_forward.1} parent=1 // pred_fallthru
      _
    // Predicated region
    $region98: #{action_pred_based_eeg_forward.1} parent=1 // pred_check
      _
    $region99: #{action_pred_based_eeg_forward.1} parent=1 // pred_check_branch
      %126 = sbr.rel (0) target = $region101
    $region100: #{action_pred_based_eeg_forward.1} parent=1 // pred_region
      _
    $region101: #{action_pred_based_eeg_forward.1} parent=1 // pred_fallthru
      _
    // Predicated region
    $region102: #{action_pred_based_eeg_forward.1} parent=1 // pred_check
      _
    $region103: #{action_pred_based_eeg_forward.1} parent=1 // pred_check_branch
      %128 = sbr.rel (0) target = $region105
    $region104: #{action_pred_based_eeg_forward.1} parent=1 // pred_region
      _
    $region105: #{action_pred_based_eeg_forward.1} parent=1 // pred_fallthru
      _
    // Predicated region
    $region106: #{action_pred_based_eeg_forward.1} parent=1 // pred_check
      _
    $region107: #{action_pred_based_eeg_forward.1} parent=1 // pred_check_branch
      %130 = sbr.rel (0) target = $region109
    $region108: #{action_pred_based_eeg_forward.1} parent=1 // pred_region
      _
    $region109: #{action_pred_based_eeg_forward.1} parent=1 // pred_fallthru
      _
    // Predicated region
    $region110: #{action_pred_based_eeg_forward.1} parent=1 // pred_check
      _
    $region111: #{action_pred_based_eeg_forward.1} parent=1 // pred_check_branch
      %132 = sbr.rel (0) target = $region113
    $region112: #{action_pred_based_eeg_forward.1} parent=1 // pred_region
      _
    $region113: #{action_pred_based_eeg_forward.1} parent=1 // pred_fallthru
      _
    // Predicated region
    $region114: #{action_pred_based_eeg_forward.1} parent=1 // pred_check
      _
    $region115: #{action_pred_based_eeg_forward.1} parent=1 // pred_check_branch
      %134 = sbr.rel (0) target = $region117
    $region116: #{action_pred_based_eeg_forward.1} parent=1 // pred_region
      _
    $region117: #{action_pred_based_eeg_forward.1} parent=1 // pred_fallthru
      _
    // Predicated region
    $region118: #{action_pred_based_eeg_forward.1} parent=1 // pred_check
      _
    $region119: #{action_pred_based_eeg_forward.1} parent=1 // pred_check_branch
      %136 = sbr.rel (0) target = $region121
    $region120: #{action_pred_based_eeg_forward.1} parent=1 // pred_region
      _
    $region121: #{action_pred_based_eeg_forward.1} parent=1 // pred_fallthru
      _
    // Predicated region
    $region122: #{action_pred_based_eeg_forward.1} parent=1 // pred_check
      _
    $region123: #{action_pred_based_eeg_forward.1} parent=1 // pred_check_branch
      %138 = sbr.rel (0) target = $region125
    $region124: #{action_pred_based_eeg_forward.1} parent=1 // pred_region
      _
    $region125: #{action_pred_based_eeg_forward.1} parent=1 // pred_fallthru
      _
    // Predicated region
    $region126: #{action_pred_based_eeg_forward.1} parent=1 // pred_check
      _
    $region127: #{action_pred_based_eeg_forward.1} parent=1 // pred_check_branch
      %140 = sbr.rel (0) target = $region129
    $region128: #{action_pred_based_eeg_forward.1} parent=1 // pred_region
      _
    $region129: #{action_pred_based_eeg_forward.1} parent=1 // pred_fallthru
      _
    // Predicated region
    $region130: #{action_pred_based_eeg_forward.1} parent=1 // pred_check
      _
    $region131: #{action_pred_based_eeg_forward.1} parent=1 // pred_check_branch
      %142 = sbr.rel (0) target = $region133
    $region132: #{action_pred_based_eeg_forward.1} parent=1 // pred_region
      _
    $region133: #{action_pred_based_eeg_forward.1} parent=1 // pred_fallthru
      _
    // Predicated region
    $region134: #{action_pred_based_eeg_forward.1} parent=1 // pred_check
      _
    $region135: #{action_pred_based_eeg_forward.1} parent=1 // pred_check_branch
      %144 = sbr.rel (0) target = $region137
    $region136: #{action_pred_based_eeg_forward.1} parent=1 // pred_region
      _
    $region137: #{action_pred_based_eeg_forward.1} parent=1 // pred_fallthru
      _
    %v145 = vld [vmem:[%s1] sm:$0xff]
    %v146 = vld [vmem:[%s1 + $0x8] sm:$0xff]
    %v147 = vld [vmem:[%s1 + $0x10] sm:$0xff]
    %v148 = vld [vmem:[%s1 + $0x18] sm:$0xff]
    %v149 = vld [vmem:[%s1 + $0x20] sm:$0xff]
    %v150 = vld [vmem:[%s1 + $0x28] sm:$0xff]
    %v151 = vld [vmem:[%s1 + $0x30] sm:$0xff]
    %v152 = vld [vmem:[%s1 + $0x38] sm:$0xff]
    %v153 = vld [vmem:[%s1 + $0x40] sm:$0xff]
    %v154 = vld [vmem:[%s1 + $0x48] sm:$0xff]
    %v155 = vld [vmem:[%s1 + $0x50] sm:$0xff]
    %v156 = vld [vmem:[%s1 + $0x58] sm:$0xff]
    %v157 = vld [vmem:[%s1 + $0x60] sm:$0xff]
    %v158 = vld [vmem:[%s1 + $0x68] sm:$0xff]
    %v159 = vld [vmem:[%s1 + $0x70] sm:$0xff]
    %v160 = vld [vmem:[%s1 + $0x78] sm:$0xff]
    %v161 = vld [vmem:[%s3] sm:$0xff]
    %v162 = vld [vmem:[%s3 + $0x8] sm:$0xff]
    %v163 = vld [vmem:[%s3 + $0x10] sm:$0xff]
    %v164 = vld [vmem:[%s3 + $0x18] sm:$0xff]
    %v165 = vld [vmem:[%s3 + $0x20] sm:$0xff]
    %v166 = vld [vmem:[%s3 + $0x28] sm:$0xff]
    %v167 = vld [vmem:[%s3 + $0x30] sm:$0xff]
    %v168 = vld [vmem:[%s3 + $0x38] sm:$0xff]
    %v169 = vld [vmem:[%s3 + $0x40] sm:$0xff]
    %v170 = vld [vmem:[%s3 + $0x48] sm:$0xff]
    %v171 = vld [vmem:[%s3 + $0x50] sm:$0xff]
    %v172 = vld [vmem:[%s3 + $0x58] sm:$0xff]
    %v173 = vld [vmem:[%s3 + $0x60] sm:$0xff]
    %v174 = vld [vmem:[%s3 + $0x68] sm:$0xff]
    %v175 = vld [vmem:[%s3 + $0x70] sm:$0xff]
    %v176 = vld [vmem:[%s3 + $0x78] sm:$0xff]
    %v177 = vld [vmem:[%s3 + $0x80] sm:$0xff]
    %v178 = vld [vmem:[%s3 + $0x88] sm:$0xff]
    %v179 = vld [vmem:[%s3 + $0x90] sm:$0xff]
    %v180 = vld [vmem:[%s3 + $0x98] sm:$0xff]
    %v181 = vld [vmem:[%s3 + $0xa0] sm:$0xff]
    %v182 = vld [vmem:[%s3 + $0xa8] sm:$0xff]
    %v183 = vld [vmem:[%s3 + $0xb0] sm:$0xff]
    %v184 = vld [vmem:[%s3 + $0xb8] sm:$0xff]
    %v185 = vld [vmem:[%s3 + $0xc0] sm:$0xff]
    %v186 = vld [vmem:[%s3 + $0xc8] sm:$0xff]
    %v187 = vld [vmem:[%s3 + $0xd0] sm:$0xff]
    %v188 = vld [vmem:[%s3 + $0xd8] sm:$0xff]
    %vm189 = vcmask 785408
    %v191 = vsel %vm189, %v146, 0
    %v194 = vsel %vm189, %v148, 0
    %v197 = vsel %vm189, %v150, 0
    %v200 = vsel %vm189, %v152, 0
    %v203 = vsel %vm189, %v154, 0
    %v206 = vsel %vm189, %v156, 0
    %v209 = vsel %vm189, %v158, 0
    %v212 = vsel %vm189, %v160, 0
    %214 = vmatpush.msra.mxu0 %v176
    %215 = vmatpush.msra.mxu0 %v175
    %216 = vmatpush.msra.mxu0 %v174
    %217 = vmatpush.msra.mxu0 %v173
    %218 = vmatpush.msra.mxu0 %v172
    %219 = vmatpush.msra.mxu0 %v171
    %220 = vmatpush.msra.mxu0 %v170
    %221 = vmatpush.msra.mxu0 %v169
    %222 = vmatpush.msra.mxu0 %v168
    %223 = vmatpush.msra.mxu0 %v167
    %224 = vmatpush.msra.mxu0 %v166
    %225 = vmatpush.msra.mxu0 %v165
    %226 = vmatpush.msra.mxu0 %v164
    %227 = vmatpush.msra.mxu0 %v163
    %228 = vmatpush.msra.mxu0 %v162
    %229 = vmatpush.msra.mxu0 %v161
    %230 = vmatmul.f32.gmra.mxu0 %v145
    %v231 = vpop.f32.mrf.mxu0
    %v232 = vadd.f32 0.0, %v231
    %233 = vmatmul.f32.gmra.mxu0 %v147
    %v234 = vpop.f32.mrf.mxu0
    %v235 = vadd.f32 0.0, %v234
    %236 = vmatmul.f32.gmra.mxu0 %v149
    %v237 = vpop.f32.mrf.mxu0
    %v238 = vadd.f32 0.0, %v237
    %239 = vmatmul.f32.gmra.mxu0 %v151
    %v240 = vpop.f32.mrf.mxu0
    %v241 = vadd.f32 0.0, %v240
    %242 = vmatmul.f32.gmra.mxu0 %v153
    %v243 = vpop.f32.mrf.mxu0
    %v244 = vadd.f32 0.0, %v243
    %245 = vmatmul.f32.gmra.mxu0 %v155
    %v246 = vpop.f32.mrf.mxu0
    %v247 = vadd.f32 0.0, %v246
    %248 = vmatmul.f32.gmra.mxu0 %v157
    %v249 = vpop.f32.mrf.mxu0
    %v250 = vadd.f32 0.0, %v249
    %251 = vmatmul.f32.gmra.mxu0 %v159
    %v252 = vpop.f32.mrf.mxu0
    %253 = vdwg.mxu0
    %254 = vmatpush.msra.mxu0 0.0
    %255 = vmatpush.msra.mxu0 0.0
    %256 = vmatpush.msra.mxu0 0.0
    %257 = vmatpush.msra.mxu0 0.0
    %258 = vmatpush.msra.mxu0 %v188
    %259 = vmatpush.msra.mxu0 %v187
    %260 = vmatpush.msra.mxu0 %v186
    %261 = vmatpush.msra.mxu0 %v185
    %262 = vmatpush.msra.mxu0 %v184
    %263 = vmatpush.msra.mxu0 %v183
    %264 = vmatpush.msra.mxu0 %v182
    %265 = vmatpush.msra.mxu0 %v181
    %266 = vmatpush.msra.mxu0 %v180
    %267 = vmatpush.msra.mxu0 %v179
    %268 = vmatpush.msra.mxu0 %v178
    %269 = vmatpush.msra.mxu0 %v177
    %270 = vmatmul.f32.gmra.mxu0 %v191
    %v271 = vpop.f32.mrf.mxu0
    %v272 = vadd.f32 %v232, %v271
    %273 = vmatmul.f32.gmra.mxu0 %v194
    %v274 = vpop.f32.mrf.mxu0
    %v275 = vadd.f32 %v235, %v274
    %276 = vmatmul.f32.gmra.mxu0 %v197
    %v277 = vpop.f32.mrf.mxu0
    %v278 = vadd.f32 %v238, %v277
    %279 = vmatmul.f32.gmra.mxu0 %v200
    %v280 = vpop.f32.mrf.mxu0
    %v281 = vadd.f32 %v241, %v280
    %282 = vmatmul.f32.gmra.mxu0 %v203
    %v283 = vpop.f32.mrf.mxu0
    %v284 = vadd.f32 %v244, %v283
    %285 = vmatmul.f32.gmra.mxu0 %v206
    %v286 = vpop.f32.mrf.mxu0
    %v287 = vadd.f32 %v247, %v286
    %288 = vmatmul.f32.gmra.mxu0 %v209
    %v289 = vpop.f32.mrf.mxu0
    %v290 = vadd.f32 %v250, %v289
    %291 = vmatmul.f32.gmra.mxu0 %v212
    %v292 = vpop.f32.mrf.mxu0
    %293 = vdwg.mxu0
    %v294 = vld [vmem:[%s5] sm:$0xff]
    %v295 = vld [vmem:[%s5 + $0x8] sm:$0xff]
    %v296 = vld [vmem:[%s5 + $0x10] sm:$0xff]
    %v297 = vld [vmem:[%s5 + $0x18] sm:$0xff]
    %v298 = vld [vmem:[%s5 + $0x20] sm:$0xff]
    %v299 = vld [vmem:[%s5 + $0x28] sm:$0xff]
    %v300 = vld [vmem:[%s5 + $0x30] sm:$0xff]
    %v301 = vld [vmem:[%s5 + $0x38] sm:$0xff]
    %v302 = vld [vmem:[%s5 + $0x40] sm:$0xff]
    %v303 = vld [vmem:[%s5 + $0x48] sm:$0xff]
    %v304 = vld [vmem:[%s5 + $0x50] sm:$0xff]
    %v305 = vld [vmem:[%s5 + $0x58] sm:$0xff]
    %v306 = vld [vmem:[%s5 + $0x60] sm:$0xff]
    %v307 = vld [vmem:[%s5 + $0x68] sm:$0xff]
    %v308 = vld [vmem:[%s5 + $0x70] sm:$0xff]
    %v309 = vld [vmem:[%s5 + $0x78] sm:$0xff]
    %v310 = vld [vmem:[%s5 + $0x80] sm:$0xff]
    %v311 = vld [vmem:[%s5 + $0x88] sm:$0xff]
    %v312 = vld [vmem:[%s5 + $0x90] sm:$0xff]
    %v313 = vld [vmem:[%s5 + $0x98] sm:$0xff]
    %v314 = vld [vmem:[%s5 + $0xa0] sm:$0xff]
    %v315 = vld [vmem:[%s5 + $0xa8] sm:$0xff]
    %v316 = vld [vmem:[%s5 + $0xb0] sm:$0xff]
    %v317 = vld [vmem:[%s5 + $0xb8] sm:$0xff]
    %v318 = vld [vmem:[%s5 + $0xc0] sm:$0xff]
    %v319 = vld [vmem:[%s5 + $0xc8] sm:$0xff]
    %v320 = vld [vmem:[%s5 + $0xd0] sm:$0xff]
    %v321 = vld [vmem:[%s5 + $0xd8] sm:$0xff]
    %322 = vmatpush.msra.mxu0 %v309
    %323 = vmatpush.msra.mxu0 %v308
    %324 = vmatpush.msra.mxu0 %v307
    %325 = vmatpush.msra.mxu0 %v306
    %326 = vmatpush.msra.mxu0 %v305
    %327 = vmatpush.msra.mxu0 %v304
    %328 = vmatpush.msra.mxu0 %v303
    %329 = vmatpush.msra.mxu0 %v302
    %330 = vmatpush.msra.mxu0 %v301
    %331 = vmatpush.msra.mxu0 %v300
    %332 = vmatpush.msra.mxu0 %v299
    %333 = vmatpush.msra.mxu0 %v298
    %334 = vmatpush.msra.mxu0 %v297
    %335 = vmatpush.msra.mxu0 %v296
    %336 = vmatpush.msra.mxu0 %v295
    %337 = vmatpush.msra.mxu0 %v294
    %338 = vmatmul.f32.gmra.mxu0 %v145
    %v339 = vpop.f32.mrf.mxu0
    %340 = vmatmul.f32.gmra.mxu0 %v147
    %v341 = vpop.f32.mrf.mxu0
    %v342 = vadd.f32 0.0, %v341
    %343 = vmatmul.f32.gmra.mxu0 %v149
    %v344 = vpop.f32.mrf.mxu0
    %v345 = vadd.f32 0.0, %v344
    %346 = vmatmul.f32.gmra.mxu0 %v151
    %v347 = vpop.f32.mrf.mxu0
    %v348 = vadd.f32 0.0, %v347
    %349 = vmatmul.f32.gmra.mxu0 %v153
    %v350 = vpop.f32.mrf.mxu0
    %v351 = vadd.f32 0.0, %v350
    %352 = vmatmul.f32.gmra.mxu0 %v155
    %v353 = vpop.f32.mrf.mxu0
    %v354 = vadd.f32 0.0, %v353
    %355 = vmatmul.f32.gmra.mxu0 %v157
    %v356 = vpop.f32.mrf.mxu0
    %v357 = vadd.f32 0.0, %v356
    %358 = vmatmul.f32.gmra.mxu0 %v159
    %v359 = vpop.f32.mrf.mxu0
    %v360 = vadd.f32 0.0, %v359
    %361 = vdwg.mxu0
    %362 = vmatpush.msra.mxu0 0.0
    %363 = vmatpush.msra.mxu0 0.0
    %364 = vmatpush.msra.mxu0 0.0
    %365 = vmatpush.msra.mxu0 0.0
    %366 = vmatpush.msra.mxu0 %v321
    %367 = vmatpush.msra.mxu0 %v320
    %368 = vmatpush.msra.mxu0 %v319
    %369 = vmatpush.msra.mxu0 %v318
    %370 = vmatpush.msra.mxu0 %v317
    %371 = vmatpush.msra.mxu0 %v316
    %372 = vmatpush.msra.mxu0 %v315
    %373 = vmatpush.msra.mxu0 %v314
    %374 = vmatpush.msra.mxu0 %v313
    %375 = vmatpush.msra.mxu0 %v312
    %376 = vmatpush.msra.mxu0 %v311
    %377 = vmatpush.msra.mxu0 %v310
    %378 = vmatmul.f32.gmra.mxu0 %v191
    %v379 = vpop.f32.mrf.mxu0
    %380 = vmatmul.f32.gmra.mxu0 %v194
    %v381 = vpop.f32.mrf.mxu0
    %v382 = vadd.f32 %v342, %v381
    %383 = vmatmul.f32.gmra.mxu0 %v197
    %v384 = vpop.f32.mrf.mxu0
    %v385 = vadd.f32 %v345, %v384
    %386 = vmatmul.f32.gmra.mxu0 %v200
    %v387 = vpop.f32.mrf.mxu0
    %v388 = vadd.f32 %v348, %v387
    %389 = vmatmul.f32.gmra.mxu0 %v203
    %v390 = vpop.f32.mrf.mxu0
    %v391 = vadd.f32 %v351, %v390
    %392 = vmatmul.f32.gmra.mxu0 %v206
    %v393 = vpop.f32.mrf.mxu0
    %v394 = vadd.f32 %v354, %v393
    %395 = vmatmul.f32.gmra.mxu0 %v209
    %v396 = vpop.f32.mrf.mxu0
    %v397 = vadd.f32 %v357, %v396
    %398 = vmatmul.f32.gmra.mxu0 %v212
    %v399 = vpop.f32.mrf.mxu0
    %v400 = vadd.f32 %v360, %v399
    %401 = vdwg.mxu0
    %v402 = vadd.f32 %v272, %v382
    %v403 = vadd.f32 %v275, %v385
    %v404 = vadd.f32 %v278, %v388
    %v405 = vadd.f32 %v281, %v391
    %v406 = vadd.f32 %v284, %v394
    %v407 = vadd.f32 %v287, %v397
    %v408 = vadd.f32 %v290, %v400
    %v409 = vmax.f32 %v402, 0.0
    %v410 = vmax.f32 %v403, 0.0
    %v411 = vmax.f32 %v404, 0.0
    %v412 = vmax.f32 %v405, 0.0
    %v413 = vmax.f32 %v406, 0.0
    %v414 = vmax.f32 %v407, 0.0
    %v415 = vmax.f32 %v408, 0.0
    %vm416 = vcmask 261120
    %v417 = vsel %vm416, %v409, 0.0
    %418 = vadd.xlane.f32.xlu0 %v417
    %v419 = vpop.xlane.xlu0 %418
    %v420 = vsel %vm416, %v410, 0.0
    %421 = vadd.xlane.f32.xlu0 %v420
    %v422 = vpop.xlane.xlu0 %421
    %v423 = vsel %vm416, %v411, 0.0
    %424 = vadd.xlane.f32.xlu0 %v423
    %v425 = vpop.xlane.xlu0 %424
    %v426 = vsel %vm416, %v412, 0.0
    %427 = vadd.xlane.f32.xlu0 %v426
    %v428 = vpop.xlane.xlu0 %427
    %v429 = vsel %vm416, %v413, 0.0
    %430 = vadd.xlane.f32.xlu0 %v429
    %v431 = vpop.xlane.xlu0 %430
    %v432 = vsel %vm416, %v414, 0.0
    %433 = vadd.xlane.f32.xlu0 %v432
    %v434 = vpop.xlane.xlu0 %433
    %v435 = vsel %vm416, %v415, 0.0
    %436 = vadd.xlane.f32.xlu0 %v435
    %v437 = vpop.xlane.xlu0 %436
    %v438 = vadd.f32 %v419, %v422
    %v439 = vadd.f32 %v438, %v425
    %v440 = vadd.f32 %v439, %v428
    %v441 = vadd.f32 %v440, %v431
    %v442 = vadd.f32 %v441, %v434
    %v443 = vadd.f32 %v442, %v437
    %v444 = vmul.f32 %v443, 0.004464286
    %v445 = vsub.f32 %v409, %v444
    %v446 = vsub.f32 %v410, %v444
    %v447 = vsub.f32 %v411, %v444
    %v448 = vsub.f32 %v412, %v444
    %v449 = vsub.f32 %v413, %v444
    %v450 = vsub.f32 %v414, %v444
    %v451 = vsub.f32 %v415, %v444
    %v452 = vmul.f32 %v445, %v445
    %v453 = vmul.f32 %v446, %v446
    %v454 = vmul.f32 %v447, %v447
    %v455 = vmul.f32 %v448, %v448
    %v456 = vmul.f32 %v449, %v449
    %v457 = vmul.f32 %v450, %v450
    %v458 = vmul.f32 %v451, %v451
    %v459 = vsel %vm416, %v452, 0.0
    %460 = vadd.xlane.f32.xlu0 %v459
    %v461 = vpop.xlane.xlu0 %460
    %v462 = vsel %vm416, %v453, 0.0
    %463 = vadd.xlane.f32.xlu0 %v462
    %v464 = vpop.xlane.xlu0 %463
    %v465 = vsel %vm416, %v454, 0.0
    %466 = vadd.xlane.f32.xlu0 %v465
    %v467 = vpop.xlane.xlu0 %466
    %v468 = vsel %vm416, %v455, 0.0
    %469 = vadd.xlane.f32.xlu0 %v468
    %v470 = vpop.xlane.xlu0 %469
    %v471 = vsel %vm416, %v456, 0.0
    %472 = vadd.xlane.f32.xlu0 %v471
    %v473 = vpop.xlane.xlu0 %472
    %v474 = vsel %vm416, %v457, 0.0
    %475 = vadd.xlane.f32.xlu0 %v474
    %v476 = vpop.xlane.xlu0 %475
    %v477 = vsel %vm416, %v458, 0.0
    %478 = vadd.xlane.f32.xlu0 %v477
    %v479 = vpop.xlane.xlu0 %478
    %v480 = vadd.f32 %v461, %v464
    %v481 = vadd.f32 %v480, %v467
    %v482 = vadd.f32 %v481, %v470
    %v483 = vadd.f32 %v482, %v473
    %v484 = vadd.f32 %v483, %v476
    %v485 = vadd.f32 %v484, %v479
    %v486 = vmul.f32 %v485, 0.004464286
    %v487 = vadd.f32 %v486, 1e-08
    %v488 = vrsqrt.pop %v487
    %v489 = vmul.f32 %v488, %v487
    %v490 = vmul.f32 %v489, %v488
    %v491 = vmul.f32 0.5, %v490
    %v492 = vsub.f32 1.5, %v491
    %v493 = vmul.f32 %v488, %v492
    %vm494 = vweird.f32 %v487
    %vm495 = vweird.f32 %v488
    %vm496 = vmor %vm494, %vm495
    %v497 = vsel %vm496, %v488, %v493
    %v498 = vmul.f32 %v445, %v497
    %v499 = vmul.f32 %v446, %v497
    %v500 = vmul.f32 %v447, %v497
    %v501 = vmul.f32 %v448, %v497
    %v502 = vmul.f32 %v449, %v497
    %v503 = vmul.f32 %v450, %v497
    %v504 = vmul.f32 %v451, %v497
    %v505 = vld [vmem:[%s7] sm:$0x1]
    %v507 = vperm.slane %v505, 0
    %v509 = vmul.f32 %v498, %v507
    %v510 = vmul.f32 %v499, %v507
    %v511 = vmul.f32 %v500, %v507
    %v512 = vmul.f32 %v501, %v507
    %v513 = vmul.f32 %v502, %v507
    %v514 = vmul.f32 %v503, %v507
    %v515 = vmul.f32 %v504, %v507
    %v516 = vld [vmem:[%s9] sm:$0x1]
    %v518 = vperm.slane %v516, 0
    %v520 = vadd.f32 %v509, %v518
    %v521 = vadd.f32 %v510, %v518
    %v522 = vadd.f32 %v511, %v518
    %v523 = vadd.f32 %v512, %v518
    %v524 = vadd.f32 %v513, %v518
    %v525 = vadd.f32 %v514, %v518
    %v526 = vadd.f32 %v515, %v518
    %v527 = vld [vmem:[%s11] sm:$0xff]
    %v528 = vld [vmem:[%s11 + $0x8] sm:$0xff]
    %v529 = vld [vmem:[%s11 + $0x10] sm:$0xff]
    %v530 = vld [vmem:[%s11 + $0x18] sm:$0xff]
    %v532 = vsel %vm416, %v520, 0
    %v535 = vsel %vm416, %v521, 0
    %v538 = vsel %vm416, %v522, 0
    %v541 = vsel %vm416, %v523, 0
    %v544 = vsel %vm416, %v524, 0
    %v547 = vsel %vm416, %v525, 0
    %v550 = vsel %vm416, %v526, 0
    %552 = vmatpush.msra.mxu0 0.0
    %553 = vmatpush.msra.mxu0 0.0
    %554 = vmatpush.msra.mxu0 0.0
    %555 = vmatpush.msra.mxu0 0.0
    %556 = vmatpush.msra.mxu0 0.0
    %557 = vmatpush.msra.mxu0 0.0
    %558 = vmatpush.msra.mxu0 0.0
    %559 = vmatpush.msra.mxu0 0.0
    %560 = vmatpush.msra.mxu0 0.0
    %561 = vmatpush.msra.mxu0 0.0
    %562 = vmatpush.msra.mxu0 0.0
    %563 = vmatpush.msra.mxu0 0.0
    %564 = vmatpush.msra.mxu0 %v530
    %565 = vmatpush.msra.mxu0 %v529
    %566 = vmatpush.msra.mxu0 %v528
    %567 = vmatpush.msra.mxu0 %v527
    %568 = vmatmul.f32.gmra.mxu0 %v532
    %v569 = vpop.f32.mrf.mxu0
    %v570 = vadd.f32 0.0, %v569
    %571 = vmatmul.f32.gmra.mxu0 %v535
    %v572 = vpop.f32.mrf.mxu0
    %v573 = vadd.f32 0.0, %v572
    %574 = vmatmul.f32.gmra.mxu0 %v538
    %v575 = vpop.f32.mrf.mxu0
    %v576 = vadd.f32 0.0, %v575
    %577 = vmatmul.f32.gmra.mxu0 %v541
    %v578 = vpop.f32.mrf.mxu0
    %v579 = vadd.f32 0.0, %v578
    %580 = vmatmul.f32.gmra.mxu0 %v544
    %v581 = vpop.f32.mrf.mxu0
    %v582 = vadd.f32 0.0, %v581
    %583 = vmatmul.f32.gmra.mxu0 %v547
    %v584 = vpop.f32.mrf.mxu0
    %v585 = vadd.f32 0.0, %v584
    %586 = vmatmul.f32.gmra.mxu0 %v550
    %v587 = vpop.f32.mrf.mxu0
    %v588 = vadd.f32 0.0, %v587
    %589 = vdwg.mxu0
    %v590 = vld [vmem:[%s13] sm:$0xff]
    %v591 = vld [vmem:[%s13 + $0x8] sm:$0xff]
    %v592 = vld [vmem:[%s13 + $0x10] sm:$0xff]
    %v593 = vld [vmem:[%s13 + $0x18] sm:$0xff]
    %v594 = vld [vmem:[%s21] sm:$0x1]
    %v596 = vperm.slane %v594, 0
    %v599 = vsel %vm416, %v570, 0
    %v602 = vsel %vm416, %v573, 0
    %v605 = vsel %vm416, %v576, 0
    %v608 = vsel %vm416, %v579, 0
    %v611 = vsel %vm416, %v582, 0
    %v614 = vsel %vm416, %v585, 0
    %v617 = vsel %vm416, %v588, 0
    %619 = vmatpush.msra.mxu0 0.0
    %620 = vmatpush.msra.mxu0 0.0
    %621 = vmatpush.msra.mxu0 0.0
    %622 = vmatpush.msra.mxu0 0.0
    %623 = vmatpush.msra.mxu0 0.0
    %624 = vmatpush.msra.mxu0 0.0
    %625 = vmatpush.msra.mxu0 0.0
    %626 = vmatpush.msra.mxu0 0.0
    %627 = vmatpush.msra.mxu0 0.0
    %628 = vmatpush.msra.mxu0 0.0
    %629 = vmatpush.msra.mxu0 0.0
    %630 = vmatpush.msra.mxu0 0.0
    %631 = vmatpush.msra.mxu0 %v593
    %632 = vmatpush.msra.mxu0 %v592
    %633 = vmatpush.msra.mxu0 %v591
    %634 = vmatpush.msra.mxu0 %v590
    %635 = vmatmul.f32.gmra.mxu0 %v599
    %v636 = vpop.f32.mrf.mxu0
    %v637 = vadd.f32 %v596, %v636
    %638 = vmatmul.f32.gmra.mxu0 %v602
    %v639 = vpop.f32.mrf.mxu0
    %v640 = vadd.f32 %v596, %v639
    %641 = vmatmul.f32.gmra.mxu0 %v605
    %v642 = vpop.f32.mrf.mxu0
    %v643 = vadd.f32 %v596, %v642
    %644 = vmatmul.f32.gmra.mxu0 %v608
    %v645 = vpop.f32.mrf.mxu0
    %v646 = vadd.f32 %v596, %v645
    %647 = vmatmul.f32.gmra.mxu0 %v611
    %v648 = vpop.f32.mrf.mxu0
    %v649 = vadd.f32 %v596, %v648
    %650 = vmatmul.f32.gmra.mxu0 %v614
    %v651 = vpop.f32.mrf.mxu0
    %v652 = vadd.f32 %v596, %v651
    %653 = vmatmul.f32.gmra.mxu0 %v617
    %v654 = vpop.f32.mrf.mxu0
    %v655 = vadd.f32 %v596, %v654
    %656 = vdwg.mxu0
    %v657 = vld [vmem:[%s15] sm:$0xff]
    %v658 = vld [vmem:[%s15 + $0x8] sm:$0xff]
    %v659 = vld [vmem:[%s15 + $0x10] sm:$0xff]
    %v660 = vld [vmem:[%s15 + $0x18] sm:$0xff]
    %v661 = vld [vmem:[%s23] sm:$0x1]
    %v663 = vperm.slane %v661, 0
    %665 = vmatpush.msra.mxu0 0.0
    %666 = vmatpush.msra.mxu0 0.0
    %667 = vmatpush.msra.mxu0 0.0
    %668 = vmatpush.msra.mxu0 0.0
    %669 = vmatpush.msra.mxu0 0.0
    %670 = vmatpush.msra.mxu0 0.0
    %671 = vmatpush.msra.mxu0 0.0
    %672 = vmatpush.msra.mxu0 0.0
    %673 = vmatpush.msra.mxu0 0.0
    %674 = vmatpush.msra.mxu0 0.0
    %675 = vmatpush.msra.mxu0 0.0
    %676 = vmatpush.msra.mxu0 0.0
    %677 = vmatpush.msra.mxu0 %v660
    %678 = vmatpush.msra.mxu0 %v659
    %679 = vmatpush.msra.mxu0 %v658
    %680 = vmatpush.msra.mxu0 %v657
    %681 = vmatmul.f32.gmra.mxu0 %v599
    %v682 = vpop.f32.mrf.mxu0
    %v683 = vadd.f32 %v663, %v682
    %684 = vmatmul.f32.gmra.mxu0 %v602
    %v685 = vpop.f32.mrf.mxu0
    %v686 = vadd.f32 %v663, %v685
    %687 = vmatmul.f32.gmra.mxu0 %v605
    %v688 = vpop.f32.mrf.mxu0
    %v689 = vadd.f32 %v663, %v688
    %690 = vmatmul.f32.gmra.mxu0 %v608
    %v691 = vpop.f32.mrf.mxu0
    %v692 = vadd.f32 %v663, %v691
    %693 = vmatmul.f32.gmra.mxu0 %v611
    %v694 = vpop.f32.mrf.mxu0
    %v695 = vadd.f32 %v663, %v694
    %696 = vmatmul.f32.gmra.mxu0 %v614
    %v697 = vpop.f32.mrf.mxu0
    %v698 = vadd.f32 %v663, %v697
    %699 = vmatmul.f32.gmra.mxu0 %v617
    %v700 = vpop.f32.mrf.mxu0
    %v701 = vadd.f32 %v663, %v700
    %702 = vdwg.mxu0
    %v703 = vld [vmem:[%s17] sm:$0xff]
    %v704 = vld [vmem:[%s17 + $0x8] sm:$0xff]
    %v705 = vld [vmem:[%s19] sm:$0xff]
    %v706 = vld [vmem:[%s19 + $0x8] sm:$0xff]
    %v707 = vxor.u32 %v637, 2147483648
    %v708 = vmul.f32 %v707, 1.442695
    %v709 = vpow.pop %v708
    %v710 = vadd.f32 %v709, 1.0
    %v711 = vrcp.pop %v710
    %v712 = vmul.f32 %v710, %v711
    %v713 = vsub.f32 1.0, %v712
    %v714 = vmul.f32 %v711, %v713
    %v715 = vadd.f32 %v711, %v714
    %vm716 = vweird.f32 %v710
    %vm717 = vweird.f32 %v711
    %vm718 = vmor %vm716, %vm717
    %v719 = vsel %vm718, %v711, %v715
    %v720 = vand.u32 2147483647, %v710
    %vm721 = vcmp.eq.f32.partialorder %v720, 8.507059e+37
    %v722 = vand.u32 %v710, 2147483648
    %v723 = vor.u32 1.1754944e-38, %v722
    %v724 = vsel %vm721, %v723, %v719
    %v725 = vmul.f32 1.0, %v724
    %v726 = vtanh.pop %v637
    %v727 = vmul.f32 %v725, 0.0
    %729 = vrot.lane.b32.xlu0 %v726, 80
    %v730 = vpop.permute.xlu0 %729
    %v732 = vmul.f32 %v725, %v730
    %734 = vrot.lane.b32.xlu0 %v732, 16
    %v735 = vpop.permute.xlu0 %734
    %v737 = vadd.f32 %v727, %v735
    %v738 = vtanh.pop %v737
    %740 = vrot.lane.b32.xlu0 %v738, 16
    %v741 = vpop.permute.xlu0 %740
    %v743 = vmul.f32 %v725, %v741
    %v744 = vxor.u32 %v701, 2147483648
    %v745 = vmul.f32 %v744, 1.442695
    %v746 = vpow.pop %v745
    %v747 = vadd.f32 %v746, 1.0
    %v748 = vrcp.pop %v747
    %v749 = vmul.f32 %v747, %v748
    %v750 = vsub.f32 1.0, %v749
    %v751 = vmul.f32 %v748, %v750
    %v752 = vadd.f32 %v748, %v751
    %vm753 = vweird.f32 %v747
    %vm754 = vweird.f32 %v748
    %vm755 = vmor %vm753, %vm754
    %v756 = vsel %vm755, %v748, %v752
    %v757 = vand.u32 2147483647, %v747
    %vm758 = vcmp.eq.f32.partialorder %v757, 8.507059e+37
    %v759 = vand.u32 %v747, 2147483648
    %v760 = vor.u32 1.1754944e-38, %v759
    %v761 = vsel %vm758, %v760, %v756
    %v762 = vmul.f32 1.0, %v761
    %v763 = vtanh.pop %v701
    %v764 = vmul.f32 %v762, 0.0
    %766 = vrot.lane.b32.xlu0 %v763, 80
    %v767 = vpop.permute.xlu0 %766
    %v769 = vmul.f32 %v762, %v767
    %771 = vrot.lane.b32.xlu0 %v769, 16
    %v772 = vpop.permute.xlu0 %771
    %v774 = vadd.f32 %v764, %v772
    %v775 = vtanh.pop %v774
    %777 = vrot.lane.b32.xlu0 %v775, 16
    %v778 = vpop.permute.xlu0 %777
    %v780 = vmul.f32 %v762, %v778
    %782 = vrot.lane.b32.xlu0 %v743, 96
    %v783 = vpop.permute.xlu0 %782
    %vm785 = vcmask 130048
    %786 = vst.msk [vmem:[#allocation2] sm:$0xff] %vm785, %v783
    %788 = vrot.lane.b32.xlu0 %v780, 96
    %v789 = vpop.permute.xlu0 %788
    %791 = vst.msk [vmem:[#allocation3 + $0x30] sm:$0xff] %vm785, %v789
    %v792 = vsel %vm785, %v783, 0
    %794 = vmatpush.msra.mxu0 0.0
    %795 = vmatpush.msra.mxu0 0.0
    %796 = vmatpush.msra.mxu0 0.0
    %797 = vmatpush.msra.mxu0 0.0
    %798 = vmatpush.msra.mxu0 0.0
    %799 = vmatpush.msra.mxu0 0.0
    %800 = vmatpush.msra.mxu0 0.0
    %801 = vmatpush.msra.mxu0 0.0
    %802 = vmatpush.msra.mxu0 0.0
    %803 = vmatpush.msra.mxu0 0.0
    %804 = vmatpush.msra.mxu0 0.0
    %805 = vmatpush.msra.mxu0 0.0
    %806 = vmatpush.msra.mxu0 0.0
    %807 = vmatpush.msra.mxu0 0.0
    %808 = vmatpush.msra.mxu0 %v704
    %809 = vmatpush.msra.mxu0 %v703
    %810 = vmatmul.f32.gmra.mxu0 %v792
    %v811 = vpop.f32.mrf.mxu0
    %v812 = vadd.f32 0.0, %v811
    %813 = vdwg.mxu0
    %v814 = vadd.f32 %v640, %v812
    %v815 = vsel %vm785, %v789, 0
    %817 = vmatpush.msra.mxu0 0.0
    %818 = vmatpush.msra.mxu0 0.0
    %819 = vmatpush.msra.mxu0 0.0
    %820 = vmatpush.msra.mxu0 0.0
    %821 = vmatpush.msra.mxu0 0.0
    %822 = vmatpush.msra.mxu0 0.0
    %823 = vmatpush.msra.mxu0 0.0
    %824 = vmatpush.msra.mxu0 0.0
    %825 = vmatpush.msra.mxu0 0.0
    %826 = vmatpush.msra.mxu0 0.0
    %827 = vmatpush.msra.mxu0 0.0
    %828 = vmatpush.msra.mxu0 0.0
    %829 = vmatpush.msra.mxu0 0.0
    %830 = vmatpush.msra.mxu0 0.0
    %831 = vmatpush.msra.mxu0 %v706
    %832 = vmatpush.msra.mxu0 %v705
    %833 = vmatmul.f32.gmra.mxu0 %v815
    %v834 = vpop.f32.mrf.mxu0
    %v835 = vadd.f32 0.0, %v834
    %836 = vdwg.mxu0
    %v837 = vadd.f32 %v698, %v835
    %v838 = vxor.u32 %v814, 2147483648
    %v839 = vmul.f32 %v838, 1.442695
    %v840 = vpow.pop %v839
    %v841 = vadd.f32 %v840, 1.0
    %v842 = vrcp.pop %v841
    %v843 = vmul.f32 %v841, %v842
    %v844 = vsub.f32 1.0, %v843
    %v845 = vmul.f32 %v842, %v844
    %v846 = vadd.f32 %v842, %v845
    %vm847 = vweird.f32 %v841
    %vm848 = vweird.f32 %v842
    %vm849 = vmor %vm847, %vm848
    %v850 = vsel %vm849, %v842, %v846
    %v851 = vand.u32 2147483647, %v841
    %vm852 = vcmp.eq.f32.partialorder %v851, 8.507059e+37
    %v853 = vand.u32 %v841, 2147483648
    %v854 = vor.u32 1.1754944e-38, %v853
    %v855 = vsel %vm852, %v854, %v850
    %v856 = vmul.f32 1.0, %v855
    %v857 = vtanh.pop %v814
    %v858 = vmul.f32 %v856, %v737
    %860 = vrot.lane.b32.xlu0 %v857, 80
    %v861 = vpop.permute.xlu0 %860
    %v863 = vmul.f32 %v856, %v861
    %865 = vrot.lane.b32.xlu0 %v863, 16
    %v866 = vpop.permute.xlu0 %865
    %v868 = vadd.f32 %v858, %v866
    %v869 = vtanh.pop %v868
    %871 = vrot.lane.b32.xlu0 %v869, 16
    %v872 = vpop.permute.xlu0 %871
    %v874 = vmul.f32 %v856, %v872
    %v875 = vxor.u32 %v837, 2147483648
    %v876 = vmul.f32 %v875, 1.442695
    %v877 = vpow.pop %v876
    %v878 = vadd.f32 %v877, 1.0
    %v879 = vrcp.pop %v878
    %v880 = vmul.f32 %v878, %v879
    %v881 = vsub.f32 1.0, %v880
    %v882 = vmul.f32 %v879, %v881
    %v883 = vadd.f32 %v879, %v882
    %vm884 = vweird.f32 %v878
    %vm885 = vweird.f32 %v879
    %vm886 = vmor %vm884, %vm885
    %v887 = vsel %vm886, %v879, %v883
    %v888 = vand.u32 2147483647, %v878
    %vm889 = vcmp.eq.f32.partialorder %v888, 8.507059e+37
    %v890 = vand.u32 %v878, 2147483648
    %v891 = vor.u32 1.1754944e-38, %v890
    %v892 = vsel %vm889, %v891, %v887
    %v893 = vmul.f32 1.0, %v892
    %v894 = vtanh.pop %v837
    %v895 = vmul.f32 %v893, %v774
    %897 = vrot.lane.b32.xlu0 %v894, 80
    %v898 = vpop.permute.xlu0 %897
    %v900 = vmul.f32 %v893, %v898
    %902 = vrot.lane.b32.xlu0 %v900, 16
    %v903 = vpop.permute.xlu0 %902
    %v905 = vadd.f32 %v895, %v903
    %v906 = vtanh.pop %v905
    %908 = vrot.lane.b32.xlu0 %v906, 16
    %v909 = vpop.permute.xlu0 %908
    %v911 = vmul.f32 %v893, %v909
    %913 = vrot.lane.b32.xlu0 %v874, 96
    %v914 = vpop.permute.xlu0 %913
    %916 = vst.msk [vmem:[#allocation2 + $0x8] sm:$0xff] %vm785, %v914
    %918 = vrot.lane.b32.xlu0 %v911, 96
    %v919 = vpop.permute.xlu0 %918
    %921 = vst.msk [vmem:[#allocation3 + $0x28] sm:$0xff] %vm785, %v919
    %v922 = vsel %vm785, %v914, 0
    %924 = vmatpush.msra.mxu0 0.0
    %925 = vmatpush.msra.mxu0 0.0
    %926 = vmatpush.msra.mxu0 0.0
    %927 = vmatpush.msra.mxu0 0.0
    %928 = vmatpush.msra.mxu0 0.0
    %929 = vmatpush.msra.mxu0 0.0
    %930 = vmatpush.msra.mxu0 0.0
    %931 = vmatpush.msra.mxu0 0.0
    %932 = vmatpush.msra.mxu0 0.0
    %933 = vmatpush.msra.mxu0 0.0
    %934 = vmatpush.msra.mxu0 0.0
    %935 = vmatpush.msra.mxu0 0.0
    %936 = vmatpush.msra.mxu0 0.0
    %937 = vmatpush.msra.mxu0 0.0
    %938 = vmatpush.msra.mxu0 %v704
    %939 = vmatpush.msra.mxu0 %v703
    %940 = vmatmul.f32.gmra.mxu0 %v922
    %v941 = vpop.f32.mrf.mxu0
    %v942 = vadd.f32 0.0, %v941
    %943 = vdwg.mxu0
    %v944 = vadd.f32 %v643, %v942
    %v945 = vsel %vm785, %v919, 0
    %947 = vmatpush.msra.mxu0 0.0
    %948 = vmatpush.msra.mxu0 0.0
    %949 = vmatpush.msra.mxu0 0.0
    %950 = vmatpush.msra.mxu0 0.0
    %951 = vmatpush.msra.mxu0 0.0
    %952 = vmatpush.msra.mxu0 0.0
    %953 = vmatpush.msra.mxu0 0.0
    %954 = vmatpush.msra.mxu0 0.0
    %955 = vmatpush.msra.mxu0 0.0
    %956 = vmatpush.msra.mxu0 0.0
    %957 = vmatpush.msra.mxu0 0.0
    %958 = vmatpush.msra.mxu0 0.0
    %959 = vmatpush.msra.mxu0 0.0
    %960 = vmatpush.msra.mxu0 0.0
    %961 = vmatpush.msra.mxu0 %v706
    %962 = vmatpush.msra.mxu0 %v705
    %963 = vmatmul.f32.gmra.mxu0 %v945
    %v964 = vpop.f32.mrf.mxu0
    %v965 = vadd.f32 0.0, %v964
    %966 = vdwg.mxu0
    %v967 = vadd.f32 %v695, %v965
    %v968 = vxor.u32 %v944, 2147483648
    %v969 = vmul.f32 %v968, 1.442695
    %v970 = vpow.pop %v969
    %v971 = vadd.f32 %v970, 1.0
    %v972 = vrcp.pop %v971
    %v973 = vmul.f32 %v971, %v972
    %v974 = vsub.f32 1.0, %v973
    %v975 = vmul.f32 %v972, %v974
    %v976 = vadd.f32 %v972, %v975
    %vm977 = vweird.f32 %v971
    %vm978 = vweird.f32 %v972
    %vm979 = vmor %vm977, %vm978
    %v980 = vsel %vm979, %v972, %v976
    %v981 = vand.u32 2147483647, %v971
    %vm982 = vcmp.eq.f32.partialorder %v981, 8.507059e+37
    %v983 = vand.u32 %v971, 2147483648
    %v984 = vor.u32 1.1754944e-38, %v983
    %v985 = vsel %vm982, %v984, %v980
    %v986 = vmul.f32 1.0, %v985
    %v987 = vtanh.pop %v944
    %v988 = vmul.f32 %v986, %v868
    %990 = vrot.lane.b32.xlu0 %v987, 80
    %v991 = vpop.permute.xlu0 %990
    %v993 = vmul.f32 %v986, %v991
    %995 = vrot.lane.b32.xlu0 %v993, 16
    %v996 = vpop.permute.xlu0 %995
    %v998 = vadd.f32 %v988, %v996
    %v999 = vtanh.pop %v998
    %1001 = vrot.lane.b32.xlu0 %v999, 16
    %v1002 = vpop.permute.xlu0 %1001
    %v1004 = vmul.f32 %v986, %v1002
    %v1005 = vxor.u32 %v967, 2147483648
    %v1006 = vmul.f32 %v1005, 1.442695
    %v1007 = vpow.pop %v1006
    %v1008 = vadd.f32 %v1007, 1.0
    %v1009 = vrcp.pop %v1008
    %v1010 = vmul.f32 %v1008, %v1009
    %v1011 = vsub.f32 1.0, %v1010
    %v1012 = vmul.f32 %v1009, %v1011
    %v1013 = vadd.f32 %v1009, %v1012
    %vm1014 = vweird.f32 %v1008
    %vm1015 = vweird.f32 %v1009
    %vm1016 = vmor %vm1014, %vm1015
    %v1017 = vsel %vm1016, %v1009, %v1013
    %v1018 = vand.u32 2147483647, %v1008
    %vm1019 = vcmp.eq.f32.partialorder %v1018, 8.507059e+37
    %v1020 = vand.u32 %v1008, 2147483648
    %v1021 = vor.u32 1.1754944e-38, %v1020
    %v1022 = vsel %vm1019, %v1021, %v1017
    %v1023 = vmul.f32 1.0, %v1022
    %v1024 = vtanh.pop %v967
    %v1025 = vmul.f32 %v1023, %v905
    %1027 = vrot.lane.b32.xlu0 %v1024, 80
    %v1028 = vpop.permute.xlu0 %1027
    %v1030 = vmul.f32 %v1023, %v1028
    %1032 = vrot.lane.b32.xlu0 %v1030, 16
    %v1033 = vpop.permute.xlu0 %1032
    %v1035 = vadd.f32 %v1025, %v1033
    %v1036 = vtanh.pop %v1035
    %1038 = vrot.lane.b32.xlu0 %v1036, 16
    %v1039 = vpop.permute.xlu0 %1038
    %v1041 = vmul.f32 %v1023, %v1039
    %1043 = vrot.lane.b32.xlu0 %v1004, 96
    %v1044 = vpop.permute.xlu0 %1043
    %1046 = vst.msk [vmem:[#allocation2 + $0x10] sm:$0xff] %vm785, %v1044
    %1048 = vrot.lane.b32.xlu0 %v1041, 96
    %v1049 = vpop.permute.xlu0 %1048
    %1051 = vst.msk [vmem:[#allocation3 + $0x20] sm:$0xff] %vm785, %v1049
    %v1052 = vsel %vm785, %v1044, 0
    %1054 = vmatpush.msra.mxu0 0.0
    %1055 = vmatpush.msra.mxu0 0.0
    %1056 = vmatpush.msra.mxu0 0.0
    %1057 = vmatpush.msra.mxu0 0.0
    %1058 = vmatpush.msra.mxu0 0.0
    %1059 = vmatpush.msra.mxu0 0.0
    %1060 = vmatpush.msra.mxu0 0.0
    %1061 = vmatpush.msra.mxu0 0.0
    %1062 = vmatpush.msra.mxu0 0.0
    %1063 = vmatpush.msra.mxu0 0.0
    %1064 = vmatpush.msra.mxu0 0.0
    %1065 = vmatpush.msra.mxu0 0.0
    %1066 = vmatpush.msra.mxu0 0.0
    %1067 = vmatpush.msra.mxu0 0.0
    %1068 = vmatpush.msra.mxu0 %v704
    %1069 = vmatpush.msra.mxu0 %v703
    %1070 = vmatmul.f32.gmra.mxu0 %v1052
    %v1071 = vpop.f32.mrf.mxu0
    %v1072 = vadd.f32 0.0, %v1071
    %1073 = vdwg.mxu0
    %v1074 = vadd.f32 %v646, %v1072
    %v1075 = vsel %vm785, %v1049, 0
    %1077 = vmatpush.msra.mxu0 0.0
    %1078 = vmatpush.msra.mxu0 0.0
    %1079 = vmatpush.msra.mxu0 0.0
    %1080 = vmatpush.msra.mxu0 0.0
    %1081 = vmatpush.msra.mxu0 0.0
    %1082 = vmatpush.msra.mxu0 0.0
    %1083 = vmatpush.msra.mxu0 0.0
    %1084 = vmatpush.msra.mxu0 0.0
    %1085 = vmatpush.msra.mxu0 0.0
    %1086 = vmatpush.msra.mxu0 0.0
    %1087 = vmatpush.msra.mxu0 0.0
    %1088 = vmatpush.msra.mxu0 0.0
    %1089 = vmatpush.msra.mxu0 0.0
    %1090 = vmatpush.msra.mxu0 0.0
    %1091 = vmatpush.msra.mxu0 %v706
    %1092 = vmatpush.msra.mxu0 %v705
    %1093 = vmatmul.f32.gmra.mxu0 %v1075
    %v1094 = vpop.f32.mrf.mxu0
    %v1095 = vadd.f32 0.0, %v1094
    %1096 = vdwg.mxu0
    %v1097 = vadd.f32 %v692, %v1095
    %v1098 = vxor.u32 %v1074, 2147483648
    %v1099 = vmul.f32 %v1098, 1.442695
    %v1100 = vpow.pop %v1099
    %v1101 = vadd.f32 %v1100, 1.0
    %v1102 = vrcp.pop %v1101
    %v1103 = vmul.f32 %v1101, %v1102
    %v1104 = vsub.f32 1.0, %v1103
    %v1105 = vmul.f32 %v1102, %v1104
    %v1106 = vadd.f32 %v1102, %v1105
    %vm1107 = vweird.f32 %v1101
    %vm1108 = vweird.f32 %v1102
    %vm1109 = vmor %vm1107, %vm1108
    %v1110 = vsel %vm1109, %v1102, %v1106
    %v1111 = vand.u32 2147483647, %v1101
    %vm1112 = vcmp.eq.f32.partialorder %v1111, 8.507059e+37
    %v1113 = vand.u32 %v1101, 2147483648
    %v1114 = vor.u32 1.1754944e-38, %v1113
    %v1115 = vsel %vm1112, %v1114, %v1110
    %v1116 = vmul.f32 1.0, %v1115
    %v1117 = vtanh.pop %v1074
    %v1118 = vmul.f32 %v1116, %v998
    %1120 = vrot.lane.b32.xlu0 %v1117, 80
    %v1121 = vpop.permute.xlu0 %1120
    %v1123 = vmul.f32 %v1116, %v1121
    %1125 = vrot.lane.b32.xlu0 %v1123, 16
    %v1126 = vpop.permute.xlu0 %1125
    %v1128 = vadd.f32 %v1118, %v1126
    %v1129 = vtanh.pop %v1128
    %1131 = vrot.lane.b32.xlu0 %v1129, 16
    %v1132 = vpop.permute.xlu0 %1131
    %v1134 = vmul.f32 %v1116, %v1132
    %v1135 = vxor.u32 %v1097, 2147483648
    %v1136 = vmul.f32 %v1135, 1.442695
    %v1137 = vpow.pop %v1136
    %v1138 = vadd.f32 %v1137, 1.0
    %v1139 = vrcp.pop %v1138
    %v1140 = vmul.f32 %v1138, %v1139
    %v1141 = vsub.f32 1.0, %v1140
    %v1142 = vmul.f32 %v1139, %v1141
    %v1143 = vadd.f32 %v1139, %v1142
    %vm1144 = vweird.f32 %v1138
    %vm1145 = vweird.f32 %v1139
    %vm1146 = vmor %vm1144, %vm1145
    %v1147 = vsel %vm1146, %v1139, %v1143
    %v1148 = vand.u32 2147483647, %v1138
    %vm1149 = vcmp.eq.f32.partialorder %v1148, 8.507059e+37
    %v1150 = vand.u32 %v1138, 2147483648
    %v1151 = vor.u32 1.1754944e-38, %v1150
    %v1152 = vsel %vm1149, %v1151, %v1147
    %v1153 = vmul.f32 1.0, %v1152
    %v1154 = vtanh.pop %v1097
    %v1155 = vmul.f32 %v1153, %v1035
    %1157 = vrot.lane.b32.xlu0 %v1154, 80
    %v1158 = vpop.permute.xlu0 %1157
    %v1160 = vmul.f32 %v1153, %v1158
    %1162 = vrot.lane.b32.xlu0 %v1160, 16
    %v1163 = vpop.permute.xlu0 %1162
    %v1165 = vadd.f32 %v1155, %v1163
    %v1166 = vtanh.pop %v1165
    %1168 = vrot.lane.b32.xlu0 %v1166, 16
    %v1169 = vpop.permute.xlu0 %1168
    %v1171 = vmul.f32 %v1153, %v1169
    %1173 = vrot.lane.b32.xlu0 %v1134, 96
    %v1174 = vpop.permute.xlu0 %1173
    %1176 = vst.msk [vmem:[#allocation2 + $0x18] sm:$0xff] %vm785, %v1174
    %1178 = vrot.lane.b32.xlu0 %v1171, 96
    %v1179 = vpop.permute.xlu0 %1178
    %1181 = vst.msk [vmem:[#allocation3 + $0x18] sm:$0xff] %vm785, %v1179
    %v1182 = vsel %vm785, %v1174, 0
    %1184 = vmatpush.msra.mxu0 0.0
    %1185 = vmatpush.msra.mxu0 0.0
    %1186 = vmatpush.msra.mxu0 0.0
    %1187 = vmatpush.msra.mxu0 0.0
    %1188 = vmatpush.msra.mxu0 0.0
    %1189 = vmatpush.msra.mxu0 0.0
    %1190 = vmatpush.msra.mxu0 0.0
    %1191 = vmatpush.msra.mxu0 0.0
    %1192 = vmatpush.msra.mxu0 0.0
    %1193 = vmatpush.msra.mxu0 0.0
    %1194 = vmatpush.msra.mxu0 0.0
    %1195 = vmatpush.msra.mxu0 0.0
    %1196 = vmatpush.msra.mxu0 0.0
    %1197 = vmatpush.msra.mxu0 0.0
    %1198 = vmatpush.msra.mxu0 %v704
    %1199 = vmatpush.msra.mxu0 %v703
    %1200 = vmatmul.f32.gmra.mxu0 %v1182
    %v1201 = vpop.f32.mrf.mxu0
    %v1202 = vadd.f32 0.0, %v1201
    %1203 = vdwg.mxu0
    %v1204 = vadd.f32 %v649, %v1202
    %v1205 = vsel %vm785, %v1179, 0
    %1207 = vmatpush.msra.mxu0 0.0
    %1208 = vmatpush.msra.mxu0 0.0
    %1209 = vmatpush.msra.mxu0 0.0
    %1210 = vmatpush.msra.mxu0 0.0
    %1211 = vmatpush.msra.mxu0 0.0
    %1212 = vmatpush.msra.mxu0 0.0
    %1213 = vmatpush.msra.mxu0 0.0
    %1214 = vmatpush.msra.mxu0 0.0
    %1215 = vmatpush.msra.mxu0 0.0
    %1216 = vmatpush.msra.mxu0 0.0
    %1217 = vmatpush.msra.mxu0 0.0
    %1218 = vmatpush.msra.mxu0 0.0
    %1219 = vmatpush.msra.mxu0 0.0
    %1220 = vmatpush.msra.mxu0 0.0
    %1221 = vmatpush.msra.mxu0 %v706
    %1222 = vmatpush.msra.mxu0 %v705
    %1223 = vmatmul.f32.gmra.mxu0 %v1205
    %v1224 = vpop.f32.mrf.mxu0
    %v1225 = vadd.f32 0.0, %v1224
    %1226 = vdwg.mxu0
    %v1227 = vadd.f32 %v689, %v1225
    %v1228 = vxor.u32 %v1204, 2147483648
    %v1229 = vmul.f32 %v1228, 1.442695
    %v1230 = vpow.pop %v1229
    %v1231 = vadd.f32 %v1230, 1.0
    %v1232 = vrcp.pop %v1231
    %v1233 = vmul.f32 %v1231, %v1232
    %v1234 = vsub.f32 1.0, %v1233
    %v1235 = vmul.f32 %v1232, %v1234
    %v1236 = vadd.f32 %v1232, %v1235
    %vm1237 = vweird.f32 %v1231
    %vm1238 = vweird.f32 %v1232
    %vm1239 = vmor %vm1237, %vm1238
    %v1240 = vsel %vm1239, %v1232, %v1236
    %v1241 = vand.u32 2147483647, %v1231
    %vm1242 = vcmp.eq.f32.partialorder %v1241, 8.507059e+37
    %v1243 = vand.u32 %v1231, 2147483648
    %v1244 = vor.u32 1.1754944e-38, %v1243
    %v1245 = vsel %vm1242, %v1244, %v1240
    %v1246 = vmul.f32 1.0, %v1245
    %v1247 = vtanh.pop %v1204
    %v1248 = vmul.f32 %v1246, %v1128
    %1250 = vrot.lane.b32.xlu0 %v1247, 80
    %v1251 = vpop.permute.xlu0 %1250
    %v1253 = vmul.f32 %v1246, %v1251
    %1255 = vrot.lane.b32.xlu0 %v1253, 16
    %v1256 = vpop.permute.xlu0 %1255
    %v1258 = vadd.f32 %v1248, %v1256
    %v1259 = vtanh.pop %v1258
    %1261 = vrot.lane.b32.xlu0 %v1259, 16
    %v1262 = vpop.permute.xlu0 %1261
    %v1264 = vmul.f32 %v1246, %v1262
    %v1265 = vxor.u32 %v1227, 2147483648
    %v1266 = vmul.f32 %v1265, 1.442695
    %v1267 = vpow.pop %v1266
    %v1268 = vadd.f32 %v1267, 1.0
    %v1269 = vrcp.pop %v1268
    %v1270 = vmul.f32 %v1268, %v1269
    %v1271 = vsub.f32 1.0, %v1270
    %v1272 = vmul.f32 %v1269, %v1271
    %v1273 = vadd.f32 %v1269, %v1272
    %vm1274 = vweird.f32 %v1268
    %vm1275 = vweird.f32 %v1269
    %vm1276 = vmor %vm1274, %vm1275
    %v1277 = vsel %vm1276, %v1269, %v1273
    %v1278 = vand.u32 2147483647, %v1268
    %vm1279 = vcmp.eq.f32.partialorder %v1278, 8.507059e+37
    %v1280 = vand.u32 %v1268, 2147483648
    %v1281 = vor.u32 1.1754944e-38, %v1280
    %v1282 = vsel %vm1279, %v1281, %v1277
    %v1283 = vmul.f32 1.0, %v1282
    %v1284 = vtanh.pop %v1227
    %v1285 = vmul.f32 %v1283, %v1165
    %1287 = vrot.lane.b32.xlu0 %v1284, 80
    %v1288 = vpop.permute.xlu0 %1287
    %v1290 = vmul.f32 %v1283, %v1288
    %1292 = vrot.lane.b32.xlu0 %v1290, 16
    %v1293 = vpop.permute.xlu0 %1292
    %v1295 = vadd.f32 %v1285, %v1293
    %v1296 = vtanh.pop %v1295
    %1298 = vrot.lane.b32.xlu0 %v1296, 16
    %v1299 = vpop.permute.xlu0 %1298
    %v1301 = vmul.f32 %v1283, %v1299
    %1303 = vrot.lane.b32.xlu0 %v1264, 96
    %v1304 = vpop.permute.xlu0 %1303
    %1306 = vst.msk [vmem:[#allocation2 + $0x20] sm:$0xff] %vm785, %v1304
    %1308 = vrot.lane.b32.xlu0 %v1301, 96
    %v1309 = vpop.permute.xlu0 %1308
    %1311 = vst.msk [vmem:[#allocation3 + $0x10] sm:$0xff] %vm785, %v1309
    %v1312 = vsel %vm785, %v1304, 0
    %1314 = vmatpush.msra.mxu0 0.0
    %1315 = vmatpush.msra.mxu0 0.0
    %1316 = vmatpush.msra.mxu0 0.0
    %1317 = vmatpush.msra.mxu0 0.0
    %1318 = vmatpush.msra.mxu0 0.0
    %1319 = vmatpush.msra.mxu0 0.0
    %1320 = vmatpush.msra.mxu0 0.0
    %1321 = vmatpush.msra.mxu0 0.0
    %1322 = vmatpush.msra.mxu0 0.0
    %1323 = vmatpush.msra.mxu0 0.0
    %1324 = vmatpush.msra.mxu0 0.0
    %1325 = vmatpush.msra.mxu0 0.0
    %1326 = vmatpush.msra.mxu0 0.0
    %1327 = vmatpush.msra.mxu0 0.0
    %1328 = vmatpush.msra.mxu0 %v704
    %1329 = vmatpush.msra.mxu0 %v703
    %1330 = vmatmul.f32.gmra.mxu0 %v1312
    %v1331 = vpop.f32.mrf.mxu0
    %v1332 = vadd.f32 0.0, %v1331
    %1333 = vdwg.mxu0
    %v1334 = vadd.f32 %v652, %v1332
    %v1335 = vsel %vm785, %v1309, 0
    %1337 = vmatpush.msra.mxu0 0.0
    %1338 = vmatpush.msra.mxu0 0.0
    %1339 = vmatpush.msra.mxu0 0.0
    %1340 = vmatpush.msra.mxu0 0.0
    %1341 = vmatpush.msra.mxu0 0.0
    %1342 = vmatpush.msra.mxu0 0.0
    %1343 = vmatpush.msra.mxu0 0.0
    %1344 = vmatpush.msra.mxu0 0.0
    %1345 = vmatpush.msra.mxu0 0.0
    %1346 = vmatpush.msra.mxu0 0.0
    %1347 = vmatpush.msra.mxu0 0.0
    %1348 = vmatpush.msra.mxu0 0.0
    %1349 = vmatpush.msra.mxu0 0.0
    %1350 = vmatpush.msra.mxu0 0.0
    %1351 = vmatpush.msra.mxu0 %v706
    %1352 = vmatpush.msra.mxu0 %v705
    %1353 = vmatmul.f32.gmra.mxu0 %v1335
    %v1354 = vpop.f32.mrf.mxu0
    %v1355 = vadd.f32 0.0, %v1354
    %1356 = vdwg.mxu0
    %v1357 = vadd.f32 %v686, %v1355
    %v1358 = vxor.u32 %v1334, 2147483648
    %v1359 = vmul.f32 %v1358, 1.442695
    %v1360 = vpow.pop %v1359
    %v1361 = vadd.f32 %v1360, 1.0
    %v1362 = vrcp.pop %v1361
    %v1363 = vmul.f32 %v1361, %v1362
    %v1364 = vsub.f32 1.0, %v1363
    %v1365 = vmul.f32 %v1362, %v1364
    %v1366 = vadd.f32 %v1362, %v1365
    %vm1367 = vweird.f32 %v1361
    %vm1368 = vweird.f32 %v1362
    %vm1369 = vmor %vm1367, %vm1368
    %v1370 = vsel %vm1369, %v1362, %v1366
    %v1371 = vand.u32 2147483647, %v1361
    %vm1372 = vcmp.eq.f32.partialorder %v1371, 8.507059e+37
    %v1373 = vand.u32 %v1361, 2147483648
    %v1374 = vor.u32 1.1754944e-38, %v1373
    %v1375 = vsel %vm1372, %v1374, %v1370
    %v1376 = vmul.f32 1.0, %v1375
    %v1377 = vtanh.pop %v1334
    %v1378 = vmul.f32 %v1376, %v1258
    %1380 = vrot.lane.b32.xlu0 %v1377, 80
    %v1381 = vpop.permute.xlu0 %1380
    %v1383 = vmul.f32 %v1376, %v1381
    %1385 = vrot.lane.b32.xlu0 %v1383, 16
    %v1386 = vpop.permute.xlu0 %1385
    %v1388 = vadd.f32 %v1378, %v1386
    %v1389 = vtanh.pop %v1388
    %1391 = vrot.lane.b32.xlu0 %v1389, 16
    %v1392 = vpop.permute.xlu0 %1391
    %v1394 = vmul.f32 %v1376, %v1392
    %v1395 = vxor.u32 %v1357, 2147483648
    %v1396 = vmul.f32 %v1395, 1.442695
    %v1397 = vpow.pop %v1396
    %v1398 = vadd.f32 %v1397, 1.0
    %v1399 = vrcp.pop %v1398
    %v1400 = vmul.f32 %v1398, %v1399
    %v1401 = vsub.f32 1.0, %v1400
    %v1402 = vmul.f32 %v1399, %v1401
    %v1403 = vadd.f32 %v1399, %v1402
    %vm1404 = vweird.f32 %v1398
    %vm1405 = vweird.f32 %v1399
    %vm1406 = vmor %vm1404, %vm1405
    %v1407 = vsel %vm1406, %v1399, %v1403
    %v1408 = vand.u32 2147483647, %v1398
    %vm1409 = vcmp.eq.f32.partialorder %v1408, 8.507059e+37
    %v1410 = vand.u32 %v1398, 2147483648
    %v1411 = vor.u32 1.1754944e-38, %v1410
    %v1412 = vsel %vm1409, %v1411, %v1407
    %v1413 = vmul.f32 1.0, %v1412
    %v1414 = vtanh.pop %v1357
    %v1415 = vmul.f32 %v1413, %v1295
    %1417 = vrot.lane.b32.xlu0 %v1414, 80
    %v1418 = vpop.permute.xlu0 %1417
    %v1420 = vmul.f32 %v1413, %v1418
    %1422 = vrot.lane.b32.xlu0 %v1420, 16
    %v1423 = vpop.permute.xlu0 %1422
    %v1425 = vadd.f32 %v1415, %v1423
    %v1426 = vtanh.pop %v1425
    %1428 = vrot.lane.b32.xlu0 %v1426, 16
    %v1429 = vpop.permute.xlu0 %1428
    %v1431 = vmul.f32 %v1413, %v1429
    %1433 = vrot.lane.b32.xlu0 %v1394, 96
    %v1434 = vpop.permute.xlu0 %1433
    %1436 = vst.msk [vmem:[#allocation2 + $0x28] sm:$0xff] %vm785, %v1434
    %1438 = vrot.lane.b32.xlu0 %v1431, 96
    %v1439 = vpop.permute.xlu0 %1438
    %1441 = vst.msk [vmem:[#allocation3 + $0x8] sm:$0xff] %vm785, %v1439
    %v1442 = vsel %vm785, %v1434, 0
    %1444 = vmatpush.msra.mxu0 0.0
    %1445 = vmatpush.msra.mxu0 0.0
    %1446 = vmatpush.msra.mxu0 0.0
    %1447 = vmatpush.msra.mxu0 0.0
    %1448 = vmatpush.msra.mxu0 0.0
    %1449 = vmatpush.msra.mxu0 0.0
    %1450 = vmatpush.msra.mxu0 0.0
    %1451 = vmatpush.msra.mxu0 0.0
    %1452 = vmatpush.msra.mxu0 0.0
    %1453 = vmatpush.msra.mxu0 0.0
    %1454 = vmatpush.msra.mxu0 0.0
    %1455 = vmatpush.msra.mxu0 0.0
    %1456 = vmatpush.msra.mxu0 0.0
    %1457 = vmatpush.msra.mxu0 0.0
    %1458 = vmatpush.msra.mxu0 %v704
    %1459 = vmatpush.msra.mxu0 %v703
    %1460 = vmatmul.f32.gmra.mxu0 %v1442
    %v1461 = vpop.f32.mrf.mxu0
    %v1462 = vadd.f32 0.0, %v1461
    %1463 = vdwg.mxu0
    %v1464 = vadd.f32 %v655, %v1462
    %v1465 = vsel %vm785, %v1439, 0
    %1467 = vmatpush.msra.mxu0 0.0
    %1468 = vmatpush.msra.mxu0 0.0
    %1469 = vmatpush.msra.mxu0 0.0
    %1470 = vmatpush.msra.mxu0 0.0
    %1471 = vmatpush.msra.mxu0 0.0
    %1472 = vmatpush.msra.mxu0 0.0
    %1473 = vmatpush.msra.mxu0 0.0
    %1474 = vmatpush.msra.mxu0 0.0
    %1475 = vmatpush.msra.mxu0 0.0
    %1476 = vmatpush.msra.mxu0 0.0
    %1477 = vmatpush.msra.mxu0 0.0
    %1478 = vmatpush.msra.mxu0 0.0
    %1479 = vmatpush.msra.mxu0 0.0
    %1480 = vmatpush.msra.mxu0 0.0
    %1481 = vmatpush.msra.mxu0 %v706
    %1482 = vmatpush.msra.mxu0 %v705
    %1483 = vmatmul.f32.gmra.mxu0 %v1465
    %v1484 = vpop.f32.mrf.mxu0
    %v1485 = vadd.f32 0.0, %v1484
    %1486 = vdwg.mxu0
    %v1487 = vadd.f32 %v683, %v1485
    %v1488 = vxor.u32 %v1464, 2147483648
    %v1489 = vmul.f32 %v1488, 1.442695
    %v1490 = vpow.pop %v1489
    %v1491 = vadd.f32 %v1490, 1.0
    %v1492 = vrcp.pop %v1491
    %v1493 = vmul.f32 %v1491, %v1492
    %v1494 = vsub.f32 1.0, %v1493
    %v1495 = vmul.f32 %v1492, %v1494
    %v1496 = vadd.f32 %v1492, %v1495
    %vm1497 = vweird.f32 %v1491
    %vm1498 = vweird.f32 %v1492
    %vm1499 = vmor %vm1497, %vm1498
    %v1500 = vsel %vm1499, %v1492, %v1496
    %v1501 = vand.u32 2147483647, %v1491
    %vm1502 = vcmp.eq.f32.partialorder %v1501, 8.507059e+37
    %v1503 = vand.u32 %v1491, 2147483648
    %v1504 = vor.u32 1.1754944e-38, %v1503
    %v1505 = vsel %vm1502, %v1504, %v1500
    %v1506 = vmul.f32 1.0, %v1505
    %v1507 = vtanh.pop %v1464
    %v1508 = vmul.f32 %v1506, %v1388
    %1510 = vrot.lane.b32.xlu0 %v1507, 80
    %v1511 = vpop.permute.xlu0 %1510
    %v1513 = vmul.f32 %v1506, %v1511
    %1515 = vrot.lane.b32.xlu0 %v1513, 16
    %v1516 = vpop.permute.xlu0 %1515
    %v1518 = vadd.f32 %v1508, %v1516
    %v1519 = vtanh.pop %v1518
    %1521 = vrot.lane.b32.xlu0 %v1519, 16
    %v1522 = vpop.permute.xlu0 %1521
    %v1524 = vmul.f32 %v1506, %v1522
    %v1525 = vxor.u32 %v1487, 2147483648
    %v1526 = vmul.f32 %v1525, 1.442695
    %v1527 = vpow.pop %v1526
    %v1528 = vadd.f32 %v1527, 1.0
    %v1529 = vrcp.pop %v1528
    %v1530 = vmul.f32 %v1528, %v1529
    %v1531 = vsub.f32 1.0, %v1530
    %v1532 = vmul.f32 %v1529, %v1531
    %v1533 = vadd.f32 %v1529, %v1532
    %vm1534 = vweird.f32 %v1528
    %vm1535 = vweird.f32 %v1529
    %vm1536 = vmor %vm1534, %vm1535
    %v1537 = vsel %vm1536, %v1529, %v1533
    %v1538 = vand.u32 2147483647, %v1528
    %vm1539 = vcmp.eq.f32.partialorder %v1538, 8.507059e+37
    %v1540 = vand.u32 %v1528, 2147483648
    %v1541 = vor.u32 1.1754944e-38, %v1540
    %v1542 = vsel %vm1539, %v1541, %v1537
    %v1543 = vmul.f32 1.0, %v1542
    %v1544 = vtanh.pop %v1487
    %v1545 = vmul.f32 %v1543, %v1425
    %1547 = vrot.lane.b32.xlu0 %v1544, 80
    %v1548 = vpop.permute.xlu0 %1547
    %v1550 = vmul.f32 %v1543, %v1548
    %1552 = vrot.lane.b32.xlu0 %v1550, 16
    %v1553 = vpop.permute.xlu0 %1552
    %v1555 = vadd.f32 %v1545, %v1553
    %v1556 = vtanh.pop %v1555
    %1558 = vrot.lane.b32.xlu0 %v1556, 16
    %v1559 = vpop.permute.xlu0 %1558
    %v1561 = vmul.f32 %v1543, %v1559
    %1563 = vrot.lane.b32.xlu0 %v1524, 96
    %v1564 = vpop.permute.xlu0 %1563
    %1566 = vst.msk [vmem:[#allocation2 + $0x30] sm:$0xff] %vm785, %v1564
    %1568 = vrot.lane.b32.xlu0 %v1561, 96
    %v1569 = vpop.permute.xlu0 %1568
    %1571 = vst.msk [vmem:[#allocation3] sm:$0xff] %vm785, %v1569
    %v1572 = vld [vmem:[#allocation2] sm:$0xff]
    %v1573 = vld [vmem:[#allocation2 + $0x8] sm:$0xff]
    %v1574 = vld [vmem:[#allocation2 + $0x10] sm:$0xff]
    %v1575 = vld [vmem:[#allocation2 + $0x18] sm:$0xff]
    %v1576 = vld [vmem:[#allocation2 + $0x20] sm:$0xff]
    %v1577 = vld [vmem:[#allocation2 + $0x28] sm:$0xff]
    %v1578 = vld [vmem:[#allocation2 + $0x30] sm:$0xff]
    %v1579 = vld [vmem:[#allocation3] sm:$0xff]
    %v1580 = vld [vmem:[#allocation3 + $0x8] sm:$0xff]
    %v1581 = vld [vmem:[#allocation3 + $0x10] sm:$0xff]
    %v1582 = vld [vmem:[#allocation3 + $0x18] sm:$0xff]
    %v1583 = vld [vmem:[#allocation3 + $0x20] sm:$0xff]
    %v1584 = vld [vmem:[#allocation3 + $0x28] sm:$0xff]
    %v1585 = vld [vmem:[#allocation3 + $0x30] sm:$0xff]
    %v1586 = vld [vmem:[%s25] sm:$0xff]
    %v1587 = vld [vmem:[%s25 + $0x8] sm:$0xff]
    %v1588 = vld [vmem:[%s25 + $0x10] sm:$0xff]
    %v1589 = vld [vmem:[%s25 + $0x18] sm:$0xff]
    %v1590 = vld [vmem:[%s27] sm:$0xff]
    %v1591 = vld [vmem:[%s27 + $0x8] sm:$0xff]
    %v1592 = vld [vmem:[%s27 + $0x10] sm:$0xff]
    %v1593 = vld [vmem:[%s27 + $0x18] sm:$0xff]
    %v1595 = vsel %vm785, %v1579, 0
    %v1598 = vsel %vm785, %v1580, 0
    %v1601 = vsel %vm785, %v1581, 0
    %v1604 = vsel %vm785, %v1582, 0
    %v1607 = vsel %vm785, %v1583, 0
    %v1610 = vsel %vm785, %v1584, 0
    %v1613 = vsel %vm785, %v1585, 0
    %1615 = vmatpush.msra.mxu0 0.0
    %1616 = vmatpush.msra.mxu0 0.0
    %1617 = vmatpush.msra.mxu0 0.0
    %1618 = vmatpush.msra.mxu0 0.0
    %1619 = vmatpush.msra.mxu0 0.0
    %1620 = vmatpush.msra.mxu0 0.0
    %1621 = vmatpush.msra.mxu0 0.0
    %1622 = vmatpush.msra.mxu0 0.0
    %1623 = vmatpush.msra.mxu0 0.0
    %1624 = vmatpush.msra.mxu0 0.0
    %1625 = vmatpush.msra.mxu0 0.0
    %1626 = vmatpush.msra.mxu0 0.0
    %1627 = vmatpush.msra.mxu0 0.0
    %1628 = vmatpush.msra.mxu0 0.0
    %1629 = vmatpush.msra.mxu0 %v1589
    %1630 = vmatpush.msra.mxu0 %v1588
    %1631 = vmatmul.f32.gmra.mxu0 %v1595
    %v1632 = vpop.f32.mrf.mxu0
    %v1633 = vadd.f32 0.0, %v1632
    %1634 = vmatmul.f32.gmra.mxu0 %v1598
    %v1635 = vpop.f32.mrf.mxu0
    %v1636 = vadd.f32 0.0, %v1635
    %1637 = vmatmul.f32.gmra.mxu0 %v1601
    %v1638 = vpop.f32.mrf.mxu0
    %v1639 = vadd.f32 0.0, %v1638
    %1640 = vmatmul.f32.gmra.mxu0 %v1604
    %v1641 = vpop.f32.mrf.mxu0
    %v1642 = vadd.f32 0.0, %v1641
    %1643 = vmatmul.f32.gmra.mxu0 %v1607
    %v1644 = vpop.f32.mrf.mxu0
    %v1645 = vadd.f32 0.0, %v1644
    %1646 = vmatmul.f32.gmra.mxu0 %v1610
    %v1647 = vpop.f32.mrf.mxu0
    %v1648 = vadd.f32 0.0, %v1647
    %1649 = vmatmul.f32.gmra.mxu0 %v1613
    %v1650 = vpop.f32.mrf.mxu0
    %v1651 = vadd.f32 0.0, %v1650
    %1652 = vdwg.mxu0
    %v1654 = vsel %vm785, %v1572, 0
    %v1657 = vsel %vm785, %v1573, 0
    %v1660 = vsel %vm785, %v1574, 0
    %v1663 = vsel %vm785, %v1575, 0
    %v1666 = vsel %vm785, %v1576, 0
    %v1669 = vsel %vm785, %v1577, 0
    %v1672 = vsel %vm785, %v1578, 0
    %1674 = vmatpush.msra.mxu0 0.0
    %1675 = vmatpush.msra.mxu0 0.0
    %1676 = vmatpush.msra.mxu0 0.0
    %1677 = vmatpush.msra.mxu0 0.0
    %1678 = vmatpush.msra.mxu0 0.0
    %1679 = vmatpush.msra.mxu0 0.0
    %1680 = vmatpush.msra.mxu0 0.0
    %1681 = vmatpush.msra.mxu0 0.0
    %1682 = vmatpush.msra.mxu0 0.0
    %1683 = vmatpush.msra.mxu0 0.0
    %1684 = vmatpush.msra.mxu0 0.0
    %1685 = vmatpush.msra.mxu0 0.0
    %1686 = vmatpush.msra.mxu0 0.0
    %1687 = vmatpush.msra.mxu0 0.0
    %1688 = vmatpush.msra.mxu0 %v1587
    %1689 = vmatpush.msra.mxu0 %v1586
    %1690 = vmatmul.f32.gmra.mxu0 %v1654
    %v1691 = vpop.f32.mrf.mxu0
    %v1692 = vadd.f32 %v1633, %v1691
    %1693 = vmatmul.f32.gmra.mxu0 %v1657
    %v1694 = vpop.f32.mrf.mxu0
    %v1695 = vadd.f32 %v1636, %v1694
    %1696 = vmatmul.f32.gmra.mxu0 %v1660
    %v1697 = vpop.f32.mrf.mxu0
    %v1698 = vadd.f32 %v1639, %v1697
    %1699 = vmatmul.f32.gmra.mxu0 %v1663
    %v1700 = vpop.f32.mrf.mxu0
    %v1701 = vadd.f32 %v1642, %v1700
    %1702 = vmatmul.f32.gmra.mxu0 %v1666
    %v1703 = vpop.f32.mrf.mxu0
    %v1704 = vadd.f32 %v1645, %v1703
    %1705 = vmatmul.f32.gmra.mxu0 %v1669
    %v1706 = vpop.f32.mrf.mxu0
    %v1707 = vadd.f32 %v1648, %v1706
    %1708 = vmatmul.f32.gmra.mxu0 %v1672
    %v1709 = vpop.f32.mrf.mxu0
    %v1710 = vadd.f32 %v1651, %v1709
    %1711 = vdwg.mxu0
    %v1712 = vld [vmem:[%s33] sm:$0x1]
    %v1714 = vperm.slane %v1712, 0
    %v1716 = vadd.f32 %v1692, %v1714
    %v1717 = vadd.f32 %v1695, %v1714
    %v1718 = vadd.f32 %v1698, %v1714
    %v1719 = vadd.f32 %v1701, %v1714
    %v1720 = vadd.f32 %v1704, %v1714
    %v1721 = vadd.f32 %v1707, %v1714
    %v1722 = vadd.f32 %v1710, %v1714
    %1723 = vmatpush.msra.mxu0 0.0
    %1724 = vmatpush.msra.mxu0 0.0
    %1725 = vmatpush.msra.mxu0 0.0
    %1726 = vmatpush.msra.mxu0 0.0
    %1727 = vmatpush.msra.mxu0 0.0
    %1728 = vmatpush.msra.mxu0 0.0
    %1729 = vmatpush.msra.mxu0 0.0
    %1730 = vmatpush.msra.mxu0 0.0
    %1731 = vmatpush.msra.mxu0 0.0
    %1732 = vmatpush.msra.mxu0 0.0
    %1733 = vmatpush.msra.mxu0 0.0
    %1734 = vmatpush.msra.mxu0 0.0
    %1735 = vmatpush.msra.mxu0 0.0
    %1736 = vmatpush.msra.mxu0 0.0
    %1737 = vmatpush.msra.mxu0 %v1593
    %1738 = vmatpush.msra.mxu0 %v1592
    %1739 = vmatmul.f32.gmra.mxu0 %v1595
    %v1740 = vpop.f32.mrf.mxu0
    %v1741 = vadd.f32 0.0, %v1740
    %1742 = vmatmul.f32.gmra.mxu0 %v1598
    %v1743 = vpop.f32.mrf.mxu0
    %v1744 = vadd.f32 0.0, %v1743
    %1745 = vmatmul.f32.gmra.mxu0 %v1601
    %v1746 = vpop.f32.mrf.mxu0
    %v1747 = vadd.f32 0.0, %v1746
    %1748 = vmatmul.f32.gmra.mxu0 %v1604
    %v1749 = vpop.f32.mrf.mxu0
    %v1750 = vadd.f32 0.0, %v1749
    %1751 = vmatmul.f32.gmra.mxu0 %v1607
    %v1752 = vpop.f32.mrf.mxu0
    %v1753 = vadd.f32 0.0, %v1752
    %1754 = vmatmul.f32.gmra.mxu0 %v1610
    %v1755 = vpop.f32.mrf.mxu0
    %v1756 = vadd.f32 0.0, %v1755
    %1757 = vmatmul.f32.gmra.mxu0 %v1613
    %v1758 = vpop.f32.mrf.mxu0
    %v1759 = vadd.f32 0.0, %v1758
    %1760 = vdwg.mxu0
    %1761 = vmatpush.msra.mxu0 0.0
    %1762 = vmatpush.msra.mxu0 0.0
    %1763 = vmatpush.msra.mxu0 0.0
    %1764 = vmatpush.msra.mxu0 0.0
    %1765 = vmatpush.msra.mxu0 0.0
    %1766 = vmatpush.msra.mxu0 0.0
    %1767 = vmatpush.msra.mxu0 0.0
    %1768 = vmatpush.msra.mxu0 0.0
    %1769 = vmatpush.msra.mxu0 0.0
    %1770 = vmatpush.msra.mxu0 0.0
    %1771 = vmatpush.msra.mxu0 0.0
    %1772 = vmatpush.msra.mxu0 0.0
    %1773 = vmatpush.msra.mxu0 0.0
    %1774 = vmatpush.msra.mxu0 0.0
    %1775 = vmatpush.msra.mxu0 %v1591
    %1776 = vmatpush.msra.mxu0 %v1590
    %1777 = vmatmul.f32.gmra.mxu0 %v1654
    %v1778 = vpop.f32.mrf.mxu0
    %v1779 = vadd.f32 %v1741, %v1778
    %1780 = vmatmul.f32.gmra.mxu0 %v1657
    %v1781 = vpop.f32.mrf.mxu0
    %v1782 = vadd.f32 %v1744, %v1781
    %1783 = vmatmul.f32.gmra.mxu0 %v1660
    %v1784 = vpop.f32.mrf.mxu0
    %v1785 = vadd.f32 %v1747, %v1784
    %1786 = vmatmul.f32.gmra.mxu0 %v1663
    %v1787 = vpop.f32.mrf.mxu0
    %v1788 = vadd.f32 %v1750, %v1787
    %1789 = vmatmul.f32.gmra.mxu0 %v1666
    %v1790 = vpop.f32.mrf.mxu0
    %v1791 = vadd.f32 %v1753, %v1790
    %1792 = vmatmul.f32.gmra.mxu0 %v1669
    %v1793 = vpop.f32.mrf.mxu0
    %v1794 = vadd.f32 %v1756, %v1793
    %1795 = vmatmul.f32.gmra.mxu0 %v1672
    %v1796 = vpop.f32.mrf.mxu0
    %v1797 = vadd.f32 %v1759, %v1796
    %1798 = vdwg.mxu0
    %v1799 = vld [vmem:[%s35] sm:$0x1]
    %v1801 = vperm.slane %v1799, 0
    %v1803 = vadd.f32 %v1779, %v1801
    %v1804 = vadd.f32 %v1782, %v1801
    %v1805 = vadd.f32 %v1785, %v1801
    %v1806 = vadd.f32 %v1788, %v1801
    %v1807 = vadd.f32 %v1791, %v1801
    %v1808 = vadd.f32 %v1794, %v1801
    %v1809 = vadd.f32 %v1797, %v1801
    %v1810 = vld [vmem:[%s29] sm:$0xff]
    %v1811 = vld [vmem:[%s29 + $0x8] sm:$0xff]
    %v1812 = vld [vmem:[%s31] sm:$0xff]
    %v1813 = vld [vmem:[%s31 + $0x8] sm:$0xff]
    %v1814 = vxor.u32 %v1716, 2147483648
    %v1815 = vmul.f32 %v1814, 1.442695
    %v1816 = vpow.pop %v1815
    %v1817 = vadd.f32 %v1816, 1.0
    %v1818 = vrcp.pop %v1817
    %v1819 = vmul.f32 %v1817, %v1818
    %v1820 = vsub.f32 1.0, %v1819
    %v1821 = vmul.f32 %v1818, %v1820
    %v1822 = vadd.f32 %v1818, %v1821
    %vm1823 = vweird.f32 %v1817
    %vm1824 = vweird.f32 %v1818
    %vm1825 = vmor %vm1823, %vm1824
    %v1826 = vsel %vm1825, %v1818, %v1822
    %v1827 = vand.u32 2147483647, %v1817
    %vm1828 = vcmp.eq.f32.partialorder %v1827, 8.507059e+37
    %v1829 = vand.u32 %v1817, 2147483648
    %v1830 = vor.u32 1.1754944e-38, %v1829
    %v1831 = vsel %vm1828, %v1830, %v1826
    %v1832 = vmul.f32 1.0, %v1831
    %v1833 = vtanh.pop %v1716
    %v1834 = vmul.f32 %v1832, 0.0
    %1836 = vrot.lane.b32.xlu0 %v1833, 80
    %v1837 = vpop.permute.xlu0 %1836
    %v1839 = vmul.f32 %v1832, %v1837
    %1841 = vrot.lane.b32.xlu0 %v1839, 16
    %v1842 = vpop.permute.xlu0 %1841
    %v1844 = vadd.f32 %v1834, %v1842
    %v1845 = vtanh.pop %v1844
    %1847 = vrot.lane.b32.xlu0 %v1845, 16
    %v1848 = vpop.permute.xlu0 %1847
    %v1850 = vmul.f32 %v1832, %v1848
    %v1851 = vxor.u32 %v1809, 2147483648
    %v1852 = vmul.f32 %v1851, 1.442695
    %v1853 = vpow.pop %v1852
    %v1854 = vadd.f32 %v1853, 1.0
    %v1855 = vrcp.pop %v1854
    %v1856 = vmul.f32 %v1854, %v1855
    %v1857 = vsub.f32 1.0, %v1856
    %v1858 = vmul.f32 %v1855, %v1857
    %v1859 = vadd.f32 %v1855, %v1858
    %vm1860 = vweird.f32 %v1854
    %vm1861 = vweird.f32 %v1855
    %vm1862 = vmor %vm1860, %vm1861
    %v1863 = vsel %vm1862, %v1855, %v1859
    %v1864 = vand.u32 2147483647, %v1854
    %vm1865 = vcmp.eq.f32.partialorder %v1864, 8.507059e+37
    %v1866 = vand.u32 %v1854, 2147483648
    %v1867 = vor.u32 1.1754944e-38, %v1866
    %v1868 = vsel %vm1865, %v1867, %v1863
    %v1869 = vmul.f32 1.0, %v1868
    %v1870 = vtanh.pop %v1809
    %v1871 = vmul.f32 %v1869, 0.0
    %1873 = vrot.lane.b32.xlu0 %v1870, 80
    %v1874 = vpop.permute.xlu0 %1873
    %v1876 = vmul.f32 %v1869, %v1874
    %1878 = vrot.lane.b32.xlu0 %v1876, 16
    %v1879 = vpop.permute.xlu0 %1878
    %v1881 = vadd.f32 %v1871, %v1879
    %v1882 = vtanh.pop %v1881
    %1884 = vrot.lane.b32.xlu0 %v1882, 16
    %v1885 = vpop.permute.xlu0 %1884
    %v1887 = vmul.f32 %v1869, %v1885
    %v1888 = vadd.f32 %v1850, 0.0
    %v1889 = vadd.f32 %v1887, 0.0
    %1891 = vrot.lane.b32.xlu0 %v1850, 96
    %v1892 = vpop.permute.xlu0 %1891
    %v1893 = vsel %vm785, %v1892, 0
    %1895 = vmatpush.msra.mxu0 0.0
    %1896 = vmatpush.msra.mxu0 0.0
    %1897 = vmatpush.msra.mxu0 0.0
    %1898 = vmatpush.msra.mxu0 0.0
    %1899 = vmatpush.msra.mxu0 0.0
    %1900 = vmatpush.msra.mxu0 0.0
    %1901 = vmatpush.msra.mxu0 0.0
    %1902 = vmatpush.msra.mxu0 0.0
    %1903 = vmatpush.msra.mxu0 0.0
    %1904 = vmatpush.msra.mxu0 0.0
    %1905 = vmatpush.msra.mxu0 0.0
    %1906 = vmatpush.msra.mxu0 0.0
    %1907 = vmatpush.msra.mxu0 0.0
    %1908 = vmatpush.msra.mxu0 0.0
    %1909 = vmatpush.msra.mxu0 %v1811
    %1910 = vmatpush.msra.mxu0 %v1810
    %1911 = vmatmul.f32.gmra.mxu0 %v1893
    %v1912 = vpop.f32.mrf.mxu0
    %v1913 = vadd.f32 0.0, %v1912
    %1914 = vdwg.mxu0
    %v1915 = vadd.f32 %v1717, %v1913
    %1917 = vrot.lane.b32.xlu0 %v1887, 96
    %v1918 = vpop.permute.xlu0 %1917
    %v1919 = vsel %vm785, %v1918, 0
    %1921 = vmatpush.msra.mxu0 0.0
    %1922 = vmatpush.msra.mxu0 0.0
    %1923 = vmatpush.msra.mxu0 0.0
    %1924 = vmatpush.msra.mxu0 0.0
    %1925 = vmatpush.msra.mxu0 0.0
    %1926 = vmatpush.msra.mxu0 0.0
    %1927 = vmatpush.msra.mxu0 0.0
    %1928 = vmatpush.msra.mxu0 0.0
    %1929 = vmatpush.msra.mxu0 0.0
    %1930 = vmatpush.msra.mxu0 0.0
    %1931 = vmatpush.msra.mxu0 0.0
    %1932 = vmatpush.msra.mxu0 0.0
    %1933 = vmatpush.msra.mxu0 0.0
    %1934 = vmatpush.msra.mxu0 0.0
    %1935 = vmatpush.msra.mxu0 %v1813
    %1936 = vmatpush.msra.mxu0 %v1812
    %1937 = vmatmul.f32.gmra.mxu0 %v1919
    %v1938 = vpop.f32.mrf.mxu0
    %v1939 = vadd.f32 0.0, %v1938
    %1940 = vdwg.mxu0
    %v1941 = vadd.f32 %v1808, %v1939
    %v1942 = vxor.u32 %v1915, 2147483648
    %v1943 = vmul.f32 %v1942, 1.442695
    %v1944 = vpow.pop %v1943
    %v1945 = vadd.f32 %v1944, 1.0
    %v1946 = vrcp.pop %v1945
    %v1947 = vmul.f32 %v1945, %v1946
    %v1948 = vsub.f32 1.0, %v1947
    %v1949 = vmul.f32 %v1946, %v1948
    %v1950 = vadd.f32 %v1946, %v1949
    %vm1951 = vweird.f32 %v1945
    %vm1952 = vweird.f32 %v1946
    %vm1953 = vmor %vm1951, %vm1952
    %v1954 = vsel %vm1953, %v1946, %v1950
    %v1955 = vand.u32 2147483647, %v1945
    %vm1956 = vcmp.eq.f32.partialorder %v1955, 8.507059e+37
    %v1957 = vand.u32 %v1945, 2147483648
    %v1958 = vor.u32 1.1754944e-38, %v1957
    %v1959 = vsel %vm1956, %v1958, %v1954
    %v1960 = vmul.f32 1.0, %v1959
    %v1961 = vtanh.pop %v1915
    %v1962 = vmul.f32 %v1960, %v1844
    %1964 = vrot.lane.b32.xlu0 %v1961, 80
    %v1965 = vpop.permute.xlu0 %1964
    %v1967 = vmul.f32 %v1960, %v1965
    %1969 = vrot.lane.b32.xlu0 %v1967, 16
    %v1970 = vpop.permute.xlu0 %1969
    %v1972 = vadd.f32 %v1962, %v1970
    %v1973 = vtanh.pop %v1972
    %1975 = vrot.lane.b32.xlu0 %v1973, 16
    %v1976 = vpop.permute.xlu0 %1975
    %v1978 = vmul.f32 %v1960, %v1976
    %v1979 = vxor.u32 %v1941, 2147483648
    %v1980 = vmul.f32 %v1979, 1.442695
    %v1981 = vpow.pop %v1980
    %v1982 = vadd.f32 %v1981, 1.0
    %v1983 = vrcp.pop %v1982
    %v1984 = vmul.f32 %v1982, %v1983
    %v1985 = vsub.f32 1.0, %v1984
    %v1986 = vmul.f32 %v1983, %v1985
    %v1987 = vadd.f32 %v1983, %v1986
    %vm1988 = vweird.f32 %v1982
    %vm1989 = vweird.f32 %v1983
    %vm1990 = vmor %vm1988, %vm1989
    %v1991 = vsel %vm1990, %v1983, %v1987
    %v1992 = vand.u32 2147483647, %v1982
    %vm1993 = vcmp.eq.f32.partialorder %v1992, 8.507059e+37
    %v1994 = vand.u32 %v1982, 2147483648
    %v1995 = vor.u32 1.1754944e-38, %v1994
    %v1996 = vsel %vm1993, %v1995, %v1991
    %v1997 = vmul.f32 1.0, %v1996
    %v1998 = vtanh.pop %v1941
    %v1999 = vmul.f32 %v1997, %v1881
    %2001 = vrot.lane.b32.xlu0 %v1998, 80
    %v2002 = vpop.permute.xlu0 %2001
    %v2004 = vmul.f32 %v1997, %v2002
    %2006 = vrot.lane.b32.xlu0 %v2004, 16
    %v2007 = vpop.permute.xlu0 %2006
    %v2009 = vadd.f32 %v1999, %v2007
    %v2010 = vtanh.pop %v2009
    %2012 = vrot.lane.b32.xlu0 %v2010, 16
    %v2013 = vpop.permute.xlu0 %2012
    %v2015 = vmul.f32 %v1997, %v2013
    %v2016 = vadd.f32 %v1888, %v1978
    %v2017 = vadd.f32 %v1889, %v2015
    %2019 = vrot.lane.b32.xlu0 %v1978, 96
    %v2020 = vpop.permute.xlu0 %2019
    %v2021 = vsel %vm785, %v2020, 0
    %2023 = vmatpush.msra.mxu0 0.0
    %2024 = vmatpush.msra.mxu0 0.0
    %2025 = vmatpush.msra.mxu0 0.0
    %2026 = vmatpush.msra.mxu0 0.0
    %2027 = vmatpush.msra.mxu0 0.0
    %2028 = vmatpush.msra.mxu0 0.0
    %2029 = vmatpush.msra.mxu0 0.0
    %2030 = vmatpush.msra.mxu0 0.0
    %2031 = vmatpush.msra.mxu0 0.0
    %2032 = vmatpush.msra.mxu0 0.0
    %2033 = vmatpush.msra.mxu0 0.0
    %2034 = vmatpush.msra.mxu0 0.0
    %2035 = vmatpush.msra.mxu0 0.0
    %2036 = vmatpush.msra.mxu0 0.0
    %2037 = vmatpush.msra.mxu0 %v1811
    %2038 = vmatpush.msra.mxu0 %v1810
    %2039 = vmatmul.f32.gmra.mxu0 %v2021
    %v2040 = vpop.f32.mrf.mxu0
    %v2041 = vadd.f32 0.0, %v2040
    %2042 = vdwg.mxu0
    %v2043 = vadd.f32 %v1718, %v2041
    %2045 = vrot.lane.b32.xlu0 %v2015, 96
    %v2046 = vpop.permute.xlu0 %2045
    %v2047 = vsel %vm785, %v2046, 0
    %2049 = vmatpush.msra.mxu0 0.0
    %2050 = vmatpush.msra.mxu0 0.0
    %2051 = vmatpush.msra.mxu0 0.0
    %2052 = vmatpush.msra.mxu0 0.0
    %2053 = vmatpush.msra.mxu0 0.0
    %2054 = vmatpush.msra.mxu0 0.0
    %2055 = vmatpush.msra.mxu0 0.0
    %2056 = vmatpush.msra.mxu0 0.0
    %2057 = vmatpush.msra.mxu0 0.0
    %2058 = vmatpush.msra.mxu0 0.0
    %2059 = vmatpush.msra.mxu0 0.0
    %2060 = vmatpush.msra.mxu0 0.0
    %2061 = vmatpush.msra.mxu0 0.0
    %2062 = vmatpush.msra.mxu0 0.0
    %2063 = vmatpush.msra.mxu0 %v1813
    %2064 = vmatpush.msra.mxu0 %v1812
    %2065 = vmatmul.f32.gmra.mxu0 %v2047
    %v2066 = vpop.f32.mrf.mxu0
    %v2067 = vadd.f32 0.0, %v2066
    %2068 = vdwg.mxu0
    %v2069 = vadd.f32 %v1807, %v2067
    %v2070 = vxor.u32 %v2043, 2147483648
    %v2071 = vmul.f32 %v2070, 1.442695
    %v2072 = vpow.pop %v2071
    %v2073 = vadd.f32 %v2072, 1.0
    %v2074 = vrcp.pop %v2073
    %v2075 = vmul.f32 %v2073, %v2074
    %v2076 = vsub.f32 1.0, %v2075
    %v2077 = vmul.f32 %v2074, %v2076
    %v2078 = vadd.f32 %v2074, %v2077
    %vm2079 = vweird.f32 %v2073
    %vm2080 = vweird.f32 %v2074
    %vm2081 = vmor %vm2079, %vm2080
    %v2082 = vsel %vm2081, %v2074, %v2078
    %v2083 = vand.u32 2147483647, %v2073
    %vm2084 = vcmp.eq.f32.partialorder %v2083, 8.507059e+37
    %v2085 = vand.u32 %v2073, 2147483648
    %v2086 = vor.u32 1.1754944e-38, %v2085
    %v2087 = vsel %vm2084, %v2086, %v2082
    %v2088 = vmul.f32 1.0, %v2087
    %v2089 = vtanh.pop %v2043
    %v2090 = vmul.f32 %v2088, %v1972
    %2092 = vrot.lane.b32.xlu0 %v2089, 80
    %v2093 = vpop.permute.xlu0 %2092
    %v2095 = vmul.f32 %v2088, %v2093
    %2097 = vrot.lane.b32.xlu0 %v2095, 16
    %v2098 = vpop.permute.xlu0 %2097
    %v2100 = vadd.f32 %v2090, %v2098
    %v2101 = vtanh.pop %v2100
    %2103 = vrot.lane.b32.xlu0 %v2101, 16
    %v2104 = vpop.permute.xlu0 %2103
    %v2106 = vmul.f32 %v2088, %v2104
    %v2107 = vxor.u32 %v2069, 2147483648
    %v2108 = vmul.f32 %v2107, 1.442695
    %v2109 = vpow.pop %v2108
    %v2110 = vadd.f32 %v2109, 1.0
    %v2111 = vrcp.pop %v2110
    %v2112 = vmul.f32 %v2110, %v2111
    %v2113 = vsub.f32 1.0, %v2112
    %v2114 = vmul.f32 %v2111, %v2113
    %v2115 = vadd.f32 %v2111, %v2114
    %vm2116 = vweird.f32 %v2110
    %vm2117 = vweird.f32 %v2111
    %vm2118 = vmor %vm2116, %vm2117
    %v2119 = vsel %vm2118, %v2111, %v2115
    %v2120 = vand.u32 2147483647, %v2110
    %vm2121 = vcmp.eq.f32.partialorder %v2120, 8.507059e+37
    %v2122 = vand.u32 %v2110, 2147483648
    %v2123 = vor.u32 1.1754944e-38, %v2122
    %v2124 = vsel %vm2121, %v2123, %v2119
    %v2125 = vmul.f32 1.0, %v2124
    %v2126 = vtanh.pop %v2069
    %v2127 = vmul.f32 %v2125, %v2009
    %2129 = vrot.lane.b32.xlu0 %v2126, 80
    %v2130 = vpop.permute.xlu0 %2129
    %v2132 = vmul.f32 %v2125, %v2130
    %2134 = vrot.lane.b32.xlu0 %v2132, 16
    %v2135 = vpop.permute.xlu0 %2134
    %v2137 = vadd.f32 %v2127, %v2135
    %v2138 = vtanh.pop %v2137
    %2140 = vrot.lane.b32.xlu0 %v2138, 16
    %v2141 = vpop.permute.xlu0 %2140
    %v2143 = vmul.f32 %v2125, %v2141
    %v2144 = vadd.f32 %v2016, %v2106
    %v2145 = vadd.f32 %v2017, %v2143
    %2147 = vrot.lane.b32.xlu0 %v2106, 96
    %v2148 = vpop.permute.xlu0 %2147
    %v2149 = vsel %vm785, %v2148, 0
    %2151 = vmatpush.msra.mxu0 0.0
    %2152 = vmatpush.msra.mxu0 0.0
    %2153 = vmatpush.msra.mxu0 0.0
    %2154 = vmatpush.msra.mxu0 0.0
    %2155 = vmatpush.msra.mxu0 0.0
    %2156 = vmatpush.msra.mxu0 0.0
    %2157 = vmatpush.msra.mxu0 0.0
    %2158 = vmatpush.msra.mxu0 0.0
    %2159 = vmatpush.msra.mxu0 0.0
    %2160 = vmatpush.msra.mxu0 0.0
    %2161 = vmatpush.msra.mxu0 0.0
    %2162 = vmatpush.msra.mxu0 0.0
    %2163 = vmatpush.msra.mxu0 0.0
    %2164 = vmatpush.msra.mxu0 0.0
    %2165 = vmatpush.msra.mxu0 %v1811
    %2166 = vmatpush.msra.mxu0 %v1810
    %2167 = vmatmul.f32.gmra.mxu0 %v2149
    %v2168 = vpop.f32.mrf.mxu0
    %v2169 = vadd.f32 0.0, %v2168
    %2170 = vdwg.mxu0
    %v2171 = vadd.f32 %v1719, %v2169
    %2173 = vrot.lane.b32.xlu0 %v2143, 96
    %v2174 = vpop.permute.xlu0 %2173
    %v2175 = vsel %vm785, %v2174, 0
    %2177 = vmatpush.msra.mxu0 0.0
    %2178 = vmatpush.msra.mxu0 0.0
    %2179 = vmatpush.msra.mxu0 0.0
    %2180 = vmatpush.msra.mxu0 0.0
    %2181 = vmatpush.msra.mxu0 0.0
    %2182 = vmatpush.msra.mxu0 0.0
    %2183 = vmatpush.msra.mxu0 0.0
    %2184 = vmatpush.msra.mxu0 0.0
    %2185 = vmatpush.msra.mxu0 0.0
    %2186 = vmatpush.msra.mxu0 0.0
    %2187 = vmatpush.msra.mxu0 0.0
    %2188 = vmatpush.msra.mxu0 0.0
    %2189 = vmatpush.msra.mxu0 0.0
    %2190 = vmatpush.msra.mxu0 0.0
    %2191 = vmatpush.msra.mxu0 %v1813
    %2192 = vmatpush.msra.mxu0 %v1812
    %2193 = vmatmul.f32.gmra.mxu0 %v2175
    %v2194 = vpop.f32.mrf.mxu0
    %v2195 = vadd.f32 0.0, %v2194
    %2196 = vdwg.mxu0
    %v2197 = vadd.f32 %v1806, %v2195
    %v2198 = vxor.u32 %v2171, 2147483648
    %v2199 = vmul.f32 %v2198, 1.442695
    %v2200 = vpow.pop %v2199
    %v2201 = vadd.f32 %v2200, 1.0
    %v2202 = vrcp.pop %v2201
    %v2203 = vmul.f32 %v2201, %v2202
    %v2204 = vsub.f32 1.0, %v2203
    %v2205 = vmul.f32 %v2202, %v2204
    %v2206 = vadd.f32 %v2202, %v2205
    %vm2207 = vweird.f32 %v2201
    %vm2208 = vweird.f32 %v2202
    %vm2209 = vmor %vm2207, %vm2208
    %v2210 = vsel %vm2209, %v2202, %v2206
    %v2211 = vand.u32 2147483647, %v2201
    %vm2212 = vcmp.eq.f32.partialorder %v2211, 8.507059e+37
    %v2213 = vand.u32 %v2201, 2147483648
    %v2214 = vor.u32 1.1754944e-38, %v2213
    %v2215 = vsel %vm2212, %v2214, %v2210
    %v2216 = vmul.f32 1.0, %v2215
    %v2217 = vtanh.pop %v2171
    %v2218 = vmul.f32 %v2216, %v2100
    %2220 = vrot.lane.b32.xlu0 %v2217, 80
    %v2221 = vpop.permute.xlu0 %2220
    %v2223 = vmul.f32 %v2216, %v2221
    %2225 = vrot.lane.b32.xlu0 %v2223, 16
    %v2226 = vpop.permute.xlu0 %2225
    %v2228 = vadd.f32 %v2218, %v2226
    %v2229 = vtanh.pop %v2228
    %2231 = vrot.lane.b32.xlu0 %v2229, 16
    %v2232 = vpop.permute.xlu0 %2231
    %v2234 = vmul.f32 %v2216, %v2232
    %v2235 = vxor.u32 %v2197, 2147483648
    %v2236 = vmul.f32 %v2235, 1.442695
    %v2237 = vpow.pop %v2236
    %v2238 = vadd.f32 %v2237, 1.0
    %v2239 = vrcp.pop %v2238
    %v2240 = vmul.f32 %v2238, %v2239
    %v2241 = vsub.f32 1.0, %v2240
    %v2242 = vmul.f32 %v2239, %v2241
    %v2243 = vadd.f32 %v2239, %v2242
    %vm2244 = vweird.f32 %v2238
    %vm2245 = vweird.f32 %v2239
    %vm2246 = vmor %vm2244, %vm2245
    %v2247 = vsel %vm2246, %v2239, %v2243
    %v2248 = vand.u32 2147483647, %v2238
    %vm2249 = vcmp.eq.f32.partialorder %v2248, 8.507059e+37
    %v2250 = vand.u32 %v2238, 2147483648
    %v2251 = vor.u32 1.1754944e-38, %v2250
    %v2252 = vsel %vm2249, %v2251, %v2247
    %v2253 = vmul.f32 1.0, %v2252
    %v2254 = vtanh.pop %v2197
    %v2255 = vmul.f32 %v2253, %v2137
    %2257 = vrot.lane.b32.xlu0 %v2254, 80
    %v2258 = vpop.permute.xlu0 %2257
    %v2260 = vmul.f32 %v2253, %v2258
    %2262 = vrot.lane.b32.xlu0 %v2260, 16
    %v2263 = vpop.permute.xlu0 %2262
    %v2265 = vadd.f32 %v2255, %v2263
    %v2266 = vtanh.pop %v2265
    %2268 = vrot.lane.b32.xlu0 %v2266, 16
    %v2269 = vpop.permute.xlu0 %2268
    %v2271 = vmul.f32 %v2253, %v2269
    %v2272 = vadd.f32 %v2144, %v2234
    %v2273 = vadd.f32 %v2145, %v2271
    %2275 = vrot.lane.b32.xlu0 %v2234, 96
    %v2276 = vpop.permute.xlu0 %2275
    %v2277 = vsel %vm785, %v2276, 0
    %2279 = vmatpush.msra.mxu0 0.0
    %2280 = vmatpush.msra.mxu0 0.0
    %2281 = vmatpush.msra.mxu0 0.0
    %2282 = vmatpush.msra.mxu0 0.0
    %2283 = vmatpush.msra.mxu0 0.0
    %2284 = vmatpush.msra.mxu0 0.0
    %2285 = vmatpush.msra.mxu0 0.0
    %2286 = vmatpush.msra.mxu0 0.0
    %2287 = vmatpush.msra.mxu0 0.0
    %2288 = vmatpush.msra.mxu0 0.0
    %2289 = vmatpush.msra.mxu0 0.0
    %2290 = vmatpush.msra.mxu0 0.0
    %2291 = vmatpush.msra.mxu0 0.0
    %2292 = vmatpush.msra.mxu0 0.0
    %2293 = vmatpush.msra.mxu0 %v1811
    %2294 = vmatpush.msra.mxu0 %v1810
    %2295 = vmatmul.f32.gmra.mxu0 %v2277
    %v2296 = vpop.f32.mrf.mxu0
    %v2297 = vadd.f32 0.0, %v2296
    %2298 = vdwg.mxu0
    %v2299 = vadd.f32 %v1720, %v2297
    %2301 = vrot.lane.b32.xlu0 %v2271, 96
    %v2302 = vpop.permute.xlu0 %2301
    %v2303 = vsel %vm785, %v2302, 0
    %2305 = vmatpush.msra.mxu0 0.0
    %2306 = vmatpush.msra.mxu0 0.0
    %2307 = vmatpush.msra.mxu0 0.0
    %2308 = vmatpush.msra.mxu0 0.0
    %2309 = vmatpush.msra.mxu0 0.0
    %2310 = vmatpush.msra.mxu0 0.0
    %2311 = vmatpush.msra.mxu0 0.0
    %2312 = vmatpush.msra.mxu0 0.0
    %2313 = vmatpush.msra.mxu0 0.0
    %2314 = vmatpush.msra.mxu0 0.0
    %2315 = vmatpush.msra.mxu0 0.0
    %2316 = vmatpush.msra.mxu0 0.0
    %2317 = vmatpush.msra.mxu0 0.0
    %2318 = vmatpush.msra.mxu0 0.0
    %2319 = vmatpush.msra.mxu0 %v1813
    %2320 = vmatpush.msra.mxu0 %v1812
    %2321 = vmatmul.f32.gmra.mxu0 %v2303
    %v2322 = vpop.f32.mrf.mxu0
    %v2323 = vadd.f32 0.0, %v2322
    %2324 = vdwg.mxu0
    %v2325 = vadd.f32 %v1805, %v2323
    %v2326 = vxor.u32 %v2299, 2147483648
    %v2327 = vmul.f32 %v2326, 1.442695
    %v2328 = vpow.pop %v2327
    %v2329 = vadd.f32 %v2328, 1.0
    %v2330 = vrcp.pop %v2329
    %v2331 = vmul.f32 %v2329, %v2330
    %v2332 = vsub.f32 1.0, %v2331
    %v2333 = vmul.f32 %v2330, %v2332
    %v2334 = vadd.f32 %v2330, %v2333
    %vm2335 = vweird.f32 %v2329
    %vm2336 = vweird.f32 %v2330
    %vm2337 = vmor %vm2335, %vm2336
    %v2338 = vsel %vm2337, %v2330, %v2334
    %v2339 = vand.u32 2147483647, %v2329
    %vm2340 = vcmp.eq.f32.partialorder %v2339, 8.507059e+37
    %v2341 = vand.u32 %v2329, 2147483648
    %v2342 = vor.u32 1.1754944e-38, %v2341
    %v2343 = vsel %vm2340, %v2342, %v2338
    %v2344 = vmul.f32 1.0, %v2343
    %v2345 = vtanh.pop %v2299
    %v2346 = vmul.f32 %v2344, %v2228
    %2348 = vrot.lane.b32.xlu0 %v2345, 80
    %v2349 = vpop.permute.xlu0 %2348
    %v2351 = vmul.f32 %v2344, %v2349
    %2353 = vrot.lane.b32.xlu0 %v2351, 16
    %v2354 = vpop.permute.xlu0 %2353
    %v2356 = vadd.f32 %v2346, %v2354
    %v2357 = vtanh.pop %v2356
    %2359 = vrot.lane.b32.xlu0 %v2357, 16
    %v2360 = vpop.permute.xlu0 %2359
    %v2362 = vmul.f32 %v2344, %v2360
    %v2363 = vxor.u32 %v2325, 2147483648
    %v2364 = vmul.f32 %v2363, 1.442695
    %v2365 = vpow.pop %v2364
    %v2366 = vadd.f32 %v2365, 1.0
    %v2367 = vrcp.pop %v2366
    %v2368 = vmul.f32 %v2366, %v2367
    %v2369 = vsub.f32 1.0, %v2368
    %v2370 = vmul.f32 %v2367, %v2369
    %v2371 = vadd.f32 %v2367, %v2370
    %vm2372 = vweird.f32 %v2366
    %vm2373 = vweird.f32 %v2367
    %vm2374 = vmor %vm2372, %vm2373
    %v2375 = vsel %vm2374, %v2367, %v2371
    %v2376 = vand.u32 2147483647, %v2366
    %vm2377 = vcmp.eq.f32.partialorder %v2376, 8.507059e+37
    %v2378 = vand.u32 %v2366, 2147483648
    %v2379 = vor.u32 1.1754944e-38, %v2378
    %v2380 = vsel %vm2377, %v2379, %v2375
    %v2381 = vmul.f32 1.0, %v2380
    %v2382 = vtanh.pop %v2325
    %v2383 = vmul.f32 %v2381, %v2265
    %2385 = vrot.lane.b32.xlu0 %v2382, 80
    %v2386 = vpop.permute.xlu0 %2385
    %v2388 = vmul.f32 %v2381, %v2386
    %2390 = vrot.lane.b32.xlu0 %v2388, 16
    %v2391 = vpop.permute.xlu0 %2390
    %v2393 = vadd.f32 %v2383, %v2391
    %v2394 = vtanh.pop %v2393
    %2396 = vrot.lane.b32.xlu0 %v2394, 16
    %v2397 = vpop.permute.xlu0 %2396
    %v2399 = vmul.f32 %v2381, %v2397
    %v2400 = vadd.f32 %v2272, %v2362
    %v2401 = vadd.f32 %v2273, %v2399
    %2403 = vrot.lane.b32.xlu0 %v2362, 96
    %v2404 = vpop.permute.xlu0 %2403
    %v2405 = vsel %vm785, %v2404, 0
    %2407 = vmatpush.msra.mxu0 0.0
    %2408 = vmatpush.msra.mxu0 0.0
    %2409 = vmatpush.msra.mxu0 0.0
    %2410 = vmatpush.msra.mxu0 0.0
    %2411 = vmatpush.msra.mxu0 0.0
    %2412 = vmatpush.msra.mxu0 0.0
    %2413 = vmatpush.msra.mxu0 0.0
    %2414 = vmatpush.msra.mxu0 0.0
    %2415 = vmatpush.msra.mxu0 0.0
    %2416 = vmatpush.msra.mxu0 0.0
    %2417 = vmatpush.msra.mxu0 0.0
    %2418 = vmatpush.msra.mxu0 0.0
    %2419 = vmatpush.msra.mxu0 0.0
    %2420 = vmatpush.msra.mxu0 0.0
    %2421 = vmatpush.msra.mxu0 %v1811
    %2422 = vmatpush.msra.mxu0 %v1810
    %2423 = vmatmul.f32.gmra.mxu0 %v2405
    %v2424 = vpop.f32.mrf.mxu0
    %v2425 = vadd.f32 0.0, %v2424
    %2426 = vdwg.mxu0
    %v2427 = vadd.f32 %v1721, %v2425
    %2429 = vrot.lane.b32.xlu0 %v2399, 96
    %v2430 = vpop.permute.xlu0 %2429
    %v2431 = vsel %vm785, %v2430, 0
    %2433 = vmatpush.msra.mxu0 0.0
    %2434 = vmatpush.msra.mxu0 0.0
    %2435 = vmatpush.msra.mxu0 0.0
    %2436 = vmatpush.msra.mxu0 0.0
    %2437 = vmatpush.msra.mxu0 0.0
    %2438 = vmatpush.msra.mxu0 0.0
    %2439 = vmatpush.msra.mxu0 0.0
    %2440 = vmatpush.msra.mxu0 0.0
    %2441 = vmatpush.msra.mxu0 0.0
    %2442 = vmatpush.msra.mxu0 0.0
    %2443 = vmatpush.msra.mxu0 0.0
    %2444 = vmatpush.msra.mxu0 0.0
    %2445 = vmatpush.msra.mxu0 0.0
    %2446 = vmatpush.msra.mxu0 0.0
    %2447 = vmatpush.msra.mxu0 %v1813
    %2448 = vmatpush.msra.mxu0 %v1812
    %2449 = vmatmul.f32.gmra.mxu0 %v2431
    %v2450 = vpop.f32.mrf.mxu0
    %v2451 = vadd.f32 0.0, %v2450
    %2452 = vdwg.mxu0
    %v2453 = vadd.f32 %v1804, %v2451
    %v2454 = vxor.u32 %v2427, 2147483648
    %v2455 = vmul.f32 %v2454, 1.442695
    %v2456 = vpow.pop %v2455
    %v2457 = vadd.f32 %v2456, 1.0
    %v2458 = vrcp.pop %v2457
    %v2459 = vmul.f32 %v2457, %v2458
    %v2460 = vsub.f32 1.0, %v2459
    %v2461 = vmul.f32 %v2458, %v2460
    %v2462 = vadd.f32 %v2458, %v2461
    %vm2463 = vweird.f32 %v2457
    %vm2464 = vweird.f32 %v2458
    %vm2465 = vmor %vm2463, %vm2464
    %v2466 = vsel %vm2465, %v2458, %v2462
    %v2467 = vand.u32 2147483647, %v2457
    %vm2468 = vcmp.eq.f32.partialorder %v2467, 8.507059e+37
    %v2469 = vand.u32 %v2457, 2147483648
    %v2470 = vor.u32 1.1754944e-38, %v2469
    %v2471 = vsel %vm2468, %v2470, %v2466
    %v2472 = vmul.f32 1.0, %v2471
    %v2473 = vtanh.pop %v2427
    %v2474 = vmul.f32 %v2472, %v2356
    %2476 = vrot.lane.b32.xlu0 %v2473, 80
    %v2477 = vpop.permute.xlu0 %2476
    %v2479 = vmul.f32 %v2472, %v2477
    %2481 = vrot.lane.b32.xlu0 %v2479, 16
    %v2482 = vpop.permute.xlu0 %2481
    %v2484 = vadd.f32 %v2474, %v2482
    %v2485 = vtanh.pop %v2484
    %2487 = vrot.lane.b32.xlu0 %v2485, 16
    %v2488 = vpop.permute.xlu0 %2487
    %v2490 = vmul.f32 %v2472, %v2488
    %v2491 = vxor.u32 %v2453, 2147483648
    %v2492 = vmul.f32 %v2491, 1.442695
    %v2493 = vpow.pop %v2492
    %v2494 = vadd.f32 %v2493, 1.0
    %v2495 = vrcp.pop %v2494
    %v2496 = vmul.f32 %v2494, %v2495
    %v2497 = vsub.f32 1.0, %v2496
    %v2498 = vmul.f32 %v2495, %v2497
    %v2499 = vadd.f32 %v2495, %v2498
    %vm2500 = vweird.f32 %v2494
    %vm2501 = vweird.f32 %v2495
    %vm2502 = vmor %vm2500, %vm2501
    %v2503 = vsel %vm2502, %v2495, %v2499
    %v2504 = vand.u32 2147483647, %v2494
    %vm2505 = vcmp.eq.f32.partialorder %v2504, 8.507059e+37
    %v2506 = vand.u32 %v2494, 2147483648
    %v2507 = vor.u32 1.1754944e-38, %v2506
    %v2508 = vsel %vm2505, %v2507, %v2503
    %v2509 = vmul.f32 1.0, %v2508
    %v2510 = vtanh.pop %v2453
    %v2511 = vmul.f32 %v2509, %v2393
    %2513 = vrot.lane.b32.xlu0 %v2510, 80
    %v2514 = vpop.permute.xlu0 %2513
    %v2516 = vmul.f32 %v2509, %v2514
    %2518 = vrot.lane.b32.xlu0 %v2516, 16
    %v2519 = vpop.permute.xlu0 %2518
    %v2521 = vadd.f32 %v2511, %v2519
    %v2522 = vtanh.pop %v2521
    %2524 = vrot.lane.b32.xlu0 %v2522, 16
    %v2525 = vpop.permute.xlu0 %2524
    %v2527 = vmul.f32 %v2509, %v2525
    %v2528 = vadd.f32 %v2400, %v2490
    %v2529 = vadd.f32 %v2401, %v2527
    %2531 = vrot.lane.b32.xlu0 %v2490, 96
    %v2532 = vpop.permute.xlu0 %2531
    %v2533 = vsel %vm785, %v2532, 0
    %2535 = vmatpush.msra.mxu0 0.0
    %2536 = vmatpush.msra.mxu0 0.0
    %2537 = vmatpush.msra.mxu0 0.0
    %2538 = vmatpush.msra.mxu0 0.0
    %2539 = vmatpush.msra.mxu0 0.0
    %2540 = vmatpush.msra.mxu0 0.0
    %2541 = vmatpush.msra.mxu0 0.0
    %2542 = vmatpush.msra.mxu0 0.0
    %2543 = vmatpush.msra.mxu0 0.0
    %2544 = vmatpush.msra.mxu0 0.0
    %2545 = vmatpush.msra.mxu0 0.0
    %2546 = vmatpush.msra.mxu0 0.0
    %2547 = vmatpush.msra.mxu0 0.0
    %2548 = vmatpush.msra.mxu0 0.0
    %2549 = vmatpush.msra.mxu0 %v1811
    %2550 = vmatpush.msra.mxu0 %v1810
    %2551 = vmatmul.f32.gmra.mxu0 %v2533
    %v2552 = vpop.f32.mrf.mxu0
    %v2553 = vadd.f32 0.0, %v2552
    %2554 = vdwg.mxu0
    %v2555 = vadd.f32 %v1722, %v2553
    %2557 = vrot.lane.b32.xlu0 %v2527, 96
    %v2558 = vpop.permute.xlu0 %2557
    %v2559 = vsel %vm785, %v2558, 0
    %2561 = vmatpush.msra.mxu0 0.0
    %2562 = vmatpush.msra.mxu0 0.0
    %2563 = vmatpush.msra.mxu0 0.0
    %2564 = vmatpush.msra.mxu0 0.0
    %2565 = vmatpush.msra.mxu0 0.0
    %2566 = vmatpush.msra.mxu0 0.0
    %2567 = vmatpush.msra.mxu0 0.0
    %2568 = vmatpush.msra.mxu0 0.0
    %2569 = vmatpush.msra.mxu0 0.0
    %2570 = vmatpush.msra.mxu0 0.0
    %2571 = vmatpush.msra.mxu0 0.0
    %2572 = vmatpush.msra.mxu0 0.0
    %2573 = vmatpush.msra.mxu0 0.0
    %2574 = vmatpush.msra.mxu0 0.0
    %2575 = vmatpush.msra.mxu0 %v1813
    %2576 = vmatpush.msra.mxu0 %v1812
    %2577 = vmatmul.f32.gmra.mxu0 %v2559
    %v2578 = vpop.f32.mrf.mxu0
    %v2579 = vadd.f32 0.0, %v2578
    %2580 = vdwg.mxu0
    %v2581 = vadd.f32 %v1803, %v2579
    %v2582 = vxor.u32 %v2555, 2147483648
    %v2583 = vmul.f32 %v2582, 1.442695
    %v2584 = vpow.pop %v2583
    %v2585 = vadd.f32 %v2584, 1.0
    %v2586 = vrcp.pop %v2585
    %v2587 = vmul.f32 %v2585, %v2586
    %v2588 = vsub.f32 1.0, %v2587
    %v2589 = vmul.f32 %v2586, %v2588
    %v2590 = vadd.f32 %v2586, %v2589
    %vm2591 = vweird.f32 %v2585
    %vm2592 = vweird.f32 %v2586
    %vm2593 = vmor %vm2591, %vm2592
    %v2594 = vsel %vm2593, %v2586, %v2590
    %v2595 = vand.u32 2147483647, %v2585
    %vm2596 = vcmp.eq.f32.partialorder %v2595, 8.507059e+37
    %v2597 = vand.u32 %v2585, 2147483648
    %v2598 = vor.u32 1.1754944e-38, %v2597
    %v2599 = vsel %vm2596, %v2598, %v2594
    %v2600 = vmul.f32 1.0, %v2599
    %v2601 = vtanh.pop %v2555
    %v2602 = vmul.f32 %v2600, %v2484
    %2604 = vrot.lane.b32.xlu0 %v2601, 80
    %v2605 = vpop.permute.xlu0 %2604
    %v2607 = vmul.f32 %v2600, %v2605
    %2609 = vrot.lane.b32.xlu0 %v2607, 16
    %v2610 = vpop.permute.xlu0 %2609
    %v2612 = vadd.f32 %v2602, %v2610
    %v2613 = vtanh.pop %v2612
    %2615 = vrot.lane.b32.xlu0 %v2613, 16
    %v2616 = vpop.permute.xlu0 %2615
    %v2618 = vmul.f32 %v2600, %v2616
    %v2619 = vxor.u32 %v2581, 2147483648
    %v2620 = vmul.f32 %v2619, 1.442695
    %v2621 = vpow.pop %v2620
    %v2622 = vadd.f32 %v2621, 1.0
    %v2623 = vrcp.pop %v2622
    %v2624 = vmul.f32 %v2622, %v2623
    %v2625 = vsub.f32 1.0, %v2624
    %v2626 = vmul.f32 %v2623, %v2625
    %v2627 = vadd.f32 %v2623, %v2626
    %vm2628 = vweird.f32 %v2622
    %vm2629 = vweird.f32 %v2623
    %vm2630 = vmor %vm2628, %vm2629
    %v2631 = vsel %vm2630, %v2623, %v2627
    %v2632 = vand.u32 2147483647, %v2622
    %vm2633 = vcmp.eq.f32.partialorder %v2632, 8.507059e+37
    %v2634 = vand.u32 %v2622, 2147483648
    %v2635 = vor.u32 1.1754944e-38, %v2634
    %v2636 = vsel %vm2633, %v2635, %v2631
    %v2637 = vmul.f32 1.0, %v2636
    %v2638 = vtanh.pop %v2581
    %v2639 = vmul.f32 %v2637, %v2521
    %2641 = vrot.lane.b32.xlu0 %v2638, 80
    %v2642 = vpop.permute.xlu0 %2641
    %v2644 = vmul.f32 %v2637, %v2642
    %2646 = vrot.lane.b32.xlu0 %v2644, 16
    %v2647 = vpop.permute.xlu0 %2646
    %v2649 = vadd.f32 %v2639, %v2647
    %v2650 = vtanh.pop %v2649
    %2652 = vrot.lane.b32.xlu0 %v2650, 16
    %v2653 = vpop.permute.xlu0 %2652
    %v2655 = vmul.f32 %v2637, %v2653
    %v2656 = vadd.f32 %v2528, %v2618
    %v2657 = vadd.f32 %v2529, %v2655
    %v2658 = vmul.f32 %v2656, 0.14285715
    %v2659 = vmul.f32 %v2657, 0.14285715
    %v2660 = vld [vmem:[%s37] sm:$0xff]
    %2662 = vrot.lane.b32.xlu0 %v2658, 96
    %v2663 = vpop.permute.xlu0 %2662
    %vm2665 = vcmask 64512
    %v2667 = vsel %vm2665, %v2660, 0
    %2669 = vmatpush.msra.mxu0 0.0
    %2670 = vmatpush.msra.mxu0 0.0
    %2671 = vmatpush.msra.mxu0 0.0
    %2672 = vmatpush.msra.mxu0 0.0
    %2673 = vmatpush.msra.mxu0 0.0
    %2674 = vmatpush.msra.mxu0 0.0
    %2675 = vmatpush.msra.mxu0 0.0
    %2676 = vmatpush.msra.mxu0 0.0
    %2677 = vmatpush.msra.mxu0 0.0
    %2678 = vmatpush.msra.mxu0 0.0
    %2679 = vmatpush.msra.mxu0 0.0
    %2680 = vmatpush.msra.mxu0 0.0
    %2681 = vmatpush.msra.mxu0 0.0
    %2682 = vmatpush.msra.mxu0 0.0
    %2683 = vmatpush.msra.mxu0 0.0
    %2684 = vmatpush.msra.mxu0 %v2663
    %2685 = vmatmul.f32.gmra.mxu0 %v2667
    %v2686 = vpop.f32.mrf.mxu0
    %v2687 = vadd.f32 0.0, %v2686
    %2688 = vdwg.mxu0
    %2690 = vrot.lane.b32.xlu0 %v2659, 96
    %v2691 = vpop.permute.xlu0 %2690
    %2693 = vmatpush.msra.mxu0 0.0
    %2694 = vmatpush.msra.mxu0 0.0
    %2695 = vmatpush.msra.mxu0 0.0
    %2696 = vmatpush.msra.mxu0 0.0
    %2697 = vmatpush.msra.mxu0 0.0
    %2698 = vmatpush.msra.mxu0 0.0
    %2699 = vmatpush.msra.mxu0 0.0
    %2700 = vmatpush.msra.mxu0 0.0
    %2701 = vmatpush.msra.mxu0 0.0
    %2702 = vmatpush.msra.mxu0 0.0
    %2703 = vmatpush.msra.mxu0 0.0
    %2704 = vmatpush.msra.mxu0 0.0
    %2705 = vmatpush.msra.mxu0 0.0
    %2706 = vmatpush.msra.mxu0 0.0
    %2707 = vmatpush.msra.mxu0 0.0
    %2708 = vmatpush.msra.mxu0 %v2691
    %2709 = vmatmul.f32.gmra.mxu0 %v2667
    %v2710 = vpop.f32.mrf.mxu0
    %v2711 = vadd.f32 0.0, %v2710
    %2712 = vdwg.mxu0
    %v2713 = vld [vmem:[%s39] sm:$0xff]
    %v2714 = vld [vmem:[%s39 + $0x8] sm:$0xff]
    %v2715 = vld [vmem:[%s39 + $0x10] sm:$0xff]
    %v2716 = vld [vmem:[%s39 + $0x18] sm:$0xff]
    %v2717 = vld [vmem:[%s41] sm:$0xff]
    %v2718 = vld [vmem:[%s41 + $0x8] sm:$0xff]
    %v2719 = vld [vmem:[%s41 + $0x10] sm:$0xff]
    %v2720 = vld [vmem:[%s41 + $0x18] sm:$0xff]
    %v2722 = vsel %vm785, %v2711, 0
    %2724 = vmatpush.msra.mxu0 0.0
    %2725 = vmatpush.msra.mxu0 0.0
    %2726 = vmatpush.msra.mxu0 0.0
    %2727 = vmatpush.msra.mxu0 0.0
    %2728 = vmatpush.msra.mxu0 0.0
    %2729 = vmatpush.msra.mxu0 0.0
    %2730 = vmatpush.msra.mxu0 0.0
    %2731 = vmatpush.msra.mxu0 0.0
    %2732 = vmatpush.msra.mxu0 0.0
    %2733 = vmatpush.msra.mxu0 0.0
    %2734 = vmatpush.msra.mxu0 0.0
    %2735 = vmatpush.msra.mxu0 0.0
    %2736 = vmatpush.msra.mxu0 0.0
    %2737 = vmatpush.msra.mxu0 0.0
    %2738 = vmatpush.msra.mxu0 %v2716
    %2739 = vmatpush.msra.mxu0 %v2715
    %2740 = vmatmul.f32.gmra.mxu0 %v2722
    %v2741 = vpop.f32.mrf.mxu0
    %v2742 = vadd.f32 0.0, %v2741
    %2743 = vdwg.mxu0
    %v2745 = vsel %vm785, %v2687, 0
    %2747 = vmatpush.msra.mxu0 0.0
    %2748 = vmatpush.msra.mxu0 0.0
    %2749 = vmatpush.msra.mxu0 0.0
    %2750 = vmatpush.msra.mxu0 0.0
    %2751 = vmatpush.msra.mxu0 0.0
    %2752 = vmatpush.msra.mxu0 0.0
    %2753 = vmatpush.msra.mxu0 0.0
    %2754 = vmatpush.msra.mxu0 0.0
    %2755 = vmatpush.msra.mxu0 0.0
    %2756 = vmatpush.msra.mxu0 0.0
    %2757 = vmatpush.msra.mxu0 0.0
    %2758 = vmatpush.msra.mxu0 0.0
    %2759 = vmatpush.msra.mxu0 0.0
    %2760 = vmatpush.msra.mxu0 0.0
    %2761 = vmatpush.msra.mxu0 %v2714
    %2762 = vmatpush.msra.mxu0 %v2713
    %2763 = vmatmul.f32.gmra.mxu0 %v2745
    %v2764 = vpop.f32.mrf.mxu0
    %v2765 = vadd.f32 %v2742, %v2764
    %2766 = vdwg.mxu0
    %v2767 = vld [vmem:[%s47] sm:$0x1]
    %v2769 = vperm.slane %v2767, 0
    %v2771 = vadd.f32 %v2765, %v2769
    %2772 = vmatpush.msra.mxu0 0.0
    %2773 = vmatpush.msra.mxu0 0.0
    %2774 = vmatpush.msra.mxu0 0.0
    %2775 = vmatpush.msra.mxu0 0.0
    %2776 = vmatpush.msra.mxu0 0.0
    %2777 = vmatpush.msra.mxu0 0.0
    %2778 = vmatpush.msra.mxu0 0.0
    %2779 = vmatpush.msra.mxu0 0.0
    %2780 = vmatpush.msra.mxu0 0.0
    %2781 = vmatpush.msra.mxu0 0.0
    %2782 = vmatpush.msra.mxu0 0.0
    %2783 = vmatpush.msra.mxu0 0.0
    %2784 = vmatpush.msra.mxu0 0.0
    %2785 = vmatpush.msra.mxu0 0.0
    %2786 = vmatpush.msra.mxu0 %v2720
    %2787 = vmatpush.msra.mxu0 %v2719
    %2788 = vmatmul.f32.gmra.mxu0 %v2722
    %v2789 = vpop.f32.mrf.mxu0
    %v2790 = vadd.f32 0.0, %v2789
    %2791 = vdwg.mxu0
    %2792 = vmatpush.msra.mxu0 0.0
    %2793 = vmatpush.msra.mxu0 0.0
    %2794 = vmatpush.msra.mxu0 0.0
    %2795 = vmatpush.msra.mxu0 0.0
    %2796 = vmatpush.msra.mxu0 0.0
    %2797 = vmatpush.msra.mxu0 0.0
    %2798 = vmatpush.msra.mxu0 0.0
    %2799 = vmatpush.msra.mxu0 0.0
    %2800 = vmatpush.msra.mxu0 0.0
    %2801 = vmatpush.msra.mxu0 0.0
    %2802 = vmatpush.msra.mxu0 0.0
    %2803 = vmatpush.msra.mxu0 0.0
    %2804 = vmatpush.msra.mxu0 0.0
    %2805 = vmatpush.msra.mxu0 0.0
    %2806 = vmatpush.msra.mxu0 %v2718
    %2807 = vmatpush.msra.mxu0 %v2717
    %2808 = vmatmul.f32.gmra.mxu0 %v2745
    %v2809 = vpop.f32.mrf.mxu0
    %v2810 = vadd.f32 %v2790, %v2809
    %2811 = vdwg.mxu0
    %v2812 = vld [vmem:[%s49] sm:$0x1]
    %v2814 = vperm.slane %v2812, 0
    %v2816 = vadd.f32 %v2810, %v2814
    %v2817 = vld [vmem:[%s43] sm:$0xff]
    %v2818 = vld [vmem:[%s43 + $0x8] sm:$0xff]
    %v2819 = vld [vmem:[%s45] sm:$0xff]
    %v2820 = vld [vmem:[%s45 + $0x8] sm:$0xff]
    %v2821 = vxor.u32 %v2771, 2147483648
    %v2822 = vmul.f32 %v2821, 1.442695
    %v2823 = vpow.pop %v2822
    %v2824 = vadd.f32 %v2823, 1.0
    %v2825 = vrcp.pop %v2824
    %v2826 = vmul.f32 %v2824, %v2825
    %v2827 = vsub.f32 1.0, %v2826
    %v2828 = vmul.f32 %v2825, %v2827
    %v2829 = vadd.f32 %v2825, %v2828
    %vm2830 = vweird.f32 %v2824
    %vm2831 = vweird.f32 %v2825
    %vm2832 = vmor %vm2830, %vm2831
    %v2833 = vsel %vm2832, %v2825, %v2829
    %v2834 = vand.u32 2147483647, %v2824
    %vm2835 = vcmp.eq.f32.partialorder %v2834, 8.507059e+37
    %v2836 = vand.u32 %v2824, 2147483648
    %v2837 = vor.u32 1.1754944e-38, %v2836
    %v2838 = vsel %vm2835, %v2837, %v2833
    %v2839 = vmul.f32 1.0, %v2838
    %v2840 = vtanh.pop %v2771
    %v2841 = vmul.f32 %v2839, 0.0
    %2843 = vrot.lane.b32.xlu0 %v2840, 80
    %v2844 = vpop.permute.xlu0 %2843
    %v2846 = vmul.f32 %v2839, %v2844
    %2848 = vrot.lane.b32.xlu0 %v2846, 16
    %v2849 = vpop.permute.xlu0 %2848
    %v2851 = vadd.f32 %v2841, %v2849
    %v2852 = vtanh.pop %v2851
    %2854 = vrot.lane.b32.xlu0 %v2852, 16
    %v2855 = vpop.permute.xlu0 %2854
    %v2857 = vmul.f32 %v2839, %v2855
    %v2858 = vxor.u32 %v2816, 2147483648
    %v2859 = vmul.f32 %v2858, 1.442695
    %v2860 = vpow.pop %v2859
    %v2861 = vadd.f32 %v2860, 1.0
    %v2862 = vrcp.pop %v2861
    %v2863 = vmul.f32 %v2861, %v2862
    %v2864 = vsub.f32 1.0, %v2863
    %v2865 = vmul.f32 %v2862, %v2864
    %v2866 = vadd.f32 %v2862, %v2865
    %vm2867 = vweird.f32 %v2861
    %vm2868 = vweird.f32 %v2862
    %vm2869 = vmor %vm2867, %vm2868
    %v2870 = vsel %vm2869, %v2862, %v2866
    %v2871 = vand.u32 2147483647, %v2861
    %vm2872 = vcmp.eq.f32.partialorder %v2871, 8.507059e+37
    %v2873 = vand.u32 %v2861, 2147483648
    %v2874 = vor.u32 1.1754944e-38, %v2873
    %v2875 = vsel %vm2872, %v2874, %v2870
    %v2876 = vmul.f32 1.0, %v2875
    %v2877 = vtanh.pop %v2816
    %v2878 = vmul.f32 %v2876, 0.0
    %2880 = vrot.lane.b32.xlu0 %v2877, 80
    %v2881 = vpop.permute.xlu0 %2880
    %v2883 = vmul.f32 %v2876, %v2881
    %2885 = vrot.lane.b32.xlu0 %v2883, 16
    %v2886 = vpop.permute.xlu0 %2885
    %v2888 = vadd.f32 %v2878, %v2886
    %v2889 = vtanh.pop %v2888
    %2891 = vrot.lane.b32.xlu0 %v2889, 16
    %v2892 = vpop.permute.xlu0 %2891
    %v2894 = vmul.f32 %v2876, %v2892
    %2896 = vrot.lane.b32.xlu0 %v2857, 96
    %v2897 = vpop.permute.xlu0 %2896
    %vm2899 = vcmask 123904
    %2900 = vst.msk [vmem:[#allocation2] sm:$0x3] %vm2899, %v2897
    %2902 = vrot.lane.b32.xlu0 %v2894, 96
    %v2903 = vpop.permute.xlu0 %2902
    %vm2905 = vcmask 130054
    %2906 = vst.msk [vmem:[#allocation3] sm:$0xc0] %vm2905, %v2903
    %v2907 = vsel %vm785, %v2897, 0
    %2909 = vmatpush.msra.mxu0 0.0
    %2910 = vmatpush.msra.mxu0 0.0
    %2911 = vmatpush.msra.mxu0 0.0
    %2912 = vmatpush.msra.mxu0 0.0
    %2913 = vmatpush.msra.mxu0 0.0
    %2914 = vmatpush.msra.mxu0 0.0
    %2915 = vmatpush.msra.mxu0 0.0
    %2916 = vmatpush.msra.mxu0 0.0
    %2917 = vmatpush.msra.mxu0 0.0
    %2918 = vmatpush.msra.mxu0 0.0
    %2919 = vmatpush.msra.mxu0 0.0
    %2920 = vmatpush.msra.mxu0 0.0
    %2921 = vmatpush.msra.mxu0 0.0
    %2922 = vmatpush.msra.mxu0 0.0
    %2923 = vmatpush.msra.mxu0 %v2818
    %2924 = vmatpush.msra.mxu0 %v2817
    %2925 = vmatmul.f32.gmra.mxu0 %v2907
    %v2926 = vpop.f32.mrf.mxu0
    %v2927 = vadd.f32 0.0, %v2926
    %2928 = vdwg.mxu0
    %v2930 = vrot.slane %v2927, 6
    %v2932 = vadd.f32 %v2771, %v2930
    %v2933 = vrot.slane %v2894, 6
    %2934 = vrot.lane.b32.xlu0 %v2933, 96
    %v2935 = vpop.permute.xlu0 %2934
    %v2936 = vsel %vm785, %v2935, 0
    %2938 = vmatpush.msra.mxu0 0.0
    %2939 = vmatpush.msra.mxu0 0.0
    %2940 = vmatpush.msra.mxu0 0.0
    %2941 = vmatpush.msra.mxu0 0.0
    %2942 = vmatpush.msra.mxu0 0.0
    %2943 = vmatpush.msra.mxu0 0.0
    %2944 = vmatpush.msra.mxu0 0.0
    %2945 = vmatpush.msra.mxu0 0.0
    %2946 = vmatpush.msra.mxu0 0.0
    %2947 = vmatpush.msra.mxu0 0.0
    %2948 = vmatpush.msra.mxu0 0.0
    %2949 = vmatpush.msra.mxu0 0.0
    %2950 = vmatpush.msra.mxu0 0.0
    %2951 = vmatpush.msra.mxu0 0.0
    %2952 = vmatpush.msra.mxu0 %v2820
    %2953 = vmatpush.msra.mxu0 %v2819
    %2954 = vmatmul.f32.gmra.mxu0 %v2936
    %v2955 = vpop.f32.mrf.mxu0
    %v2956 = vadd.f32 0.0, %v2955
    %2957 = vdwg.mxu0
    %v2959 = vrot.slane %v2956, 4
    %v2961 = vadd.f32 %v2816, %v2959
    %v2962 = vxor.u32 %v2932, 2147483648
    %v2963 = vmul.f32 %v2962, 1.442695
    %v2964 = vpow.pop %v2963
    %v2965 = vadd.f32 %v2964, 1.0
    %v2966 = vrcp.pop %v2965
    %v2967 = vmul.f32 %v2965, %v2966
    %v2968 = vsub.f32 1.0, %v2967
    %v2969 = vmul.f32 %v2966, %v2968
    %v2970 = vadd.f32 %v2966, %v2969
    %vm2971 = vweird.f32 %v2965
    %vm2972 = vweird.f32 %v2966
    %vm2973 = vmor %vm2971, %vm2972
    %v2974 = vsel %vm2973, %v2966, %v2970
    %v2975 = vand.u32 2147483647, %v2965
    %vm2976 = vcmp.eq.f32.partialorder %v2975, 8.507059e+37
    %v2977 = vand.u32 %v2965, 2147483648
    %v2978 = vor.u32 1.1754944e-38, %v2977
    %v2979 = vsel %vm2976, %v2978, %v2974
    %v2980 = vmul.f32 1.0, %v2979
    %v2981 = vtanh.pop %v2932
    %v2983 = vrot.slane %v2851, 6
    %v2985 = vmul.f32 %v2980, %v2983
    %2987 = vrot.lane.b32.xlu0 %v2981, 80
    %v2988 = vpop.permute.xlu0 %2987
    %v2990 = vmul.f32 %v2980, %v2988
    %2992 = vrot.lane.b32.xlu0 %v2990, 16
    %v2993 = vpop.permute.xlu0 %2992
    %v2995 = vadd.f32 %v2985, %v2993
    %v2996 = vtanh.pop %v2995
    %2998 = vrot.lane.b32.xlu0 %v2996, 16
    %v2999 = vpop.permute.xlu0 %2998
    %v3001 = vmul.f32 %v2980, %v2999
    %v3002 = vxor.u32 %v2961, 2147483648
    %v3003 = vmul.f32 %v3002, 1.442695
    %v3004 = vpow.pop %v3003
    %v3005 = vadd.f32 %v3004, 1.0
    %v3006 = vrcp.pop %v3005
    %v3007 = vmul.f32 %v3005, %v3006
    %v3008 = vsub.f32 1.0, %v3007
    %v3009 = vmul.f32 %v3006, %v3008
    %v3010 = vadd.f32 %v3006, %v3009
    %vm3011 = vweird.f32 %v3005
    %vm3012 = vweird.f32 %v3006
    %vm3013 = vmor %vm3011, %vm3012
    %v3014 = vsel %vm3013, %v3006, %v3010
    %v3015 = vand.u32 2147483647, %v3005
    %vm3016 = vcmp.eq.f32.partialorder %v3015, 8.507059e+37
    %v3017 = vand.u32 %v3005, 2147483648
    %v3018 = vor.u32 1.1754944e-38, %v3017
    %v3019 = vsel %vm3016, %v3018, %v3014
    %v3020 = vmul.f32 1.0, %v3019
    %v3021 = vtanh.pop %v2961
    %v3023 = vrot.slane %v2888, 2
    %v3025 = vmul.f32 %v3020, %v3023
    %3027 = vrot.lane.b32.xlu0 %v3021, 80
    %v3028 = vpop.permute.xlu0 %3027
    %v3030 = vmul.f32 %v3020, %v3028
    %3032 = vrot.lane.b32.xlu0 %v3030, 16
    %v3033 = vpop.permute.xlu0 %3032
    %v3035 = vadd.f32 %v3025, %v3033
    %v3036 = vtanh.pop %v3035
    %3038 = vrot.lane.b32.xlu0 %v3036, 16
    %v3039 = vpop.permute.xlu0 %3038
    %v3041 = vmul.f32 %v3020, %v3039
    %3043 = vrot.lane.b32.xlu0 %v3001, 96
    %v3044 = vpop.permute.xlu0 %3043
    %vm3046 = vcmask 125954
    %3047 = vst.msk [vmem:[#allocation2] sm:$0xc] %vm3046, %v3044
    %3049 = vrot.lane.b32.xlu0 %v3041, 96
    %v3050 = vpop.permute.xlu0 %3049
    %vm3052 = vcmask 128004
    %3053 = vst.msk [vmem:[#allocation3] sm:$0x30] %vm3052, %v3050
    %v3054 = vrot.slane %v3001, 2
    %3055 = vrot.lane.b32.xlu0 %v3054, 96
    %v3056 = vpop.permute.xlu0 %3055
    %v3057 = vsel %vm785, %v3056, 0
    %3059 = vmatpush.msra.mxu0 0.0
    %3060 = vmatpush.msra.mxu0 0.0
    %3061 = vmatpush.msra.mxu0 0.0
    %3062 = vmatpush.msra.mxu0 0.0
    %3063 = vmatpush.msra.mxu0 0.0
    %3064 = vmatpush.msra.mxu0 0.0
    %3065 = vmatpush.msra.mxu0 0.0
    %3066 = vmatpush.msra.mxu0 0.0
    %3067 = vmatpush.msra.mxu0 0.0
    %3068 = vmatpush.msra.mxu0 0.0
    %3069 = vmatpush.msra.mxu0 0.0
    %3070 = vmatpush.msra.mxu0 0.0
    %3071 = vmatpush.msra.mxu0 0.0
    %3072 = vmatpush.msra.mxu0 0.0
    %3073 = vmatpush.msra.mxu0 %v2818
    %3074 = vmatpush.msra.mxu0 %v2817
    %3075 = vmatmul.f32.gmra.mxu0 %v3057
    %v3076 = vpop.f32.mrf.mxu0
    %v3077 = vadd.f32 0.0, %v3076
    %3078 = vdwg.mxu0
    %v3080 = vrot.slane %v3077, 4
    %v3082 = vadd.f32 %v2771, %v3080
    %v3083 = vrot.slane %v3041, 4
    %3084 = vrot.lane.b32.xlu0 %v3083, 96
    %v3085 = vpop.permute.xlu0 %3084
    %v3086 = vsel %vm785, %v3085, 0
    %3088 = vmatpush.msra.mxu0 0.0
    %3089 = vmatpush.msra.mxu0 0.0
    %3090 = vmatpush.msra.mxu0 0.0
    %3091 = vmatpush.msra.mxu0 0.0
    %3092 = vmatpush.msra.mxu0 0.0
    %3093 = vmatpush.msra.mxu0 0.0
    %3094 = vmatpush.msra.mxu0 0.0
    %3095 = vmatpush.msra.mxu0 0.0
    %3096 = vmatpush.msra.mxu0 0.0
    %3097 = vmatpush.msra.mxu0 0.0
    %3098 = vmatpush.msra.mxu0 0.0
    %3099 = vmatpush.msra.mxu0 0.0
    %3100 = vmatpush.msra.mxu0 0.0
    %3101 = vmatpush.msra.mxu0 0.0
    %3102 = vmatpush.msra.mxu0 %v2820
    %3103 = vmatpush.msra.mxu0 %v2819
    %3104 = vmatmul.f32.gmra.mxu0 %v3086
    %v3105 = vpop.f32.mrf.mxu0
    %v3106 = vadd.f32 0.0, %v3105
    %3107 = vdwg.mxu0
    %v3109 = vrot.slane %v3106, 6
    %v3111 = vadd.f32 %v2816, %v3109
    %v3112 = vxor.u32 %v3082, 2147483648
    %v3113 = vmul.f32 %v3112, 1.442695
    %v3114 = vpow.pop %v3113
    %v3115 = vadd.f32 %v3114, 1.0
    %v3116 = vrcp.pop %v3115
    %v3117 = vmul.f32 %v3115, %v3116
    %v3118 = vsub.f32 1.0, %v3117
    %v3119 = vmul.f32 %v3116, %v3118
    %v3120 = vadd.f32 %v3116, %v3119
    %vm3121 = vweird.f32 %v3115
    %vm3122 = vweird.f32 %v3116
    %vm3123 = vmor %vm3121, %vm3122
    %v3124 = vsel %vm3123, %v3116, %v3120
    %v3125 = vand.u32 2147483647, %v3115
    %vm3126 = vcmp.eq.f32.partialorder %v3125, 8.507059e+37
    %v3127 = vand.u32 %v3115, 2147483648
    %v3128 = vor.u32 1.1754944e-38, %v3127
    %v3129 = vsel %vm3126, %v3128, %v3124
    %v3130 = vmul.f32 1.0, %v3129
    %v3131 = vtanh.pop %v3082
    %v3133 = vrot.slane %v2995, 6
    %v3135 = vmul.f32 %v3130, %v3133
    %3137 = vrot.lane.b32.xlu0 %v3131, 80
    %v3138 = vpop.permute.xlu0 %3137
    %v3140 = vmul.f32 %v3130, %v3138
    %3142 = vrot.lane.b32.xlu0 %v3140, 16
    %v3143 = vpop.permute.xlu0 %3142
    %v3145 = vadd.f32 %v3135, %v3143
    %v3146 = vtanh.pop %v3145
    %3148 = vrot.lane.b32.xlu0 %v3146, 16
    %v3149 = vpop.permute.xlu0 %3148
    %v3151 = vmul.f32 %v3130, %v3149
    %v3152 = vxor.u32 %v3111, 2147483648
    %v3153 = vmul.f32 %v3152, 1.442695
    %v3154 = vpow.pop %v3153
    %v3155 = vadd.f32 %v3154, 1.0
    %v3156 = vrcp.pop %v3155
    %v3157 = vmul.f32 %v3155, %v3156
    %v3158 = vsub.f32 1.0, %v3157
    %v3159 = vmul.f32 %v3156, %v3158
    %v3160 = vadd.f32 %v3156, %v3159
    %vm3161 = vweird.f32 %v3155
    %vm3162 = vweird.f32 %v3156
    %vm3163 = vmor %vm3161, %vm3162
    %v3164 = vsel %vm3163, %v3156, %v3160
    %v3165 = vand.u32 2147483647, %v3155
    %vm3166 = vcmp.eq.f32.partialorder %v3165, 8.507059e+37
    %v3167 = vand.u32 %v3155, 2147483648
    %v3168 = vor.u32 1.1754944e-38, %v3167
    %v3169 = vsel %vm3166, %v3168, %v3164
    %v3170 = vmul.f32 1.0, %v3169
    %v3171 = vtanh.pop %v3111
    %v3173 = vrot.slane %v3035, 2
    %v3175 = vmul.f32 %v3170, %v3173
    %3177 = vrot.lane.b32.xlu0 %v3171, 80
    %v3178 = vpop.permute.xlu0 %3177
    %v3180 = vmul.f32 %v3170, %v3178
    %3182 = vrot.lane.b32.xlu0 %v3180, 16
    %v3183 = vpop.permute.xlu0 %3182
    %v3185 = vadd.f32 %v3175, %v3183
    %v3186 = vtanh.pop %v3185
    %3188 = vrot.lane.b32.xlu0 %v3186, 16
    %v3189 = vpop.permute.xlu0 %3188
    %v3191 = vmul.f32 %v3170, %v3189
    %3193 = vrot.lane.b32.xlu0 %v3151, 96
    %v3194 = vpop.permute.xlu0 %3193
    %3196 = vst.msk [vmem:[#allocation2] sm:$0x30] %vm3052, %v3194
    %3198 = vrot.lane.b32.xlu0 %v3191, 96
    %v3199 = vpop.permute.xlu0 %3198
    %3201 = vst.msk [vmem:[#allocation3] sm:$0xc] %vm3046, %v3199
    %v3202 = vrot.slane %v3151, 4
    %3203 = vrot.lane.b32.xlu0 %v3202, 96
    %v3204 = vpop.permute.xlu0 %3203
    %v3205 = vsel %vm785, %v3204, 0
    %3207 = vmatpush.msra.mxu0 0.0
    %3208 = vmatpush.msra.mxu0 0.0
    %3209 = vmatpush.msra.mxu0 0.0
    %3210 = vmatpush.msra.mxu0 0.0
    %3211 = vmatpush.msra.mxu0 0.0
    %3212 = vmatpush.msra.mxu0 0.0
    %3213 = vmatpush.msra.mxu0 0.0
    %3214 = vmatpush.msra.mxu0 0.0
    %3215 = vmatpush.msra.mxu0 0.0
    %3216 = vmatpush.msra.mxu0 0.0
    %3217 = vmatpush.msra.mxu0 0.0
    %3218 = vmatpush.msra.mxu0 0.0
    %3219 = vmatpush.msra.mxu0 0.0
    %3220 = vmatpush.msra.mxu0 0.0
    %3221 = vmatpush.msra.mxu0 %v2818
    %3222 = vmatpush.msra.mxu0 %v2817
    %3223 = vmatmul.f32.gmra.mxu0 %v3205
    %v3224 = vpop.f32.mrf.mxu0
    %v3225 = vadd.f32 0.0, %v3224
    %3226 = vdwg.mxu0
    %v3228 = vrot.slane %v3225, 2
    %v3230 = vadd.f32 %v2771, %v3228
    %v3231 = vrot.slane %v3191, 2
    %3232 = vrot.lane.b32.xlu0 %v3231, 96
    %v3233 = vpop.permute.xlu0 %3232
    %v3234 = vsel %vm785, %v3233, 0
    %3236 = vmatpush.msra.mxu0 0.0
    %3237 = vmatpush.msra.mxu0 0.0
    %3238 = vmatpush.msra.mxu0 0.0
    %3239 = vmatpush.msra.mxu0 0.0
    %3240 = vmatpush.msra.mxu0 0.0
    %3241 = vmatpush.msra.mxu0 0.0
    %3242 = vmatpush.msra.mxu0 0.0
    %3243 = vmatpush.msra.mxu0 0.0
    %3244 = vmatpush.msra.mxu0 0.0
    %3245 = vmatpush.msra.mxu0 0.0
    %3246 = vmatpush.msra.mxu0 0.0
    %3247 = vmatpush.msra.mxu0 0.0
    %3248 = vmatpush.msra.mxu0 0.0
    %3249 = vmatpush.msra.mxu0 0.0
    %3250 = vmatpush.msra.mxu0 %v2820
    %3251 = vmatpush.msra.mxu0 %v2819
    %3252 = vmatmul.f32.gmra.mxu0 %v3234
    %v3253 = vpop.f32.mrf.mxu0
    %v3254 = vadd.f32 0.0, %v3253
    %3255 = vdwg.mxu0
    %v3256 = vadd.f32 %v2816, %v3254
    %v3257 = vxor.u32 %v3230, 2147483648
    %v3258 = vmul.f32 %v3257, 1.442695
    %v3259 = vpow.pop %v3258
    %v3260 = vadd.f32 %v3259, 1.0
    %v3261 = vrcp.pop %v3260
    %v3262 = vmul.f32 %v3260, %v3261
    %v3263 = vsub.f32 1.0, %v3262
    %v3264 = vmul.f32 %v3261, %v3263
    %v3265 = vadd.f32 %v3261, %v3264
    %vm3266 = vweird.f32 %v3260
    %vm3267 = vweird.f32 %v3261
    %vm3268 = vmor %vm3266, %vm3267
    %v3269 = vsel %vm3268, %v3261, %v3265
    %v3270 = vand.u32 2147483647, %v3260
    %vm3271 = vcmp.eq.f32.partialorder %v3270, 8.507059e+37
    %v3272 = vand.u32 %v3260, 2147483648
    %v3273 = vor.u32 1.1754944e-38, %v3272
    %v3274 = vsel %vm3271, %v3273, %v3269
    %v3275 = vmul.f32 1.0, %v3274
    %v3276 = vtanh.pop %v3230
    %v3278 = vrot.slane %v3145, 6
    %v3280 = vmul.f32 %v3275, %v3278
    %3282 = vrot.lane.b32.xlu0 %v3276, 80
    %v3283 = vpop.permute.xlu0 %3282
    %v3285 = vmul.f32 %v3275, %v3283
    %3287 = vrot.lane.b32.xlu0 %v3285, 16
    %v3288 = vpop.permute.xlu0 %3287
    %v3290 = vadd.f32 %v3280, %v3288
    %v3291 = vtanh.pop %v3290
    %3293 = vrot.lane.b32.xlu0 %v3291, 16
    %v3294 = vpop.permute.xlu0 %3293
    %v3296 = vmul.f32 %v3275, %v3294
    %v3297 = vxor.u32 %v3256, 2147483648
    %v3298 = vmul.f32 %v3297, 1.442695
    %v3299 = vpow.pop %v3298
    %v3300 = vadd.f32 %v3299, 1.0
    %v3301 = vrcp.pop %v3300
    %v3302 = vmul.f32 %v3300, %v3301
    %v3303 = vsub.f32 1.0, %v3302
    %v3304 = vmul.f32 %v3301, %v3303
    %v3305 = vadd.f32 %v3301, %v3304
    %vm3306 = vweird.f32 %v3300
    %vm3307 = vweird.f32 %v3301
    %vm3308 = vmor %vm3306, %vm3307
    %v3309 = vsel %vm3308, %v3301, %v3305
    %v3310 = vand.u32 2147483647, %v3300
    %vm3311 = vcmp.eq.f32.partialorder %v3310, 8.507059e+37
    %v3312 = vand.u32 %v3300, 2147483648
    %v3313 = vor.u32 1.1754944e-38, %v3312
    %v3314 = vsel %vm3311, %v3313, %v3309
    %v3315 = vmul.f32 1.0, %v3314
    %v3316 = vtanh.pop %v3256
    %v3318 = vrot.slane %v3185, 2
    %v3320 = vmul.f32 %v3315, %v3318
    %3322 = vrot.lane.b32.xlu0 %v3316, 80
    %v3323 = vpop.permute.xlu0 %3322
    %v3325 = vmul.f32 %v3315, %v3323
    %3327 = vrot.lane.b32.xlu0 %v3325, 16
    %v3328 = vpop.permute.xlu0 %3327
    %v3330 = vadd.f32 %v3320, %v3328
    %v3331 = vtanh.pop %v3330
    %3333 = vrot.lane.b32.xlu0 %v3331, 16
    %v3334 = vpop.permute.xlu0 %3333
    %v3336 = vmul.f32 %v3315, %v3334
    %3338 = vrot.lane.b32.xlu0 %v3296, 96
    %v3339 = vpop.permute.xlu0 %3338
    %3341 = vst.msk [vmem:[#allocation2] sm:$0xc0] %vm2905, %v3339
    %3343 = vrot.lane.b32.xlu0 %v3336, 96
    %v3344 = vpop.permute.xlu0 %3343
    %3346 = vst.msk [vmem:[#allocation3] sm:$0x3] %vm2899, %v3344
    %v3347 = vld [vmem:[#allocation2] sm:$0xff]
    %v3348 = vld [vmem:[#allocation3] sm:$0xff]
    %v3349 = vld [vmem:[%s51] sm:$0xff]
    %v3350 = vld [vmem:[%s51 + $0x8] sm:$0xff]
    %v3351 = vld [vmem:[%s51 + $0x10] sm:$0xff]
    %v3352 = vld [vmem:[%s51 + $0x18] sm:$0xff]
    %v3353 = vld [vmem:[%s53] sm:$0xff]
    %v3354 = vld [vmem:[%s53 + $0x8] sm:$0xff]
    %v3355 = vld [vmem:[%s53 + $0x10] sm:$0xff]
    %v3356 = vld [vmem:[%s53 + $0x18] sm:$0xff]
    %v3358 = vsel %vm785, %v3348, 0
    %3360 = vmatpush.msra.mxu0 0.0
    %3361 = vmatpush.msra.mxu0 0.0
    %3362 = vmatpush.msra.mxu0 0.0
    %3363 = vmatpush.msra.mxu0 0.0
    %3364 = vmatpush.msra.mxu0 0.0
    %3365 = vmatpush.msra.mxu0 0.0
    %3366 = vmatpush.msra.mxu0 0.0
    %3367 = vmatpush.msra.mxu0 0.0
    %3368 = vmatpush.msra.mxu0 0.0
    %3369 = vmatpush.msra.mxu0 0.0
    %3370 = vmatpush.msra.mxu0 0.0
    %3371 = vmatpush.msra.mxu0 0.0
    %3372 = vmatpush.msra.mxu0 0.0
    %3373 = vmatpush.msra.mxu0 0.0
    %3374 = vmatpush.msra.mxu0 %v3352
    %3375 = vmatpush.msra.mxu0 %v3351
    %3376 = vmatmul.f32.gmra.mxu0 %v3358
    %v3377 = vpop.f32.mrf.mxu0
    %v3378 = vadd.f32 0.0, %v3377
    %3379 = vdwg.mxu0
    %v3381 = vsel %vm785, %v3347, 0
    %3383 = vmatpush.msra.mxu0 0.0
    %3384 = vmatpush.msra.mxu0 0.0
    %3385 = vmatpush.msra.mxu0 0.0
    %3386 = vmatpush.msra.mxu0 0.0
    %3387 = vmatpush.msra.mxu0 0.0
    %3388 = vmatpush.msra.mxu0 0.0
    %3389 = vmatpush.msra.mxu0 0.0
    %3390 = vmatpush.msra.mxu0 0.0
    %3391 = vmatpush.msra.mxu0 0.0
    %3392 = vmatpush.msra.mxu0 0.0
    %3393 = vmatpush.msra.mxu0 0.0
    %3394 = vmatpush.msra.mxu0 0.0
    %3395 = vmatpush.msra.mxu0 0.0
    %3396 = vmatpush.msra.mxu0 0.0
    %3397 = vmatpush.msra.mxu0 %v3350
    %3398 = vmatpush.msra.mxu0 %v3349
    %3399 = vmatmul.f32.gmra.mxu0 %v3381
    %v3400 = vpop.f32.mrf.mxu0
    %v3401 = vadd.f32 %v3378, %v3400
    %3402 = vdwg.mxu0
    %v3403 = vld [vmem:[%s59] sm:$0x1]
    %v3405 = vperm.slane %v3403, 0
    %v3407 = vadd.f32 %v3401, %v3405
    %3408 = vmatpush.msra.mxu0 0.0
    %3409 = vmatpush.msra.mxu0 0.0
    %3410 = vmatpush.msra.mxu0 0.0
    %3411 = vmatpush.msra.mxu0 0.0
    %3412 = vmatpush.msra.mxu0 0.0
    %3413 = vmatpush.msra.mxu0 0.0
    %3414 = vmatpush.msra.mxu0 0.0
    %3415 = vmatpush.msra.mxu0 0.0
    %3416 = vmatpush.msra.mxu0 0.0
    %3417 = vmatpush.msra.mxu0 0.0
    %3418 = vmatpush.msra.mxu0 0.0
    %3419 = vmatpush.msra.mxu0 0.0
    %3420 = vmatpush.msra.mxu0 0.0
    %3421 = vmatpush.msra.mxu0 0.0
    %3422 = vmatpush.msra.mxu0 %v3356
    %3423 = vmatpush.msra.mxu0 %v3355
    %3424 = vmatmul.f32.gmra.mxu0 %v3358
    %v3425 = vpop.f32.mrf.mxu0
    %v3426 = vadd.f32 0.0, %v3425
    %3427 = vdwg.mxu0
    %3428 = vmatpush.msra.mxu0 0.0
    %3429 = vmatpush.msra.mxu0 0.0
    %3430 = vmatpush.msra.mxu0 0.0
    %3431 = vmatpush.msra.mxu0 0.0
    %3432 = vmatpush.msra.mxu0 0.0
    %3433 = vmatpush.msra.mxu0 0.0
    %3434 = vmatpush.msra.mxu0 0.0
    %3435 = vmatpush.msra.mxu0 0.0
    %3436 = vmatpush.msra.mxu0 0.0
    %3437 = vmatpush.msra.mxu0 0.0
    %3438 = vmatpush.msra.mxu0 0.0
    %3439 = vmatpush.msra.mxu0 0.0
    %3440 = vmatpush.msra.mxu0 0.0
    %3441 = vmatpush.msra.mxu0 0.0
    %3442 = vmatpush.msra.mxu0 %v3354
    %3443 = vmatpush.msra.mxu0 %v3353
    %3444 = vmatmul.f32.gmra.mxu0 %v3381
    %v3445 = vpop.f32.mrf.mxu0
    %v3446 = vadd.f32 %v3426, %v3445
    %3447 = vdwg.mxu0
    %v3448 = vld [vmem:[%s61] sm:$0x1]
    %v3450 = vperm.slane %v3448, 0
    %v3452 = vadd.f32 %v3446, %v3450
    %v3453 = vld [vmem:[%s63] sm:$0x1]
    %v3454 = vld [vmem:[%s65] sm:$0x1]
    %v3455 = vld [vmem:[%s55] sm:$0xff]
    %v3456 = vld [vmem:[%s55 + $0x8] sm:$0xff]
    %v3457 = vld [vmem:[%s57] sm:$0xff]
    %v3458 = vld [vmem:[%s57 + $0x8] sm:$0xff]
    %v3459 = vxor.u32 %v3407, 2147483648
    %v3460 = vmul.f32 %v3459, 1.442695
    %v3461 = vpow.pop %v3460
    %v3462 = vadd.f32 %v3461, 1.0
    %v3463 = vrcp.pop %v3462
    %v3464 = vmul.f32 %v3462, %v3463
    %v3465 = vsub.f32 1.0, %v3464
    %v3466 = vmul.f32 %v3463, %v3465
    %v3467 = vadd.f32 %v3463, %v3466
    %vm3468 = vweird.f32 %v3462
    %vm3469 = vweird.f32 %v3463
    %vm3470 = vmor %vm3468, %vm3469
    %v3471 = vsel %vm3470, %v3463, %v3467
    %v3472 = vand.u32 2147483647, %v3462
    %vm3473 = vcmp.eq.f32.partialorder %v3472, 8.507059e+37
    %v3474 = vand.u32 %v3462, 2147483648
    %v3475 = vor.u32 1.1754944e-38, %v3474
    %v3476 = vsel %vm3473, %v3475, %v3471
    %v3477 = vmul.f32 1.0, %v3476
    %v3478 = vtanh.pop %v3407
    %v3479 = vmul.f32 %v3477, 0.0
    %3481 = vrot.lane.b32.xlu0 %v3478, 80
    %v3482 = vpop.permute.xlu0 %3481
    %v3484 = vmul.f32 %v3477, %v3482
    %3486 = vrot.lane.b32.xlu0 %v3484, 16
    %v3487 = vpop.permute.xlu0 %3486
    %v3489 = vadd.f32 %v3479, %v3487
    %v3490 = vtanh.pop %v3489
    %3492 = vrot.lane.b32.xlu0 %v3490, 16
    %v3493 = vpop.permute.xlu0 %3492
    %v3495 = vmul.f32 %v3477, %v3493
    %v3496 = vxor.u32 %v3452, 2147483648
    %v3497 = vmul.f32 %v3496, 1.442695
    %v3498 = vpow.pop %v3497
    %v3499 = vadd.f32 %v3498, 1.0
    %v3500 = vrcp.pop %v3499
    %v3501 = vmul.f32 %v3499, %v3500
    %v3502 = vsub.f32 1.0, %v3501
    %v3503 = vmul.f32 %v3500, %v3502
    %v3504 = vadd.f32 %v3500, %v3503
    %vm3505 = vweird.f32 %v3499
    %vm3506 = vweird.f32 %v3500
    %vm3507 = vmor %vm3505, %vm3506
    %v3508 = vsel %vm3507, %v3500, %v3504
    %v3509 = vand.u32 2147483647, %v3499
    %vm3510 = vcmp.eq.f32.partialorder %v3509, 8.507059e+37
    %v3511 = vand.u32 %v3499, 2147483648
    %v3512 = vor.u32 1.1754944e-38, %v3511
    %v3513 = vsel %vm3510, %v3512, %v3508
    %v3514 = vmul.f32 1.0, %v3513
    %v3515 = vtanh.pop %v3452
    %v3516 = vmul.f32 %v3514, 0.0
    %3518 = vrot.lane.b32.xlu0 %v3515, 80
    %v3519 = vpop.permute.xlu0 %3518
    %v3521 = vmul.f32 %v3514, %v3519
    %3523 = vrot.lane.b32.xlu0 %v3521, 16
    %v3524 = vpop.permute.xlu0 %3523
    %v3526 = vadd.f32 %v3516, %v3524
    %v3527 = vtanh.pop %v3526
    %3529 = vrot.lane.b32.xlu0 %v3527, 16
    %v3530 = vpop.permute.xlu0 %3529
    %v3532 = vmul.f32 %v3514, %v3530
    %v3534 = vperm.slane %v3453, 0
    %3535 = vrot.lane.b32.xlu0 %v3534, 32
    %v3536 = vpop.permute.xlu0 %3535
    %v3538 = vmul.f32 %v3495, %v3536
    %3540 = vrot.lane.b32.xlu0 %v3538, 96
    %v3541 = vpop.permute.xlu0 %3540
    %v3543 = vsel %vm2899, %v3541, 0.0
    %3544 = vadd.xlane.f32.xlu0 %v3543
    %v3545 = vpop.xlane.xlu0 %3544
    %v3547 = vperm.slane %v3454, 0
    %3548 = vrot.lane.b32.xlu0 %v3547, 32
    %v3549 = vpop.permute.xlu0 %3548
    %v3551 = vmul.f32 %v3532, %v3549
    %3553 = vrot.lane.b32.xlu0 %v3551, 96
    %v3554 = vpop.permute.xlu0 %3553
    %v3556 = vsel %vm2905, %v3554, 0.0
    %3557 = vadd.xlane.f32.xlu0 %v3556
    %v3558 = vpop.xlane.xlu0 %3557
    %3560 = vrot.lane.b32.xlu0 %v3495, 96
    %v3561 = vpop.permute.xlu0 %3560
    %v3562 = vsel %vm785, %v3561, 0
    %3564 = vmatpush.msra.mxu0 0.0
    %3565 = vmatpush.msra.mxu0 0.0
    %3566 = vmatpush.msra.mxu0 0.0
    %3567 = vmatpush.msra.mxu0 0.0
    %3568 = vmatpush.msra.mxu0 0.0
    %3569 = vmatpush.msra.mxu0 0.0
    %3570 = vmatpush.msra.mxu0 0.0
    %3571 = vmatpush.msra.mxu0 0.0
    %3572 = vmatpush.msra.mxu0 0.0
    %3573 = vmatpush.msra.mxu0 0.0
    %3574 = vmatpush.msra.mxu0 0.0
    %3575 = vmatpush.msra.mxu0 0.0
    %3576 = vmatpush.msra.mxu0 0.0
    %3577 = vmatpush.msra.mxu0 0.0
    %3578 = vmatpush.msra.mxu0 %v3456
    %3579 = vmatpush.msra.mxu0 %v3455
    %3580 = vmatmul.f32.gmra.mxu0 %v3562
    %v3581 = vpop.f32.mrf.mxu0
    %v3582 = vadd.f32 0.0, %v3581
    %3583 = vdwg.mxu0
    %v3585 = vrot.slane %v3582, 6
    %v3587 = vadd.f32 %v3407, %v3585
    %v3589 = vrot.slane %v3532, 6
    %3590 = vrot.lane.b32.xlu0 %v3589, 96
    %v3591 = vpop.permute.xlu0 %3590
    %v3592 = vsel %vm785, %v3591, 0
    %3594 = vmatpush.msra.mxu0 0.0
    %3595 = vmatpush.msra.mxu0 0.0
    %3596 = vmatpush.msra.mxu0 0.0
    %3597 = vmatpush.msra.mxu0 0.0
    %3598 = vmatpush.msra.mxu0 0.0
    %3599 = vmatpush.msra.mxu0 0.0
    %3600 = vmatpush.msra.mxu0 0.0
    %3601 = vmatpush.msra.mxu0 0.0
    %3602 = vmatpush.msra.mxu0 0.0
    %3603 = vmatpush.msra.mxu0 0.0
    %3604 = vmatpush.msra.mxu0 0.0
    %3605 = vmatpush.msra.mxu0 0.0
    %3606 = vmatpush.msra.mxu0 0.0
    %3607 = vmatpush.msra.mxu0 0.0
    %3608 = vmatpush.msra.mxu0 %v3458
    %3609 = vmatpush.msra.mxu0 %v3457
    %3610 = vmatmul.f32.gmra.mxu0 %v3592
    %v3611 = vpop.f32.mrf.mxu0
    %v3612 = vadd.f32 0.0, %v3611
    %3613 = vdwg.mxu0
    %v3615 = vrot.slane %v3612, 4
    %v3617 = vadd.f32 %v3452, %v3615
    %v3618 = vxor.u32 %v3587, 2147483648
    %v3619 = vmul.f32 %v3618, 1.442695
    %v3620 = vpow.pop %v3619
    %v3621 = vadd.f32 %v3620, 1.0
    %v3622 = vrcp.pop %v3621
    %v3623 = vmul.f32 %v3621, %v3622
    %v3624 = vsub.f32 1.0, %v3623
    %v3625 = vmul.f32 %v3622, %v3624
    %v3626 = vadd.f32 %v3622, %v3625
    %vm3627 = vweird.f32 %v3621
    %vm3628 = vweird.f32 %v3622
    %vm3629 = vmor %vm3627, %vm3628
    %v3630 = vsel %vm3629, %v3622, %v3626
    %v3631 = vand.u32 2147483647, %v3621
    %vm3632 = vcmp.eq.f32.partialorder %v3631, 8.507059e+37
    %v3633 = vand.u32 %v3621, 2147483648
    %v3634 = vor.u32 1.1754944e-38, %v3633
    %v3635 = vsel %vm3632, %v3634, %v3630
    %v3636 = vmul.f32 1.0, %v3635
    %v3637 = vtanh.pop %v3587
    %v3639 = vrot.slane %v3489, 6
    %v3641 = vmul.f32 %v3636, %v3639
    %3643 = vrot.lane.b32.xlu0 %v3637, 80
    %v3644 = vpop.permute.xlu0 %3643
    %v3646 = vmul.f32 %v3636, %v3644
    %3648 = vrot.lane.b32.xlu0 %v3646, 16
    %v3649 = vpop.permute.xlu0 %3648
    %v3651 = vadd.f32 %v3641, %v3649
    %v3652 = vtanh.pop %v3651
    %3654 = vrot.lane.b32.xlu0 %v3652, 16
    %v3655 = vpop.permute.xlu0 %3654
    %v3657 = vmul.f32 %v3636, %v3655
    %v3658 = vxor.u32 %v3617, 2147483648
    %v3659 = vmul.f32 %v3658, 1.442695
    %v3660 = vpow.pop %v3659
    %v3661 = vadd.f32 %v3660, 1.0
    %v3662 = vrcp.pop %v3661
    %v3663 = vmul.f32 %v3661, %v3662
    %v3664 = vsub.f32 1.0, %v3663
    %v3665 = vmul.f32 %v3662, %v3664
    %v3666 = vadd.f32 %v3662, %v3665
    %vm3667 = vweird.f32 %v3661
    %vm3668 = vweird.f32 %v3662
    %vm3669 = vmor %vm3667, %vm3668
    %v3670 = vsel %vm3669, %v3662, %v3666
    %v3671 = vand.u32 2147483647, %v3661
    %vm3672 = vcmp.eq.f32.partialorder %v3671, 8.507059e+37
    %v3673 = vand.u32 %v3661, 2147483648
    %v3674 = vor.u32 1.1754944e-38, %v3673
    %v3675 = vsel %vm3672, %v3674, %v3670
    %v3676 = vmul.f32 1.0, %v3675
    %v3677 = vtanh.pop %v3617
    %v3679 = vrot.slane %v3526, 2
    %v3681 = vmul.f32 %v3676, %v3679
    %3683 = vrot.lane.b32.xlu0 %v3677, 80
    %v3684 = vpop.permute.xlu0 %3683
    %v3686 = vmul.f32 %v3676, %v3684
    %3688 = vrot.lane.b32.xlu0 %v3686, 16
    %v3689 = vpop.permute.xlu0 %3688
    %v3691 = vadd.f32 %v3681, %v3689
    %v3692 = vtanh.pop %v3691
    %3694 = vrot.lane.b32.xlu0 %v3692, 16
    %v3695 = vpop.permute.xlu0 %3694
    %v3697 = vmul.f32 %v3676, %v3695
    %v3698 = vmul.f32 %v3657, %v3536
    %3700 = vrot.lane.b32.xlu0 %v3698, 96
    %v3701 = vpop.permute.xlu0 %3700
    %v3703 = vsel %vm3046, %v3701, 0.0
    %3704 = vadd.xlane.f32.xlu0 %v3703
    %v3705 = vpop.xlane.xlu0 %3704
    %v3706 = vmul.f32 %v3697, %v3549
    %3708 = vrot.lane.b32.xlu0 %v3706, 96
    %v3709 = vpop.permute.xlu0 %3708
    %v3711 = vsel %vm3052, %v3709, 0.0
    %3712 = vadd.xlane.f32.xlu0 %v3711
    %v3713 = vpop.xlane.xlu0 %3712
    %v3715 = vrot.slane %v3657, 2
    %3716 = vrot.lane.b32.xlu0 %v3715, 96
    %v3717 = vpop.permute.xlu0 %3716
    %v3718 = vsel %vm785, %v3717, 0
    %3720 = vmatpush.msra.mxu0 0.0
    %3721 = vmatpush.msra.mxu0 0.0
    %3722 = vmatpush.msra.mxu0 0.0
    %3723 = vmatpush.msra.mxu0 0.0
    %3724 = vmatpush.msra.mxu0 0.0
    %3725 = vmatpush.msra.mxu0 0.0
    %3726 = vmatpush.msra.mxu0 0.0
    %3727 = vmatpush.msra.mxu0 0.0
    %3728 = vmatpush.msra.mxu0 0.0
    %3729 = vmatpush.msra.mxu0 0.0
    %3730 = vmatpush.msra.mxu0 0.0
    %3731 = vmatpush.msra.mxu0 0.0
    %3732 = vmatpush.msra.mxu0 0.0
    %3733 = vmatpush.msra.mxu0 0.0
    %3734 = vmatpush.msra.mxu0 %v3456
    %3735 = vmatpush.msra.mxu0 %v3455
    %3736 = vmatmul.f32.gmra.mxu0 %v3718
    %v3737 = vpop.f32.mrf.mxu0
    %v3738 = vadd.f32 0.0, %v3737
    %3739 = vdwg.mxu0
    %v3741 = vrot.slane %v3738, 4
    %v3743 = vadd.f32 %v3407, %v3741
    %v3745 = vrot.slane %v3697, 4
    %3746 = vrot.lane.b32.xlu0 %v3745, 96
    %v3747 = vpop.permute.xlu0 %3746
    %v3748 = vsel %vm785, %v3747, 0
    %3750 = vmatpush.msra.mxu0 0.0
    %3751 = vmatpush.msra.mxu0 0.0
    %3752 = vmatpush.msra.mxu0 0.0
    %3753 = vmatpush.msra.mxu0 0.0
    %3754 = vmatpush.msra.mxu0 0.0
    %3755 = vmatpush.msra.mxu0 0.0
    %3756 = vmatpush.msra.mxu0 0.0
    %3757 = vmatpush.msra.mxu0 0.0
    %3758 = vmatpush.msra.mxu0 0.0
    %3759 = vmatpush.msra.mxu0 0.0
    %3760 = vmatpush.msra.mxu0 0.0
    %3761 = vmatpush.msra.mxu0 0.0
    %3762 = vmatpush.msra.mxu0 0.0
    %3763 = vmatpush.msra.mxu0 0.0
    %3764 = vmatpush.msra.mxu0 %v3458
    %3765 = vmatpush.msra.mxu0 %v3457
    %3766 = vmatmul.f32.gmra.mxu0 %v3748
    %v3767 = vpop.f32.mrf.mxu0
    %v3768 = vadd.f32 0.0, %v3767
    %3769 = vdwg.mxu0
    %v3771 = vrot.slane %v3768, 6
    %v3773 = vadd.f32 %v3452, %v3771
    %v3774 = vxor.u32 %v3743, 2147483648
    %v3775 = vmul.f32 %v3774, 1.442695
    %v3776 = vpow.pop %v3775
    %v3777 = vadd.f32 %v3776, 1.0
    %v3778 = vrcp.pop %v3777
    %v3779 = vmul.f32 %v3777, %v3778
    %v3780 = vsub.f32 1.0, %v3779
    %v3781 = vmul.f32 %v3778, %v3780
    %v3782 = vadd.f32 %v3778, %v3781
    %vm3783 = vweird.f32 %v3777
    %vm3784 = vweird.f32 %v3778
    %vm3785 = vmor %vm3783, %vm3784
    %v3786 = vsel %vm3785, %v3778, %v3782
    %v3787 = vand.u32 2147483647, %v3777
    %vm3788 = vcmp.eq.f32.partialorder %v3787, 8.507059e+37
    %v3789 = vand.u32 %v3777, 2147483648
    %v3790 = vor.u32 1.1754944e-38, %v3789
    %v3791 = vsel %vm3788, %v3790, %v3786
    %v3792 = vmul.f32 1.0, %v3791
    %v3793 = vtanh.pop %v3743
    %v3795 = vrot.slane %v3651, 6
    %v3797 = vmul.f32 %v3792, %v3795
    %3799 = vrot.lane.b32.xlu0 %v3793, 80
    %v3800 = vpop.permute.xlu0 %3799
    %v3802 = vmul.f32 %v3792, %v3800
    %3804 = vrot.lane.b32.xlu0 %v3802, 16
    %v3805 = vpop.permute.xlu0 %3804
    %v3807 = vadd.f32 %v3797, %v3805
    %v3808 = vtanh.pop %v3807
    %3810 = vrot.lane.b32.xlu0 %v3808, 16
    %v3811 = vpop.permute.xlu0 %3810
    %v3813 = vmul.f32 %v3792, %v3811
    %v3814 = vxor.u32 %v3773, 2147483648
    %v3815 = vmul.f32 %v3814, 1.442695
    %v3816 = vpow.pop %v3815
    %v3817 = vadd.f32 %v3816, 1.0
    %v3818 = vrcp.pop %v3817
    %v3819 = vmul.f32 %v3817, %v3818
    %v3820 = vsub.f32 1.0, %v3819
    %v3821 = vmul.f32 %v3818, %v3820
    %v3822 = vadd.f32 %v3818, %v3821
    %vm3823 = vweird.f32 %v3817
    %vm3824 = vweird.f32 %v3818
    %vm3825 = vmor %vm3823, %vm3824
    %v3826 = vsel %vm3825, %v3818, %v3822
    %v3827 = vand.u32 2147483647, %v3817
    %vm3828 = vcmp.eq.f32.partialorder %v3827, 8.507059e+37
    %v3829 = vand.u32 %v3817, 2147483648
    %v3830 = vor.u32 1.1754944e-38, %v3829
    %v3831 = vsel %vm3828, %v3830, %v3826
    %v3832 = vmul.f32 1.0, %v3831
    %v3833 = vtanh.pop %v3773
    %v3835 = vrot.slane %v3691, 2
    %v3837 = vmul.f32 %v3832, %v3835
    %3839 = vrot.lane.b32.xlu0 %v3833, 80
    %v3840 = vpop.permute.xlu0 %3839
    %v3842 = vmul.f32 %v3832, %v3840
    %3844 = vrot.lane.b32.xlu0 %v3842, 16
    %v3845 = vpop.permute.xlu0 %3844
    %v3847 = vadd.f32 %v3837, %v3845
    %v3848 = vtanh.pop %v3847
    %3850 = vrot.lane.b32.xlu0 %v3848, 16
    %v3851 = vpop.permute.xlu0 %3850
    %v3853 = vmul.f32 %v3832, %v3851
    %v3854 = vmul.f32 %v3813, %v3536
    %3856 = vrot.lane.b32.xlu0 %v3854, 96
    %v3857 = vpop.permute.xlu0 %3856
    %v3859 = vsel %vm3052, %v3857, 0.0
    %3860 = vadd.xlane.f32.xlu0 %v3859
    %v3861 = vpop.xlane.xlu0 %3860
    %v3862 = vmul.f32 %v3853, %v3549
    %3864 = vrot.lane.b32.xlu0 %v3862, 96
    %v3865 = vpop.permute.xlu0 %3864
    %v3867 = vsel %vm3046, %v3865, 0.0
    %3868 = vadd.xlane.f32.xlu0 %v3867
    %v3869 = vpop.xlane.xlu0 %3868
    %v3871 = vrot.slane %v3813, 4
    %3872 = vrot.lane.b32.xlu0 %v3871, 96
    %v3873 = vpop.permute.xlu0 %3872
    %v3874 = vsel %vm785, %v3873, 0
    %3876 = vmatpush.msra.mxu0 0.0
    %3877 = vmatpush.msra.mxu0 0.0
    %3878 = vmatpush.msra.mxu0 0.0
    %3879 = vmatpush.msra.mxu0 0.0
    %3880 = vmatpush.msra.mxu0 0.0
    %3881 = vmatpush.msra.mxu0 0.0
    %3882 = vmatpush.msra.mxu0 0.0
    %3883 = vmatpush.msra.mxu0 0.0
    %3884 = vmatpush.msra.mxu0 0.0
    %3885 = vmatpush.msra.mxu0 0.0
    %3886 = vmatpush.msra.mxu0 0.0
    %3887 = vmatpush.msra.mxu0 0.0
    %3888 = vmatpush.msra.mxu0 0.0
    %3889 = vmatpush.msra.mxu0 0.0
    %3890 = vmatpush.msra.mxu0 %v3456
    %3891 = vmatpush.msra.mxu0 %v3455
    %3892 = vmatmul.f32.gmra.mxu0 %v3874
    %v3893 = vpop.f32.mrf.mxu0
    %v3894 = vadd.f32 0.0, %v3893
    %3895 = vdwg.mxu0
    %v3897 = vrot.slane %v3894, 2
    %v3899 = vadd.f32 %v3407, %v3897
    %v3901 = vrot.slane %v3853, 2
    %3902 = vrot.lane.b32.xlu0 %v3901, 96
    %v3903 = vpop.permute.xlu0 %3902
    %v3904 = vsel %vm785, %v3903, 0
    %3906 = vmatpush.msra.mxu0 0.0
    %3907 = vmatpush.msra.mxu0 0.0
    %3908 = vmatpush.msra.mxu0 0.0
    %3909 = vmatpush.msra.mxu0 0.0
    %3910 = vmatpush.msra.mxu0 0.0
    %3911 = vmatpush.msra.mxu0 0.0
    %3912 = vmatpush.msra.mxu0 0.0
    %3913 = vmatpush.msra.mxu0 0.0
    %3914 = vmatpush.msra.mxu0 0.0
    %3915 = vmatpush.msra.mxu0 0.0
    %3916 = vmatpush.msra.mxu0 0.0
    %3917 = vmatpush.msra.mxu0 0.0
    %3918 = vmatpush.msra.mxu0 0.0
    %3919 = vmatpush.msra.mxu0 0.0
    %3920 = vmatpush.msra.mxu0 %v3458
    %3921 = vmatpush.msra.mxu0 %v3457
    %3922 = vmatmul.f32.gmra.mxu0 %v3904
    %v3923 = vpop.f32.mrf.mxu0
    %v3924 = vadd.f32 0.0, %v3923
    %3925 = vdwg.mxu0
    %v3926 = vadd.f32 %v3452, %v3924
    %v3927 = vxor.u32 %v3899, 2147483648
    %v3928 = vmul.f32 %v3927, 1.442695
    %v3929 = vpow.pop %v3928
    %v3930 = vadd.f32 %v3929, 1.0
    %v3931 = vrcp.pop %v3930
    %v3932 = vmul.f32 %v3930, %v3931
    %v3933 = vsub.f32 1.0, %v3932
    %v3934 = vmul.f32 %v3931, %v3933
    %v3935 = vadd.f32 %v3931, %v3934
    %vm3936 = vweird.f32 %v3930
    %vm3937 = vweird.f32 %v3931
    %vm3938 = vmor %vm3936, %vm3937
    %v3939 = vsel %vm3938, %v3931, %v3935
    %v3940 = vand.u32 2147483647, %v3930
    %vm3941 = vcmp.eq.f32.partialorder %v3940, 8.507059e+37
    %v3942 = vand.u32 %v3930, 2147483648
    %v3943 = vor.u32 1.1754944e-38, %v3942
    %v3944 = vsel %vm3941, %v3943, %v3939
    %v3945 = vmul.f32 1.0, %v3944
    %v3946 = vtanh.pop %v3899
    %v3948 = vrot.slane %v3807, 6
    %v3950 = vmul.f32 %v3945, %v3948
    %3952 = vrot.lane.b32.xlu0 %v3946, 80
    %v3953 = vpop.permute.xlu0 %3952
    %v3955 = vmul.f32 %v3945, %v3953
    %3957 = vrot.lane.b32.xlu0 %v3955, 16
    %v3958 = vpop.permute.xlu0 %3957
    %v3960 = vadd.f32 %v3950, %v3958
    %v3961 = vtanh.pop %v3960
    %3963 = vrot.lane.b32.xlu0 %v3961, 16
    %v3964 = vpop.permute.xlu0 %3963
    %v3966 = vmul.f32 %v3945, %v3964
    %v3967 = vxor.u32 %v3926, 2147483648
    %v3968 = vmul.f32 %v3967, 1.442695
    %v3969 = vpow.pop %v3968
    %v3970 = vadd.f32 %v3969, 1.0
    %v3971 = vrcp.pop %v3970
    %v3972 = vmul.f32 %v3970, %v3971
    %v3973 = vsub.f32 1.0, %v3972
    %v3974 = vmul.f32 %v3971, %v3973
    %v3975 = vadd.f32 %v3971, %v3974
    %vm3976 = vweird.f32 %v3970
    %vm3977 = vweird.f32 %v3971
    %vm3978 = vmor %vm3976, %vm3977
    %v3979 = vsel %vm3978, %v3971, %v3975
    %v3980 = vand.u32 2147483647, %v3970
    %vm3981 = vcmp.eq.f32.partialorder %v3980, 8.507059e+37
    %v3982 = vand.u32 %v3970, 2147483648
    %v3983 = vor.u32 1.1754944e-38, %v3982
    %v3984 = vsel %vm3981, %v3983, %v3979
    %v3985 = vmul.f32 1.0, %v3984
    %v3986 = vtanh.pop %v3926
    %v3988 = vrot.slane %v3847, 2
    %v3990 = vmul.f32 %v3985, %v3988
    %3992 = vrot.lane.b32.xlu0 %v3986, 80
    %v3993 = vpop.permute.xlu0 %3992
    %v3995 = vmul.f32 %v3985, %v3993
    %3997 = vrot.lane.b32.xlu0 %v3995, 16
    %v3998 = vpop.permute.xlu0 %3997
    %v4000 = vadd.f32 %v3990, %v3998
    %v4001 = vtanh.pop %v4000
    %4003 = vrot.lane.b32.xlu0 %v4001, 16
    %v4004 = vpop.permute.xlu0 %4003
    %v4006 = vmul.f32 %v3985, %v4004
    %v4007 = vmul.f32 %v3966, %v3536
    %4009 = vrot.lane.b32.xlu0 %v4007, 96
    %v4010 = vpop.permute.xlu0 %4009
    %v4012 = vsel %vm2905, %v4010, 0.0
    %4013 = vadd.xlane.f32.xlu0 %v4012
    %v4014 = vpop.xlane.xlu0 %4013
    %v4015 = vmul.f32 %v4006, %v3549
    %4017 = vrot.lane.b32.xlu0 %v4015, 96
    %v4018 = vpop.permute.xlu0 %4017
    %v4020 = vsel %vm2899, %v4018, 0.0
    %4021 = vadd.xlane.f32.xlu0 %v4020
    %v4022 = vpop.xlane.xlu0 %4021
    %v4023 = vadd.f32 %v3545, %v4022
    %v4024 = vadd.f32 %v3705, %v3869
    %v4025 = vadd.f32 %v3861, %v3713
    %v4026 = vadd.f32 %v4014, %v3558
    %v4028 = vrot.slane %v4024, 2
    %v4031 = vrot.slane %v4025, 4
    %v4034 = vrot.slane %v4026, 6
    %vm4036 = vcmask 7168
    %v4037 = vsel %vm4036, %v4023, %v4028
    %vm4038 = vcmask 15360
    %v4039 = vsel %vm4038, %v4037, %v4031
    %vm4040 = vcmask 23552
    %v4041 = vsel %vm4040, %v4039, %v4034
    %v4042 = vld [vmem:[#allocation4] sm:$0x1]
    %s4043 = vtos %v4042
    %v4044 = vstv %s4043
    %v4045 = vadd.f32 %v4041, %v4044
    %vm4046 = vcmask 25600
    %v4047 = vsel %vm4046, %v4045, -inf
    %4048 = vmax.xlane.f32.xlu0 %v4047
    %v4049 = vpop.xlane.xlu0 %4048
    %v4050 = vsub.f32 %v4045, %v4049
    %v4051 = vmul.f32 %v4050, 1.442695
    %v4052 = vpow.pop %v4051
    %v4053 = vsel %vm4046, %v4052, 0.0
    %4054 = vadd.xlane.f32.xlu0 %v4053
    %v4055 = vpop.xlane.xlu0 %4054
    %v4056 = vlog2.pop %v4055
    %v4057 = vmul.f32 %v4056, 0.6931472
    %v4058 = vsub.f32 %v4050, %v4057
    %4059 = vst.msk [vmem:[#allocation5] sm:$0x3] %vm4046, %v4058
    // Predicated region
    $region138: #{action_pred_based_eeg_forward.1} parent=1 // pred_check
      _
    $region139: #{action_pred_based_eeg_forward.1} parent=1 // pred_check_branch
      %4061 = sbr.rel (0) target = $region141
    $region140: #{action_pred_based_eeg_forward.1} parent=1 // pred_region
      %4063 = vsyncadd [#allocation6], 0
      %s4065 = sshll.u32 [#allocation5], 4
      %s4066 = int_to_ptr.vmem [resolvable:$true] %s4065
      %s4067 = sshll.u32 %s69, 4
      %s4068 = int_to_ptr.hbm [resolvable:$true] %s4067
      %4070 = dma.vmem_to_hbm [thread:$0]  %s4066, 32, %s4068, [#allocation6]
    $region141: #{action_pred_based_eeg_forward.1} parent=1 // pred_fallthru
      _
    // Predicated region
    $region142: #{action_pred_based_eeg_forward.1} parent=1 // pred_check
      _
    $region143: #{action_pred_based_eeg_forward.1} parent=1 // pred_check_branch
      %4072 = sbr.rel (0) target = $region145
    $region144: #{action_pred_based_eeg_forward.1} parent=1 // pred_region
      %4074 = dma.done [#allocation6], 32
    $region145: #{action_pred_based_eeg_forward.1} parent=1 // pred_fallthru
      _
    %4075 = vsyncpa [#allocation6], 1

</llo_original>
